<compile_context>
chip_gen: v7x
topology: tpu7x:2x2x1
jax: 0.10.0
libtpu: 0.0.40
codegen_flags: <defaults>
</compile_context>

<pallas_src>
import functools

import jax
import jax.numpy as jnp
import numpy as np
from jax.experimental import pallas as pl
from jax.experimental.pallas import tpu as pltpu


# ---------------------------------------------------------------------------
# VMEM budget + tile selection
# ---------------------------------------------------------------------------
def _divisors(n):
    return [d for d in range(1, n + 1) if n % d == 0]


def _vmem_budget_bytes():
    """Generation-aware budget: ~3/4 of physical VMEM, capped at 100 MiB.
    v7x (64 MiB phys) -> ~48 MiB; v5e/v6e (128 MiB) -> ~96 MiB."""
    phys = 128 * 1024 * 1024
    try:
        info = pltpu.get_tpu_info()
        v = int(getattr(info, "vmem_capacity_bytes", 0))
        if v > 0:
            phys = v
    except Exception:
        pass
    return min((phys * 3) // 4, 100 * 1024 * 1024)


def _fused_block_bytes(F, TR, W2, C, Cout, s_in, s_out):
    """Per-grid-step VMEM estimate: double-buffered inputs AND outputs, col
    scratch, both f32 accumulators and an f32 matmul-result temporary."""
    TP = TR * W2
    xin = 2 * F * TP * 4 * C * s_in            # parity-plane input block (x2 dbl buf)
    halo = 2 * F * 2 * W2 * C * s_in           # 1-row halo block (x2 dbl buf)
    out = 2 * F * TP * Cout * s_out            # output block (x2 dbl buf)
    wgt = 2 * (9 * C * Cout + 3 * Cout * Cout) * s_in + 2 * 2 * Cout * 4
    col = F * TP * 3 * C * s_in                # reused K=3C im2col slab scratch
    accs = 2 * F * TP * Cout * 4               # spatial + temporal f32 accumulators
    tmp = F * TP * Cout * 4                    # f32 matmul result temporary
    return xin + halo + out + wgt + col + accs + tmp


def _choose_row_tile(B, F, H2, W2, C, Cout, s_in, s_out, budget, min_steps=4):
    """Largest H2-row tile that fits the budget and (if possible) still leaves
    >= min_steps grid steps for pipelining / megacore sharding."""
    sub = 16 if s_in == 2 else 8               # bf16 wants sublane multiples of 16
    cands = [tr for tr in _divisors(H2) if (tr * W2) % sub == 0 or tr == H2]
    fits = [tr for tr in cands
            if _fused_block_bytes(F, tr, W2, C, Cout, s_in, s_out) <= budget]
    if not fits:
        raise ValueError(
            "Downsample3D fused block exceeds the VMEM budget even at one "
            f"output row per step (F={F}, W2={W2}, C={C}, Cout={Cout}, "
            f"budget={budget} B); a frame-chunked fallback is required.")
    good = [tr for tr in fits if B * (H2 // tr) >= min_steps]
    return max(good) if good else max(fits)


# ---------------------------------------------------------------------------
# Fused kernel
# ---------------------------------------------------------------------------
# Parity planes (space-to-depth of the un-padded frame), plane index = hp*2+wp:
#   s00 = x[2i,   2j]   s01 = x[2i,   2j+1]
#   s10 = x[2i+1, 2j]   s11 = x[2i+1, 2j+1]
# 3x3 / stride-2 / pad-1 taps for output (i, j):
#   kh=0 row: planes s11@j-1, s10@j, s11@j   at H2-row i-1  (halo above)
#   kh=1 row: planes s01@j-1, s00@j, s01@j   at H2-row i
#   kh=2 row: planes s11@j-1, s10@j, s11@j   at H2-row i
def _downsample3d_kernel(x_ref, h_ref, wsp_ref, bsp_ref, wt_ref, bt_ref,
                         o_ref, col_ref, acc_ref, tacc_ref,
                         *, F, TR, W2, C, Cout):
    rt = pl.program_id(1)
    TP = TR * W2
    f32 = jnp.float32

    s00 = x_ref[0, :, 0]          # (F, TR, W2, C)
    s01 = x_ref[0, :, 1]
    s10 = x_ref[0, :, 2]
    s11 = x_ref[0, :, 3]
    h10 = h_ref[0, :, 0]          # (F, 1, W2, C)  s10 at H2-row (r0 - 1)
    h11 = h_ref[0, :, 1]          # (F, 1, W2, C)  s11 at H2-row (r0 - 1)

    zc = jnp.zeros((F, TR, 1, C), col_ref.dtype)     # hoisted column-pad zeros

    def slab_dot(kh):
        a = col_ref[...].reshape(F * TP, 3 * C)
        return jnp.dot(a, wsp_ref[kh],
                       preferred_element_type=f32).reshape(F, TP, Cout)

    # ---- kh = 0 slab: rows shifted up by one (halo row for local row 0) ----
    col_ref[:, :, 0:1, 0:C] = zc
    if W2 > 1:
        col_ref[:, 0:1, 1:, 0:C] = h11[:, :, :W2 - 1, :]
        if TR > 1:
            col_ref[:, 1:, 1:, 0:C] = s11[:, :TR - 1, :W2 - 1, :]
    col_ref[:, 0:1, :, C:2 * C] = h10
    col_ref[:, 0:1, :, 2 * C:3 * C] = h11
    if TR > 1:
        col_ref[:, 1:, :, C:2 * C] = s10[:, :TR - 1]
        col_ref[:, 1:, :, 2 * C:3 * C] = s11[:, :TR - 1]

    @pl.when(rt == 0)             # topmost tile: the "row above" is the zero pad
    def _():
        col_ref[:, 0:1, :, :] = jnp.zeros((F, 1, W2, 3 * C), col_ref.dtype)

    acc_ref[...] = slab_dot(0) + bsp_ref[...]

    # ---- kh = 1 slab: aligned rows, even-row parity planes ------------------
    col_ref[:, :, 0:1, 0:C] = zc
    if W2 > 1:
        col_ref[:, :, 1:, 0:C] = s01[:, :, :W2 - 1, :]
    col_ref[:, :, :, C:2 * C] = s00
    col_ref[:, :, :, 2 * C:3 * C] = s01
    acc_ref[...] += slab_dot(1)

    # ---- kh = 2 slab: aligned rows, odd-row parity planes -------------------
    col_ref[:, :, 0:1, 0:C] = zc
    if W2 > 1:
        col_ref[:, :, 1:, 0:C] = s11[:, :, :W2 - 1, :]
    col_ref[:, :, :, C:2 * C] = s10
    col_ref[:, :, :, 2 * C:3 * C] = s11
    acc_ref[...] += slab_dot(2)

    # ---- temporal k=3 pad=1 conv, fused on the VMEM-resident spatial result -
    spat = acc_ref[...].astype(wt_ref.dtype)          # (F, TP, Cout)
    tacc_ref[...] = jnp.dot(spat.reshape(F * TP, Cout), wt_ref[1],
                            preferred_element_type=f32).reshape(F, TP, Cout)
    if F > 1:
        prev = jnp.dot(spat[:F - 1].reshape((F - 1) * TP, Cout), wt_ref[0],
                       preferred_element_type=f32).reshape(F - 1, TP, Cout)
        nxt = jnp.dot(spat[1:].reshape((F - 1) * TP, Cout), wt_ref[2],
                      preferred_element_type=f32).reshape(F - 1, TP, Cout)
        tacc_ref[1:] = tacc_ref[1:] + prev
        tacc_ref[:F - 1] = tacc_ref[:F - 1] + nxt

    o_ref[0] = (tacc_ref[...] + bt_ref[...]).astype(o_ref.dtype)


# ---------------------------------------------------------------------------
# Wrapper: Downsample3D.forward  (x: (B, C, F, H, W) -> (B, Cout, F, H2, W2))
# ---------------------------------------------------------------------------
def downsample3d(x, w_sp, b_sp, w_t, b_t, *, compute_dtype=None):
    B, C, F, H, W = x.shape
    Cout = w_sp.shape[0]
    assert w_sp.shape[1] == C
    assert H % 2 == 0 and W % 2 == 0, "even H/W assumed (parity split)"
    H2, W2 = H // 2, W // 2
    HW = H2 * W2

    out_dt = x.dtype
    cdt = jnp.dtype(out_dt) if compute_dtype is None else jnp.dtype(compute_dtype)
    s_in = cdt.itemsize
    s_out = jnp.dtype(out_dt).itemsize

    # one host-side space-to-depth pass: (B, F, 4 parity planes, H2, W2, C)
    sd = jnp.transpose(
        x.reshape(B, C, F, H2, 2, W2, 2), (0, 2, 4, 6, 3, 5, 1)
    ).reshape(B, F, 4, H2, W2, C).astype(cdt)

    # packed weights / biases (host, once, tiny)
    wsp_k = jnp.transpose(w_sp, (2, 3, 1, 0)).reshape(3, 3 * C, Cout).astype(cdt)
    bsp_k = b_sp.reshape(1, Cout).astype(jnp.float32)
    wt_k = jnp.transpose(w_t, (2, 1, 0)).astype(cdt)          # (3, Cin=Cout, Cout)
    bt_k = b_t.reshape(1, Cout).astype(jnp.float32)

    budget = _vmem_budget_bytes()
    TR = _choose_row_tile(B, F, H2, W2, C, Cout, s_in, s_out, budget)
    TP = TR * W2

    kernel = functools.partial(_downsample3d_kernel,
                               F=F, TR=TR, W2=W2, C=C, Cout=Cout)

    out = pl.pallas_call(
        kernel,
        out_shape=jax.ShapeDtypeStruct((B, F, HW, Cout), out_dt),
        grid=(B, H2 // TR),
        in_specs=[
            # main parity-plane block: TR output rows, all F frames
            pl.BlockSpec((1, F, 4, TR, W2, C),
                         lambda b, r: (b, 0, 0, r, 0, 0)),
            # 1-row halo: odd-row parity planes (s10, s11) at H2-row r0-1
            # (clamped at the top edge; zero-filled in-kernel when r == 0)
            pl.BlockSpec((1, F, 2, 1, W2, C),
                         lambda b, r: (b, 0, 1, jnp.maximum(r * TR - 1, 0), 0, 0)),
            pl.BlockSpec((3, 3 * C, Cout), lambda b, r: (0, 0, 0)),
            pl.BlockSpec((1, Cout), lambda b, r: (0, 0)),
            pl.BlockSpec((3, Cout, Cout), lambda b, r: (0, 0, 0)),
            pl.BlockSpec((1, Cout), lambda b, r: (0, 0)),
        ],
        out_specs=pl.BlockSpec((1, F, TP, Cout), lambda b, r: (b, 0, r, 0)),
        scratch_shapes=[
            pltpu.VMEM((F, TR, W2, 3 * C), cdt),     # reused K=3C im2col slab
            pltpu.VMEM((F, TP, Cout), jnp.float32),  # spatial f32 accumulator
            pltpu.VMEM((F, TP, Cout), jnp.float32),  # temporal f32 accumulator
        ],
        compiler_params=pltpu.CompilerParams(
            dimension_semantics=("parallel", "parallel"),
            vmem_limit_bytes=budget),
    )(sd, sd, wsp_k, bsp_k, wt_k, bt_k)

    # back to the PyTorch NCFHW layout
    return jnp.transpose(out.reshape(B, F, H2, W2, Cout), (0, 4, 1, 2, 3))


# ---------------------------------------------------------------------------
# Pure-JAX reference (for verification)
# ---------------------------------------------------------------------------
def reference(x, w_sp, b_sp, w_t, b_t):
    B, C, F, H, W = x.shape
    Cout = w_sp.shape[0]
    hp = jax.lax.Precision.HIGHEST
    xf = jnp.transpose(x, (0, 2, 1, 3, 4)).reshape(B * F, C, H, W)
    ys = jax.lax.conv_general_dilated(
        xf, w_sp, window_strides=(2, 2), padding=((1, 1), (1, 1)),
        dimension_numbers=("NCHW", "OIHW", "NCHW"), precision=hp)
    ys = ys + b_sp[None, :, None, None]
    H2, W2 = ys.shape[2], ys.shape[3]
    ysb = ys.reshape(B, F, Cout, H2, W2)
    ysp = jnp.pad(ysb, ((0, 0), (1, 1), (0, 0), (0, 0), (0, 0)))
    out = sum(jnp.einsum("bfchw,oc->bfohw", ysp[:, k:k + F], w_t[:, :, k],
                         precision=hp)
              for k in range(3))
    out = out + b_t[None, None, :, None, None]
    return jnp.transpose(out, (0, 2, 1, 3, 4))        # (B, Cout, F, H2, W2)


# ---------------------------------------------------------------------------
if __name__ == "__main__":
    B, C, F, H, W = 2, 4, 8, 16, 16
    Cout = C  # Downsample3D(channels=C) -> out_channels = channels

    key = jax.random.PRNGKey(0)
    kx, kw, kb, kwt, kbt = jax.random.split(key, 5)

    x = jax.random.normal(kx, (B, C, F, H, W), dtype=jnp.float32)

    # spatial_conv: Conv2d(C, Cout, 3, stride=2, padding=1)
    w_sp = 0.1 * jax.random.normal(kw, (Cout, C, 3, 3), dtype=jnp.float32)
    b_sp = 0.1 * jax.random.normal(kb, (Cout,), dtype=jnp.float32)

    # temporal_conv at module init: dirac weight, zero bias ...
    w_t_dirac = jnp.zeros((Cout, Cout, 3), jnp.float32).at[:, :, 1].set(jnp.eye(Cout))
    b_t_zero = jnp.zeros((Cout,), jnp.float32)
    # ... and arbitrary (trained) temporal weights to fully exercise that path.
    w_t_rand = 0.1 * jax.random.normal(kwt, (Cout, Cout, 3), dtype=jnp.float32)
    b_t_rand = 0.1 * jax.random.normal(kbt, (Cout,), dtype=jnp.float32)

    fn = jax.jit(downsample3d)
    for w_t, b_t in ((w_t_dirac, b_t_zero), (w_t_rand, b_t_rand)):
        out = jax.block_until_ready(fn(x, w_sp, b_sp, w_t, b_t))
        ref = jax.block_until_ready(reference(x, w_sp, b_sp, w_t, b_t))
        np.testing.assert_allclose(np.asarray(out), np.asarray(ref),
                                   rtol=1e-4, atol=1e-4)

    # bf16 compute path (f32 accumulation): looser tolerance
    fn_bf16 = jax.jit(functools.partial(downsample3d, compute_dtype=jnp.bfloat16))
    out_bf = jax.block_until_ready(fn_bf16(x, w_sp, b_sp, w_t_rand, b_t_rand))
    ref_bf = reference(x, w_sp, b_sp, w_t_rand, b_t_rand)
    np.testing.assert_allclose(np.asarray(out_bf), np.asarray(ref_bf),
                               rtol=5e-2, atol=5e-2)

    print("KERNEL_OK")
</pallas_src>

<mosaic_0001>
module attributes {stable_mosaic.version = 11 : i64} {
  func.func @_downsample3d_kernel(%arg0: i32, %arg1: i32, %arg2: memref<1x8x4x4x8x4xf32, #tpu.memory_space<vmem>>, %arg3: memref<1x8x2x1x8x4xf32, #tpu.memory_space<vmem>>, %arg4: memref<3x12x4xf32, #tpu.memory_space<vmem>>, %arg5: memref<1x4xf32, #tpu.memory_space<vmem>>, %arg6: memref<3x4x4xf32, #tpu.memory_space<vmem>>, %arg7: memref<1x4xf32, #tpu.memory_space<vmem>>, %arg8: memref<1x8x32x4xf32, #tpu.memory_space<vmem>>, %arg9: memref<8x4x8x12xf32, #tpu.memory_space<vmem>>, %arg10: memref<8x32x4xf32, #tpu.memory_space<vmem>>, %arg11: memref<8x32x4xf32, #tpu.memory_space<vmem>>) attributes {dimension_semantics = [#tpu.dimension_semantics<parallel>, #tpu.dimension_semantics<parallel>], iteration_bounds = array<i64: 2, 2>, scalar_prefetch = 0 : i64, scratch_operands = 3 : i64, tpu.core_type = #tpu.core_type<tc>, window_params = [{transform_indices = @transform_0, window_bounds = array<i64: 1, 8, 4, 4, 8, 4>}, {transform_indices = @transform_1, window_bounds = array<i64: 1, 8, 2, 1, 8, 4>}, {pipeline_mode = #tpu.pipeline_mode<synchronous>, transform_indices = @transform_2, window_bounds = array<i64: 3, 12, 4>}, {pipeline_mode = #tpu.pipeline_mode<synchronous>, transform_indices = @transform_3, window_bounds = array<i64: 1, 4>}, {pipeline_mode = #tpu.pipeline_mode<synchronous>, transform_indices = @transform_4, window_bounds = array<i64: 3, 4, 4>}, {pipeline_mode = #tpu.pipeline_mode<synchronous>, transform_indices = @transform_5, window_bounds = array<i64: 1, 4>}, {transform_indices = @transform_6, window_bounds = array<i64: 1, 8, 32, 4>}]} {
    %c0 = arith.constant 0 : index
    %c0_0 = arith.constant 0 : index
    %c0_1 = arith.constant 0 : index
    %c0_2 = arith.constant 0 : index
    %c0_3 = arith.constant 0 : index
    %c0_4 = arith.constant 0 : index
    %0 = vector.load %arg2[%c0, %c0_0, %c0_1, %c0_2, %c0_3, %c0_4] : memref<1x8x4x4x8x4xf32, #tpu.memory_space<vmem>>, vector<1x8x1x4x8x4xf32>
    %1 = vector.shape_cast %0 : vector<1x8x1x4x8x4xf32> to vector<8x4x8x4xf32>
    %c0_5 = arith.constant 0 : index
    %c0_6 = arith.constant 0 : index
    %c1 = arith.constant 1 : index
    %c0_7 = arith.constant 0 : index
    %c0_8 = arith.constant 0 : index
    %c0_9 = arith.constant 0 : index
    %2 = vector.load %arg2[%c0_5, %c0_6, %c1, %c0_7, %c0_8, %c0_9] : memref<1x8x4x4x8x4xf32, #tpu.memory_space<vmem>>, vector<1x8x1x4x8x4xf32>
    %3 = vector.shape_cast %2 : vector<1x8x1x4x8x4xf32> to vector<8x4x8x4xf32>
    %c0_10 = arith.constant 0 : index
    %c0_11 = arith.constant 0 : index
    %c2 = arith.constant 2 : index
    %c0_12 = arith.constant 0 : index
    %c0_13 = arith.constant 0 : index
    %c0_14 = arith.constant 0 : index
    %4 = vector.load %arg2[%c0_10, %c0_11, %c2, %c0_12, %c0_13, %c0_14] : memref<1x8x4x4x8x4xf32, #tpu.memory_space<vmem>>, vector<1x8x1x4x8x4xf32>
    %5 = vector.shape_cast %4 : vector<1x8x1x4x8x4xf32> to vector<8x4x8x4xf32>
    %c0_15 = arith.constant 0 : index
    %c0_16 = arith.constant 0 : index
    %c3 = arith.constant 3 : index
    %c0_17 = arith.constant 0 : index
    %c0_18 = arith.constant 0 : index
    %c0_19 = arith.constant 0 : index
    %6 = vector.load %arg2[%c0_15, %c0_16, %c3, %c0_17, %c0_18, %c0_19] : memref<1x8x4x4x8x4xf32, #tpu.memory_space<vmem>>, vector<1x8x1x4x8x4xf32>
    %7 = vector.shape_cast %6 : vector<1x8x1x4x8x4xf32> to vector<8x4x8x4xf32>
    %c0_20 = arith.constant 0 : index
    %c0_21 = arith.constant 0 : index
    %c0_22 = arith.constant 0 : index
    %c0_23 = arith.constant 0 : index
    %c0_24 = arith.constant 0 : index
    %c0_25 = arith.constant 0 : index
    %8 = vector.load %arg3[%c0_20, %c0_21, %c0_22, %c0_23, %c0_24, %c0_25] : memref<1x8x2x1x8x4xf32, #tpu.memory_space<vmem>>, vector<1x8x1x1x8x4xf32>
    %9 = vector.shape_cast %8 : vector<1x8x1x1x8x4xf32> to vector<8x1x8x4xf32>
    %c0_26 = arith.constant 0 : index
    %c0_27 = arith.constant 0 : index
    %c1_28 = arith.constant 1 : index
    %c0_29 = arith.constant 0 : index
    %c0_30 = arith.constant 0 : index
    %c0_31 = arith.constant 0 : index
    %10 = vector.load %arg3[%c0_26, %c0_27, %c1_28, %c0_29, %c0_30, %c0_31] : memref<1x8x2x1x8x4xf32, #tpu.memory_space<vmem>>, vector<1x8x1x1x8x4xf32>
    %11 = vector.shape_cast %10 : vector<1x8x1x1x8x4xf32> to vector<8x1x8x4xf32>
    %cst = arith.constant 0.000000e+00 : f32
    %12 = vector.broadcast %cst : f32 to vector<8x4x1x4xf32>
    %c0_32 = arith.constant 0 : index
    %c0_33 = arith.constant 0 : index
    %c0_34 = arith.constant 0 : index
    %c0_35 = arith.constant 0 : index
    %13 = vector.load %arg9[%c0_32, %c0_33, %c0_34, %c0_35] : memref<8x4x8x12xf32, #tpu.memory_space<vmem>>, vector<8x4x1x4xf32>
    tpu.vector_store %arg9[%c0_32, %c0_33, %c0_34, %c0_35], %12 {strides = array<i32>} : memref<8x4x8x12xf32, #tpu.memory_space<vmem>>, vector<8x4x1x4xf32>,
    %14 = vector.extract_strided_slice %11 {offsets = [0, 0, 0, 0], sizes = [8, 1, 7, 4], strides = [1, 1, 1, 1]} : vector<8x1x8x4xf32> to vector<8x1x7x4xf32>
    %c0_36 = arith.constant 0 : index
    %c0_37 = arith.constant 0 : index
    %c1_38 = arith.constant 1 : index
    %c0_39 = arith.constant 0 : index
    %15 = vector.load %arg9[%c0_36, %c0_37, %c1_38, %c0_39] : memref<8x4x8x12xf32, #tpu.memory_space<vmem>>, vector<8x1x7x4xf32>
    tpu.vector_store %arg9[%c0_36, %c0_37, %c1_38, %c0_39], %14 {strides = array<i32>} : memref<8x4x8x12xf32, #tpu.memory_space<vmem>>, vector<8x1x7x4xf32>,
    %16 = vector.extract_strided_slice %7 {offsets = [0, 0, 0, 0], sizes = [8, 3, 7, 4], strides = [1, 1, 1, 1]} : vector<8x4x8x4xf32> to vector<8x3x7x4xf32>
    %c0_40 = arith.constant 0 : index
    %c1_41 = arith.constant 1 : index
    %c1_42 = arith.constant 1 : index
    %c0_43 = arith.constant 0 : index
    %17 = vector.load %arg9[%c0_40, %c1_41, %c1_42, %c0_43] : memref<8x4x8x12xf32, #tpu.memory_space<vmem>>, vector<8x3x7x4xf32>
    tpu.vector_store %arg9[%c0_40, %c1_41, %c1_42, %c0_43], %16 {strides = array<i32>} : memref<8x4x8x12xf32, #tpu.memory_space<vmem>>, vector<8x3x7x4xf32>,
    %c0_44 = arith.constant 0 : index
    %c0_45 = arith.constant 0 : index
    %c0_46 = arith.constant 0 : index
    %c4 = arith.constant 4 : index
    %18 = vector.load %arg9[%c0_44, %c0_45, %c0_46, %c4] : memref<8x4x8x12xf32, #tpu.memory_space<vmem>>, vector<8x1x8x4xf32>
    tpu.vector_store %arg9[%c0_44, %c0_45, %c0_46, %c4], %9 {strides = array<i32>} : memref<8x4x8x12xf32, #tpu.memory_space<vmem>>, vector<8x1x8x4xf32>,
    %c0_47 = arith.constant 0 : index
    %c0_48 = arith.constant 0 : index
    %c0_49 = arith.constant 0 : index
    %c8 = arith.constant 8 : index
    %19 = vector.load %arg9[%c0_47, %c0_48, %c0_49, %c8] : memref<8x4x8x12xf32, #tpu.memory_space<vmem>>, vector<8x1x8x4xf32>
    tpu.vector_store %arg9[%c0_47, %c0_48, %c0_49, %c8], %11 {strides = array<i32>} : memref<8x4x8x12xf32, #tpu.memory_space<vmem>>, vector<8x1x8x4xf32>,
    %20 = vector.extract_strided_slice %5 {offsets = [0, 0, 0, 0], sizes = [8, 3, 8, 4], strides = [1, 1, 1, 1]} : vector<8x4x8x4xf32> to vector<8x3x8x4xf32>
    %c0_50 = arith.constant 0 : index
    %c1_51 = arith.constant 1 : index
    %c0_52 = arith.constant 0 : index
    %c4_53 = arith.constant 4 : index
    %21 = vector.load %arg9[%c0_50, %c1_51, %c0_52, %c4_53] : memref<8x4x8x12xf32, #tpu.memory_space<vmem>>, vector<8x3x8x4xf32>
    tpu.vector_store %arg9[%c0_50, %c1_51, %c0_52, %c4_53], %20 {strides = array<i32>} : memref<8x4x8x12xf32, #tpu.memory_space<vmem>>, vector<8x3x8x4xf32>,
    %22 = vector.extract_strided_slice %7 {offsets = [0, 0, 0, 0], sizes = [8, 3, 8, 4], strides = [1, 1, 1, 1]} : vector<8x4x8x4xf32> to vector<8x3x8x4xf32>
    %c0_54 = arith.constant 0 : index
    %c1_55 = arith.constant 1 : index
    %c0_56 = arith.constant 0 : index
    %c8_57 = arith.constant 8 : index
    %23 = vector.load %arg9[%c0_54, %c1_55, %c0_56, %c8_57] : memref<8x4x8x12xf32, #tpu.memory_space<vmem>>, vector<8x3x8x4xf32>
    tpu.vector_store %arg9[%c0_54, %c1_55, %c0_56, %c8_57], %22 {strides = array<i32>} : memref<8x4x8x12xf32, #tpu.memory_space<vmem>>, vector<8x3x8x4xf32>,
    %c0_i32 = arith.constant 0 : i32
    %24 = arith.cmpi eq, %arg1, %c0_i32 : i32
    %25 = arith.extui %24 : i1 to i32
    %c0_i32_58 = arith.constant 0 : i32
    %26 = arith.cmpi ne, %25, %c0_i32_58 : i32
    scf.if %26 {
      %cst_171 = arith.constant 0.000000e+00 : f32
      %99 = vector.broadcast %cst_171 : f32 to vector<8x1x8x12xf32>
      %c0_172 = arith.constant 0 : index
      %c0_173 = arith.constant 0 : index
      %c0_174 = arith.constant 0 : index
      %c0_175 = arith.constant 0 : index
      %100 = vector.load %arg9[%c0_172, %c0_173, %c0_174, %c0_175] : memref<8x4x8x12xf32, #tpu.memory_space<vmem>>, vector<8x1x8x12xf32>
      tpu.vector_store %arg9[%c0_172, %c0_173, %c0_174, %c0_175], %99 {strides = array<i32>} : memref<8x4x8x12xf32, #tpu.memory_space<vmem>>, vector<8x1x8x12xf32>,
    } else {
    }
    %c0_59 = arith.constant 0 : index
    %c0_60 = arith.constant 0 : index
    %c0_61 = arith.constant 0 : index
    %c0_62 = arith.constant 0 : index
    %27 = vector.load %arg9[%c0_59, %c0_60, %c0_61, %c0_62] : memref<8x4x8x12xf32, #tpu.memory_space<vmem>>, vector<8x4x8x12xf32>
    %28 = vector.shape_cast %27 : vector<8x4x8x12xf32> to vector<256x12xf32>
    %c0_63 = arith.constant 0 : index
    %c0_64 = arith.constant 0 : index
    %c0_65 = arith.constant 0 : index
    %29 = vector.load %arg4[%c0_63, %c0_64, %c0_65] : memref<3x12x4xf32, #tpu.memory_space<vmem>>, vector<1x12x4xf32>
    %30 = vector.shape_cast %29 : vector<1x12x4xf32> to vector<12x4xf32>
    %cst_66 = arith.constant dense<0.000000e+00> : vector<256x4xf32>
    %31 = tpu.matmul %28, %30, %cst_66 {dimension_numbers = #tpu.dot_dimension_numbers<[1], [0], [0], [1], [0, 0, 1, 1], [], []>} : vector<256x12xf32>, vector<12x4xf32>, vector<256x4xf32> -> vector<256x4xf32>
    %32 = vector.shape_cast %31 : vector<256x4xf32> to vector<8x32x4xf32>
    %c0_67 = arith.constant 0 : index
    %c0_68 = arith.constant 0 : index
    %33 = vector.load %arg5[%c0_67, %c0_68] : memref<1x4xf32, #tpu.memory_space<vmem>>, vector<1x4xf32>
    %34 = vector.shape_cast %33 : vector<1x4xf32> to vector<1x1x4xf32>
    %35 = vector.broadcast %34 : vector<1x1x4xf32> to vector<8x32x4xf32>
    %36 = arith.addf %32, %35 : vector<8x32x4xf32>
    %c0_69 = arith.constant 0 : index
    %c0_70 = arith.constant 0 : index
    %c0_71 = arith.constant 0 : index
    %37 = vector.load %arg10[%c0_69, %c0_70, %c0_71] : memref<8x32x4xf32, #tpu.memory_space<vmem>>, vector<8x32x4xf32>
    tpu.vector_store %arg10[%c0_69, %c0_70, %c0_71], %36 {strides = array<i32>} : memref<8x32x4xf32, #tpu.memory_space<vmem>>, vector<8x32x4xf32>,
    %c0_72 = arith.constant 0 : index
    %c0_73 = arith.constant 0 : index
    %c0_74 = arith.constant 0 : index
    %c0_75 = arith.constant 0 : index
    %38 = vector.load %arg9[%c0_72, %c0_73, %c0_74, %c0_75] : memref<8x4x8x12xf32, #tpu.memory_space<vmem>>, vector<8x4x1x4xf32>
    tpu.vector_store %arg9[%c0_72, %c0_73, %c0_74, %c0_75], %12 {strides = array<i32>} : memref<8x4x8x12xf32, #tpu.memory_space<vmem>>, vector<8x4x1x4xf32>,
    %39 = vector.extract_strided_slice %3 {offsets = [0, 0, 0, 0], sizes = [8, 4, 7, 4], strides = [1, 1, 1, 1]} : vector<8x4x8x4xf32> to vector<8x4x7x4xf32>
    %c0_76 = arith.constant 0 : index
    %c0_77 = arith.constant 0 : index
    %c1_78 = arith.constant 1 : index
    %c0_79 = arith.constant 0 : index
    %40 = vector.load %arg9[%c0_76, %c0_77, %c1_78, %c0_79] : memref<8x4x8x12xf32, #tpu.memory_space<vmem>>, vector<8x4x7x4xf32>
    tpu.vector_store %arg9[%c0_76, %c0_77, %c1_78, %c0_79], %39 {strides = array<i32>} : memref<8x4x8x12xf32, #tpu.memory_space<vmem>>, vector<8x4x7x4xf32>,
    %c0_80 = arith.constant 0 : index
    %c0_81 = arith.constant 0 : index
    %c0_82 = arith.constant 0 : index
    %c4_83 = arith.constant 4 : index
    %41 = vector.load %arg9[%c0_80, %c0_81, %c0_82, %c4_83] : memref<8x4x8x12xf32, #tpu.memory_space<vmem>>, vector<8x4x8x4xf32>
    tpu.vector_store %arg9[%c0_80, %c0_81, %c0_82, %c4_83], %1 {strides = array<i32>} : memref<8x4x8x12xf32, #tpu.memory_space<vmem>>, vector<8x4x8x4xf32>,
    %c0_84 = arith.constant 0 : index
    %c0_85 = arith.constant 0 : index
    %c0_86 = arith.constant 0 : index
    %c8_87 = arith.constant 8 : index
    %42 = vector.load %arg9[%c0_84, %c0_85, %c0_86, %c8_87] : memref<8x4x8x12xf32, #tpu.memory_space<vmem>>, vector<8x4x8x4xf32>
    tpu.vector_store %arg9[%c0_84, %c0_85, %c0_86, %c8_87], %3 {strides = array<i32>} : memref<8x4x8x12xf32, #tpu.memory_space<vmem>>, vector<8x4x8x4xf32>,
    %c0_88 = arith.constant 0 : index
    %c0_89 = arith.constant 0 : index
    %c0_90 = arith.constant 0 : index
    %43 = vector.load %arg10[%c0_88, %c0_89, %c0_90] : memref<8x32x4xf32, #tpu.memory_space<vmem>>, vector<8x32x4xf32>
    %c0_91 = arith.constant 0 : index
    %c0_92 = arith.constant 0 : index
    %c0_93 = arith.constant 0 : index
    %c0_94 = arith.constant 0 : index
    %44 = vector.load %arg9[%c0_91, %c0_92, %c0_93, %c0_94] : memref<8x4x8x12xf32, #tpu.memory_space<vmem>>, vector<8x4x8x12xf32>
    %45 = vector.shape_cast %44 : vector<8x4x8x12xf32> to vector<256x12xf32>
    %c1_95 = arith.constant 1 : index
    %c0_96 = arith.constant 0 : index
    %c0_97 = arith.constant 0 : index
    %46 = vector.load %arg4[%c1_95, %c0_96, %c0_97] : memref<3x12x4xf32, #tpu.memory_space<vmem>>, vector<1x12x4xf32>
    %47 = vector.shape_cast %46 : vector<1x12x4xf32> to vector<12x4xf32>
    %cst_98 = arith.constant dense<0.000000e+00> : vector<256x4xf32>
    %48 = tpu.matmul %45, %47, %cst_98 {dimension_numbers = #tpu.dot_dimension_numbers<[1], [0], [0], [1], [0, 0, 1, 1], [], []>} : vector<256x12xf32>, vector<12x4xf32>, vector<256x4xf32> -> vector<256x4xf32>
    %49 = vector.shape_cast %48 : vector<256x4xf32> to vector<8x32x4xf32>
    %50 = arith.addf %43, %49 : vector<8x32x4xf32>
    %c0_99 = arith.constant 0 : index
    %c0_100 = arith.constant 0 : index
    %c0_101 = arith.constant 0 : index
    %51 = vector.load %arg10[%c0_99, %c0_100, %c0_101] : memref<8x32x4xf32, #tpu.memory_space<vmem>>, vector<8x32x4xf32>
    tpu.vector_store %arg10[%c0_99, %c0_100, %c0_101], %50 {strides = array<i32>} : memref<8x32x4xf32, #tpu.memory_space<vmem>>, vector<8x32x4xf32>,
    %c0_102 = arith.constant 0 : index
    %c0_103 = arith.constant 0 : index
    %c0_104 = arith.constant 0 : index
    %c0_105 = arith.constant 0 : index
    %52 = vector.load %arg9[%c0_102, %c0_103, %c0_104, %c0_105] : memref<8x4x8x12xf32, #tpu.memory_space<vmem>>, vector<8x4x1x4xf32>
    tpu.vector_store %arg9[%c0_102, %c0_103, %c0_104, %c0_105], %12 {strides = array<i32>} : memref<8x4x8x12xf32, #tpu.memory_space<vmem>>, vector<8x4x1x4xf32>,
    %53 = vector.extract_strided_slice %7 {offsets = [0, 0, 0, 0], sizes = [8, 4, 7, 4], strides = [1, 1, 1, 1]} : vector<8x4x8x4xf32> to vector<8x4x7x4xf32>
    %c0_106 = arith.constant 0 : index
    %c0_107 = arith.constant 0 : index
    %c1_108 = arith.constant 1 : index
    %c0_109 = arith.constant 0 : index
    %54 = vector.load %arg9[%c0_106, %c0_107, %c1_108, %c0_109] : memref<8x4x8x12xf32, #tpu.memory_space<vmem>>, vector<8x4x7x4xf32>
    tpu.vector_store %arg9[%c0_106, %c0_107, %c1_108, %c0_109], %53 {strides = array<i32>} : memref<8x4x8x12xf32, #tpu.memory_space<vmem>>, vector<8x4x7x4xf32>,
    %c0_110 = arith.constant 0 : index
    %c0_111 = arith.constant 0 : index
    %c0_112 = arith.constant 0 : index
    %c4_113 = arith.constant 4 : index
    %55 = vector.load %arg9[%c0_110, %c0_111, %c0_112, %c4_113] : memref<8x4x8x12xf32, #tpu.memory_space<vmem>>, vector<8x4x8x4xf32>
    tpu.vector_store %arg9[%c0_110, %c0_111, %c0_112, %c4_113], %5 {strides = array<i32>} : memref<8x4x8x12xf32, #tpu.memory_space<vmem>>, vector<8x4x8x4xf32>,
    %c0_114 = arith.constant 0 : index
    %c0_115 = arith.constant 0 : index
    %c0_116 = arith.constant 0 : index
    %c8_117 = arith.constant 8 : index
    %56 = vector.load %arg9[%c0_114, %c0_115, %c0_116, %c8_117] : memref<8x4x8x12xf32, #tpu.memory_space<vmem>>, vector<8x4x8x4xf32>
    tpu.vector_store %arg9[%c0_114, %c0_115, %c0_116, %c8_117], %7 {strides = array<i32>} : memref<8x4x8x12xf32, #tpu.memory_space<vmem>>, vector<8x4x8x4xf32>,
    %c0_118 = arith.constant 0 : index
    %c0_119 = arith.constant 0 : index
    %c0_120 = arith.constant 0 : index
    %57 = vector.load %arg10[%c0_118, %c0_119, %c0_120] : memref<8x32x4xf32, #tpu.memory_space<vmem>>, vector<8x32x4xf32>
    %c0_121 = arith.constant 0 : index
    %c0_122 = arith.constant 0 : index
    %c0_123 = arith.constant 0 : index
    %c0_124 = arith.constant 0 : index
    %58 = vector.load %arg9[%c0_121, %c0_122, %c0_123, %c0_124] : memref<8x4x8x12xf32, #tpu.memory_space<vmem>>, vector<8x4x8x12xf32>
    %59 = vector.shape_cast %58 : vector<8x4x8x12xf32> to vector<256x12xf32>
    %c2_125 = arith.constant 2 : index
    %c0_126 = arith.constant 0 : index
    %c0_127 = arith.constant 0 : index
    %60 = vector.load %arg4[%c2_125, %c0_126, %c0_127] : memref<3x12x4xf32, #tpu.memory_space<vmem>>, vector<1x12x4xf32>
    %61 = vector.shape_cast %60 : vector<1x12x4xf32> to vector<12x4xf32>
    %cst_128 = arith.constant dense<0.000000e+00> : vector<256x4xf32>
    %62 = tpu.matmul %59, %61, %cst_128 {dimension_numbers = #tpu.dot_dimension_numbers<[1], [0], [0], [1], [0, 0, 1, 1], [], []>} : vector<256x12xf32>, vector<12x4xf32>, vector<256x4xf32> -> vector<256x4xf32>
    %63 = vector.shape_cast %62 : vector<256x4xf32> to vector<8x32x4xf32>
    %64 = arith.addf %57, %63 : vector<8x32x4xf32>
    %c0_129 = arith.constant 0 : index
    %c0_130 = arith.constant 0 : index
    %c0_131 = arith.constant 0 : index
    %65 = vector.load %arg10[%c0_129, %c0_130, %c0_131] : memref<8x32x4xf32, #tpu.memory_space<vmem>>, vector<8x32x4xf32>
    tpu.vector_store %arg10[%c0_129, %c0_130, %c0_131], %64 {strides = array<i32>} : memref<8x32x4xf32, #tpu.memory_space<vmem>>, vector<8x32x4xf32>,
    %c0_132 = arith.constant 0 : index
    %c0_133 = arith.constant 0 : index
    %c0_134 = arith.constant 0 : index
    %66 = vector.load %arg10[%c0_132, %c0_133, %c0_134] : memref<8x32x4xf32, #tpu.memory_space<vmem>>, vector<8x32x4xf32>
    %67 = vector.shape_cast %66 : vector<8x32x4xf32> to vector<256x4xf32>
    %c1_135 = arith.constant 1 : index
    %c0_136 = arith.constant 0 : index
    %c0_137 = arith.constant 0 : index
    %68 = vector.load %arg6[%c1_135, %c0_136, %c0_137] : memref<3x4x4xf32, #tpu.memory_space<vmem>>, vector<1x4x4xf32>
    %69 = vector.shape_cast %68 : vector<1x4x4xf32> to vector<4x4xf32>
    %cst_138 = arith.constant dense<0.000000e+00> : vector<256x4xf32>
    %70 = tpu.matmul %67, %69, %cst_138 {dimension_numbers = #tpu.dot_dimension_numbers<[1], [0], [0], [1], [0, 0, 1, 1], [], []>} : vector<256x4xf32>, vector<4x4xf32>, vector<256x4xf32> -> vector<256x4xf32>
    %71 = vector.shape_cast %70 : vector<256x4xf32> to vector<8x32x4xf32>
    %c0_139 = arith.constant 0 : index
    %c0_140 = arith.constant 0 : index
    %c0_141 = arith.constant 0 : index
    %72 = vector.load %arg11[%c0_139, %c0_140, %c0_141] : memref<8x32x4xf32, #tpu.memory_space<vmem>>, vector<8x32x4xf32>
    tpu.vector_store %arg11[%c0_139, %c0_140, %c0_141], %71 {strides = array<i32>} : memref<8x32x4xf32, #tpu.memory_space<vmem>>, vector<8x32x4xf32>,
    %73 = vector.extract_strided_slice %66 {offsets = [0, 0, 0], sizes = [7, 32, 4], strides = [1, 1, 1]} : vector<8x32x4xf32> to vector<7x32x4xf32>
    %74 = vector.shape_cast %73 : vector<7x32x4xf32> to vector<224x4xf32>
    %c0_142 = arith.constant 0 : index
    %c0_143 = arith.constant 0 : index
    %c0_144 = arith.constant 0 : index
    %75 = vector.load %arg6[%c0_142, %c0_143, %c0_144] : memref<3x4x4xf32, #tpu.memory_space<vmem>>, vector<1x4x4xf32>
    %76 = vector.shape_cast %75 : vector<1x4x4xf32> to vector<4x4xf32>
    %cst_145 = arith.constant dense<0.000000e+00> : vector<224x4xf32>
    %77 = tpu.matmul %74, %76, %cst_145 {dimension_numbers = #tpu.dot_dimension_numbers<[1], [0], [0], [1], [0, 0, 1, 1], [], []>} : vector<224x4xf32>, vector<4x4xf32>, vector<224x4xf32> -> vector<224x4xf32>
    %78 = vector.shape_cast %77 : vector<224x4xf32> to vector<7x32x4xf32>
    %79 = vector.extract_strided_slice %66 {offsets = [1, 0, 0], sizes = [7, 32, 4], strides = [1, 1, 1]} : vector<8x32x4xf32> to vector<7x32x4xf32>
    %80 = vector.shape_cast %79 : vector<7x32x4xf32> to vector<224x4xf32>
    %c2_146 = arith.constant 2 : index
    %c0_147 = arith.constant 0 : index
    %c0_148 = arith.constant 0 : index
    %81 = vector.load %arg6[%c2_146, %c0_147, %c0_148] : memref<3x4x4xf32, #tpu.memory_space<vmem>>, vector<1x4x4xf32>
    %82 = vector.shape_cast %81 : vector<1x4x4xf32> to vector<4x4xf32>
    %cst_149 = arith.constant dense<0.000000e+00> : vector<224x4xf32>
    %83 = tpu.matmul %80, %82, %cst_149 {dimension_numbers = #tpu.dot_dimension_numbers<[1], [0], [0], [1], [0, 0, 1, 1], [], []>} : vector<224x4xf32>, vector<4x4xf32>, vector<224x4xf32> -> vector<224x4xf32>
    %84 = vector.shape_cast %83 : vector<224x4xf32> to vector<7x32x4xf32>
    %c1_150 = arith.constant 1 : index
    %c0_151 = arith.constant 0 : index
    %c0_152 = arith.constant 0 : index
    %85 = vector.load %arg11[%c1_150, %c0_151, %c0_152] : memref<8x32x4xf32, #tpu.memory_space<vmem>>, vector<7x32x4xf32>
    %86 = arith.addf %85, %78 : vector<7x32x4xf32>
    %c1_153 = arith.constant 1 : index
    %c0_154 = arith.constant 0 : index
    %c0_155 = arith.constant 0 : index
    %87 = vector.load %arg11[%c1_153, %c0_154, %c0_155] : memref<8x32x4xf32, #tpu.memory_space<vmem>>, vector<7x32x4xf32>
    tpu.vector_store %arg11[%c1_153, %c0_154, %c0_155], %86 {strides = array<i32>} : memref<8x32x4xf32, #tpu.memory_space<vmem>>, vector<7x32x4xf32>,
    %c0_156 = arith.constant 0 : index
    %c0_157 = arith.constant 0 : index
    %c0_158 = arith.constant 0 : index
    %88 = vector.load %arg11[%c0_156, %c0_157, %c0_158] : memref<8x32x4xf32, #tpu.memory_space<vmem>>, vector<7x32x4xf32>
    %89 = arith.addf %88, %84 : vector<7x32x4xf32>
    %c0_159 = arith.constant 0 : index
    %c0_160 = arith.constant 0 : index
    %c0_161 = arith.constant 0 : index
    %90 = vector.load %arg11[%c0_159, %c0_160, %c0_161] : memref<8x32x4xf32, #tpu.memory_space<vmem>>, vector<7x32x4xf32>
    tpu.vector_store %arg11[%c0_159, %c0_160, %c0_161], %89 {strides = array<i32>} : memref<8x32x4xf32, #tpu.memory_space<vmem>>, vector<7x32x4xf32>,
    %c0_162 = arith.constant 0 : index
    %c0_163 = arith.constant 0 : index
    %c0_164 = arith.constant 0 : index
    %91 = vector.load %arg11[%c0_162, %c0_163, %c0_164] : memref<8x32x4xf32, #tpu.memory_space<vmem>>, vector<8x32x4xf32>
    %c0_165 = arith.constant 0 : index
    %c0_166 = arith.constant 0 : index
    %92 = vector.load %arg7[%c0_165, %c0_166] : memref<1x4xf32, #tpu.memory_space<vmem>>, vector<1x4xf32>
    %93 = vector.shape_cast %92 : vector<1x4xf32> to vector<1x1x4xf32>
    %94 = vector.broadcast %93 : vector<1x1x4xf32> to vector<8x32x4xf32>
    %95 = arith.addf %91, %94 : vector<8x32x4xf32>
    %c0_167 = arith.constant 0 : index
    %c0_168 = arith.constant 0 : index
    %c0_169 = arith.constant 0 : index
    %c0_170 = arith.constant 0 : index
    %96 = vector.load %arg8[%c0_167, %c0_168, %c0_169, %c0_170] : memref<1x8x32x4xf32, #tpu.memory_space<vmem>>, vector<1x8x32x4xf32>
    %97 = vector.shape_cast %96 : vector<1x8x32x4xf32> to vector<8x32x4xf32>
    %98 = vector.shape_cast %95 : vector<8x32x4xf32> to vector<1x8x32x4xf32>
    tpu.vector_store %arg8[%c0_167, %c0_168, %c0_169, %c0_170], %98 {strides = array<i32>} : memref<1x8x32x4xf32, #tpu.memory_space<vmem>>, vector<1x8x32x4xf32>,
    return
  }
  func.func @transform_0(%arg0: i32, %arg1: i32) -> (i32, i32, i32, i32, i32, i32) {
    %c0_i32 = arith.constant 0 : i32
    %c0_i32_0 = arith.constant 0 : i32
    %c0_i32_1 = arith.constant 0 : i32
    %c0_i32_2 = arith.constant 0 : i32
    %c0_i32_3 = arith.constant 0 : i32
    return %arg0, %c0_i32, %c0_i32_0, %arg1, %c0_i32_1, %c0_i32_2 : i32, i32, i32, i32, i32, i32
  }
  func.func @transform_1(%arg0: i32, %arg1: i32) -> (i32, i32, i32, i32, i32, i32) {
    %c4_i32 = arith.constant 4 : i32
    %0 = arith.muli %arg1, %c4_i32 : i32
    %c1_i32 = arith.constant 1 : i32
    %1 = arith.subi %0, %c1_i32 : i32
    %c0_i32 = arith.constant 0 : i32
    %2 = arith.maxsi %1, %c0_i32 : i32
    %c0_i32_0 = arith.constant 0 : i32
    %c1_i32_1 = arith.constant 1 : i32
    %c0_i32_2 = arith.constant 0 : i32
    %c0_i32_3 = arith.constant 0 : i32
    %c0_i32_4 = arith.constant 0 : i32
    return %arg0, %c0_i32_0, %c1_i32_1, %2, %c0_i32_2, %c0_i32_3 : i32, i32, i32, i32, i32, i32
  }
  func.func @transform_2(%arg0: i32, %arg1: i32) -> (i32, i32, i32) {
    %c0_i32 = arith.constant 0 : i32
    %c0_i32_0 = arith.constant 0 : i32
    %c0_i32_1 = arith.constant 0 : i32
    %c0_i32_2 = arith.constant 0 : i32
    return %c0_i32, %c0_i32_0, %c0_i32_1 : i32, i32, i32
  }
  func.func @transform_3(%arg0: i32, %arg1: i32) -> (i32, i32) {
    %c0_i32 = arith.constant 0 : i32
    %c0_i32_0 = arith.constant 0 : i32
    %c0_i32_1 = arith.constant 0 : i32
    return %c0_i32, %c0_i32_0 : i32, i32
  }
  func.func @transform_4(%arg0: i32, %arg1: i32) -> (i32, i32, i32) {
    %c0_i32 = arith.constant 0 : i32
    %c0_i32_0 = arith.constant 0 : i32
    %c0_i32_1 = arith.constant 0 : i32
    %c0_i32_2 = arith.constant 0 : i32
    return %c0_i32, %c0_i32_0, %c0_i32_1 : i32, i32, i32
  }
  func.func @transform_5(%arg0: i32, %arg1: i32) -> (i32, i32) {
    %c0_i32 = arith.constant 0 : i32
    %c0_i32_0 = arith.constant 0 : i32
    %c0_i32_1 = arith.constant 0 : i32
    return %c0_i32, %c0_i32_0 : i32, i32
  }
  func.func @transform_6(%arg0: i32, %arg1: i32) -> (i32, i32, i32, i32) {
    %c0_i32 = arith.constant 0 : i32
    %c0_i32_0 = arith.constant 0 : i32
    %c0_i32_1 = arith.constant 0 : i32
    return %arg0, %c0_i32, %arg1, %c0_i32_0 : i32, i32, i32, i32
  }
}

</mosaic_0001>

<llo_original>
// kernel: downsample3d.1
$region0: #{downsample3d.1}
  #allocation0 [shape = 'u32[]', space=smem, size = 0x4, offset = 0x4, fixed_abs, tag = 'smem constant byte address 0x4 - core index']
  #allocation1 [shape = 'u32[144,128]{1,0:T(1,128)}', space=vmem, size = 0x12000, scoped, tag = 'internal scratch']
  #allocation2 [shape = 'f32[8,4,8,12]{3,2,1,0:T(8,128)}', space=vmem, size = 0x20000, scoped, tag = 'scratch operand']
  #allocation3 [shape = 'f32[8,32,4]{2,1,0:T(8,128)}', space=vmem, size = 0x20000, scoped, tag = 'scratch operand']
  #allocation4 [shape = 'f32[8,32,4]{2,1,0:T(8,128)}', space=vmem, size = 0x20000, scoped, tag = 'scratch operand']
  #allocation17 [shape = 's32[]', space=sflag, size = 0x4, offset = 0, fixed_abs, tag = 'sflag constant byte address 0x0 - dummy sync flag']
  #allocation19 [shape = 's32[]', space=sflag, size = 0x4, offset = 0, fixed_abs, tag = 'sflag constant byte address 0x0 - dummy sync flag']
  #allocation21 [shape = 's32[]', space=sflag, size = 0x4, offset = 0, fixed_abs, tag = 'sflag constant byte address 0x0 - dummy sync flag']
  %s0 = inlined_call_operand.hbm [shape: f32[2,8,4,8,8,4], index: 0, kind: input, shape index: {}, may-alias: {0,1}]
  %s1 = inlined_call_operand.hbm [shape: f32[2,8,4,8,8,4], index: 1, kind: input, shape index: {}, may-alias: {0,1}]
  %s2 = inlined_call_operand.hbm [shape: f32[3,12,4], index: 2, kind: input, shape index: {}]
  %s3 = inlined_call_operand.hbm [shape: f32[1,4], index: 3, kind: input, shape index: {}]
  %s4 = inlined_call_operand.hbm [shape: f32[3,4,4], index: 4, kind: input, shape index: {}]
  %s5 = inlined_call_operand.hbm [shape: f32[1,4], index: 5, kind: input, shape index: {}]
  %s6 = inlined_call_operand.hbm [shape: f32[2,8,64,4], index: 6, kind: output, shape index: {}]
  %s7 = sld [smem:[#allocation0]]
  $region85: #{downsample3d.1} parent=0
    _
  %s9 = ssub.s32 1, %s7
  %s10 = scalar_select 0, %s9, %s7
  $region1: #{downsample3d.1} parent=0
    #allocation5 [shape = 'u8[1048576]{0}', space=vmem, size = 0x100000, scoped, tag = 'input window, operand 0']
    #allocation6 [shape = 's32[2]{0}', space=sflag, size = 0x8, scoped, tag = 'scoped memory for downsample3d.1']
    #allocation7 [shape = 's32[2]{0}', space=sflag, size = 0x8, scoped, tag = 'scoped memory for downsample3d.1']
    #allocation8 [shape = 'u8[131072]{0}', space=vmem, size = 0x20000, scoped, tag = 'input window, operand 1']
    #allocation9 [shape = 's32[2]{0}', space=sflag, size = 0x8, scoped, tag = 'scoped memory for downsample3d.1']
    #allocation10 [shape = 'u8[24576]{0}', space=vmem, size = 0x6000, scoped, tag = 'input window, operand 2, single buffered']
    #allocation11 [shape = 'u8[512]{0}', space=vmem, size = 0x400, scoped, tag = 'input window, operand 3, single buffered']
    #allocation12 [shape = 's32[1]{0}', space=sflag, size = 0x4, scoped, tag = 'scoped memory for downsample3d.1']
    #allocation13 [shape = 'u8[6144]{0}', space=vmem, size = 0x1800, scoped, tag = 'input window, operand 4, single buffered']
    #allocation14 [shape = 'u8[512]{0}', space=vmem, size = 0x400, scoped, tag = 'input window, operand 5, single buffered']
    #allocation15 [shape = 's32[1]{0}', space=sflag, size = 0x4, scoped, tag = 'scoped memory for downsample3d.1']
    #allocation16 [shape = 'u8[262144]{0}', space=vmem, size = 0x40000, scoped, tag = 'output window, operand 0']
    %11 = vsyncpa [#allocation6], 0
    %s12 = scalar_lea.sflag [#allocation6], 1
    %13 = vsyncpa %s12, 0
    %14 = vsyncpa [#allocation9], 0
    %s15 = scalar_lea.sflag [#allocation9], 1
    %16 = vsyncpa %s15, 0
    %17 = vsyncpa [#allocation12], 0
    %18 = vsyncpa [#allocation15], 0
    %19 = vsyncpa [#allocation7], 0
    %s20 = scalar_lea.sflag [#allocation7], 1
    %21 = vsyncpa %s20, 0
    loop: start=0, step=1, limit=6
    $region2: #{downsample3d.1} parent=1 // loop_pre_header
      _
    $region3: #{downsample3d.1} parent=1 // loop_header
      %s23 = sphi 0, %s27
      %p24 = scmp.ge.s32.totalorder %s23, 6
      %s30 = sphi 0, %s42
      %s31 = sphi 0, %s38
      %s32 = sphi 0, %s30
      %s33 = sphi 0, %s31
      %s34 = sphi 0, %s32
      %s35 = sphi 0, %s33
      %s47 = sphi 0, %s49
      %s50 = sphi 0, %s47
      %s51 = sphi 0, %s50
      %s67 = sphi 0, %s51
      %s83 = sphi 0, %s85
      %s86 = sphi 0, %s83
      %s87 = sphi 0, %s86
      %s103 = sphi 0, %s87
      %s107 = sphi 0, %s107
      %s109 = sphi 0, %s107
      %s110 = sphi 0, %s109
      %s124 = sphi 0, %s110
      %s128 = sphi 0, %s128
      %s130 = sphi 0, %s128
      %s131 = sphi 0, %s130
      %s145 = sphi 0, %s131
      %s149 = sphi 0, %s149
      %s151 = sphi 0, %s149
      %s152 = sphi 0, %s151
      %s166 = sphi 0, %s152
      %s170 = sphi 0, %s170
      %s172 = sphi 0, %s170
      %s173 = sphi 0, %s172
      %s187 = sphi 0, %s173
      %s195 = sphi 0, %s197
      %s198 = sphi 0, %s195
      %s199 = sphi 0, %s198
      %s215 = sphi 0, %s199
    $region4: #{downsample3d.1} parent=1 // loop_header_branch
      %26 = sbr.rel (%p24) target = $region8
    $region5: #{downsample3d.1} parent=1 // loop_body
      %s28 = ssub.s32 %s23, 1
      %s29 = ssub.s32 %s23, 2
      %s36 = sadd.s32 1, %s31
      %p37 = scmp.ge.s32.totalorder %s36, 2
      %s38 = scalar_select %p37, 0, %s36
      %s39 = sadd.s32 1, %s30
      %s40 = scalar_select %p37, %s39, %s30
      %p41 = scmp.ge.s32.totalorder %s40, 2
      %s42 = scalar_select %p41, 0, %s40
      %s43 = ssub.s32 %s30, %s42
      %s44 = ssub.s32 %s31, %s38
      %s45 = sor.u32 %s43, %s44
      %p46 = scmp.eq.s32.totalorder %s45, 0
      %s48 = sadd.s32 %s47, 1
      %s49 = scalar_select %p46, %s47, %s48
      %p52 = pneg %p46
      %p53 = scmp.eq.s32.totalorder %s23, 3
      %p54 = por %p52, %p53
      %p55 = scmp.ne.s32.totalorder %s47, %s50
      %p56 = scmp.eq.s32.totalorder %s23, 0
      %p57 = por %p55, %p56
      %p58 = scmp.ne.s32.totalorder %s47, %s50
      %p59 = scmp.eq.s32.totalorder %s28, 3
      %p60 = por %p58, %p59
      %p61 = scmp.ne.s32.totalorder %s50, %s51
      %p62 = scmp.eq.s32.totalorder %s28, 0
      %p63 = por %p61, %p62
      %p64 = scmp.ne.s32.totalorder %s50, %s51
      %p65 = scmp.eq.s32.totalorder %s29, 3
      %p66 = por %p64, %p65
      %p68 = scmp.ne.s32.totalorder %s51, %s67
      %p69 = scmp.eq.s32.totalorder %s29, 0
      %p70 = por %p68, %p69
      %s71 = smul.u32 %s31, 4
      %s72 = ssub.s32 %s71, 1
      %p73 = scmp.gt.s32.totalorder %s72, 0
      %s74 = scalar_select %p73, %s72, 0
      %s75 = smul.u32 %s38, 4
      %s76 = ssub.s32 %s75, 1
      %p77 = scmp.gt.s32.totalorder %s76, 0
      %s78 = scalar_select %p77, %s76, 0
      %s79 = ssub.s32 %s30, %s42
      %s80 = ssub.s32 %s74, %s78
      %s81 = sor.u32 %s79, %s80
      %p82 = scmp.eq.s32.totalorder %s81, 0
      %s84 = sadd.s32 %s83, 1
      %s85 = scalar_select %p82, %s83, %s84
      %p88 = pneg %p82
      %p89 = scmp.eq.s32.totalorder %s23, 3
      %p90 = por %p88, %p89
      %p91 = scmp.ne.s32.totalorder %s83, %s86
      %p92 = scmp.eq.s32.totalorder %s23, 0
      %p93 = por %p91, %p92
      %p94 = scmp.ne.s32.totalorder %s83, %s86
      %p95 = scmp.eq.s32.totalorder %s28, 3
      %p96 = por %p94, %p95
      %p97 = scmp.ne.s32.totalorder %s86, %s87
      %p98 = scmp.eq.s32.totalorder %s28, 0
      %p99 = por %p97, %p98
      %p100 = scmp.ne.s32.totalorder %s86, %s87
      %p101 = scmp.eq.s32.totalorder %s29, 3
      %p102 = por %p100, %p101
      %p104 = scmp.ne.s32.totalorder %s87, %s103
      %p105 = scmp.eq.s32.totalorder %s29, 0
      %p106 = por %p104, %p105
      %s108 = sadd.s32 %s107, 1
      %p111 = scmp.eq.s32.totalorder %s23, 3
      %p112 = scmp.ne.s32.totalorder %s107, %s109
      %p113 = scmp.eq.s32.totalorder %s23, 0
      %p114 = por %p112, %p113
      %p115 = scmp.ne.s32.totalorder %s107, %s109
      %p116 = scmp.eq.s32.totalorder %s28, 3
      %p117 = por %p115, %p116
      %p118 = scmp.ne.s32.totalorder %s109, %s110
      %p119 = scmp.eq.s32.totalorder %s28, 0
      %p120 = por %p118, %p119
      %p121 = scmp.ne.s32.totalorder %s109, %s110
      %p122 = scmp.eq.s32.totalorder %s29, 3
      %p123 = por %p121, %p122
      %p125 = scmp.ne.s32.totalorder %s110, %s124
      %p126 = scmp.eq.s32.totalorder %s29, 0
      %p127 = por %p125, %p126
      %s129 = sadd.s32 %s128, 1
      %p132 = scmp.eq.s32.totalorder %s23, 3
      %p133 = scmp.ne.s32.totalorder %s128, %s130
      %p134 = scmp.eq.s32.totalorder %s23, 0
      %p135 = por %p133, %p134
      %p136 = scmp.ne.s32.totalorder %s128, %s130
      %p137 = scmp.eq.s32.totalorder %s28, 3
      %p138 = por %p136, %p137
      %p139 = scmp.ne.s32.totalorder %s130, %s131
      %p140 = scmp.eq.s32.totalorder %s28, 0
      %p141 = por %p139, %p140
      %p142 = scmp.ne.s32.totalorder %s130, %s131
      %p143 = scmp.eq.s32.totalorder %s29, 3
      %p144 = por %p142, %p143
      %p146 = scmp.ne.s32.totalorder %s131, %s145
      %p147 = scmp.eq.s32.totalorder %s29, 0
      %p148 = por %p146, %p147
      %s150 = sadd.s32 %s149, 1
      %p153 = scmp.eq.s32.totalorder %s23, 3
      %p154 = scmp.ne.s32.totalorder %s149, %s151
      %p155 = scmp.eq.s32.totalorder %s23, 0
      %p156 = por %p154, %p155
      %p157 = scmp.ne.s32.totalorder %s149, %s151
      %p158 = scmp.eq.s32.totalorder %s28, 3
      %p159 = por %p157, %p158
      %p160 = scmp.ne.s32.totalorder %s151, %s152
      %p161 = scmp.eq.s32.totalorder %s28, 0
      %p162 = por %p160, %p161
      %p163 = scmp.ne.s32.totalorder %s151, %s152
      %p164 = scmp.eq.s32.totalorder %s29, 3
      %p165 = por %p163, %p164
      %p167 = scmp.ne.s32.totalorder %s152, %s166
      %p168 = scmp.eq.s32.totalorder %s29, 0
      %p169 = por %p167, %p168
      %s171 = sadd.s32 %s170, 1
      %p174 = scmp.eq.s32.totalorder %s23, 3
      %p175 = scmp.ne.s32.totalorder %s170, %s172
      %p176 = scmp.eq.s32.totalorder %s23, 0
      %p177 = por %p175, %p176
      %p178 = scmp.ne.s32.totalorder %s170, %s172
      %p179 = scmp.eq.s32.totalorder %s28, 3
      %p180 = por %p178, %p179
      %p181 = scmp.ne.s32.totalorder %s172, %s173
      %p182 = scmp.eq.s32.totalorder %s28, 0
      %p183 = por %p181, %p182
      %p184 = scmp.ne.s32.totalorder %s172, %s173
      %p185 = scmp.eq.s32.totalorder %s29, 3
      %p186 = por %p184, %p185
      %p188 = scmp.ne.s32.totalorder %s173, %s187
      %p189 = scmp.eq.s32.totalorder %s29, 0
      %p190 = por %p188, %p189
      %s191 = ssub.s32 %s30, %s42
      %s192 = ssub.s32 %s31, %s38
      %s193 = sor.u32 %s191, %s192
      %p194 = scmp.eq.s32.totalorder %s193, 0
      %s196 = sadd.s32 %s195, 1
      %s197 = scalar_select %p194, %s195, %s196
      %p200 = pneg %p194
      %p201 = scmp.eq.s32.totalorder %s23, 3
      %p202 = por %p200, %p201
      %p203 = scmp.ne.s32.totalorder %s195, %s198
      %p204 = scmp.eq.s32.totalorder %s23, 0
      %p205 = por %p203, %p204
      %p206 = scmp.ne.s32.totalorder %s195, %s198
      %p207 = scmp.eq.s32.totalorder %s28, 3
      %p208 = por %p206, %p207
      %p209 = scmp.ne.s32.totalorder %s198, %s199
      %p210 = scmp.eq.s32.totalorder %s28, 0
      %p211 = por %p209, %p210
      %p212 = scmp.ne.s32.totalorder %s198, %s199
      %p213 = scmp.eq.s32.totalorder %s29, 3
      %p214 = por %p212, %p213
      %p216 = scmp.ne.s32.totalorder %s199, %s215
      %p217 = scmp.eq.s32.totalorder %s29, 0
      %p218 = por %p216, %p217
      %p219 = scmp.le.s32.totalorder 1, %s23
      %p220 = scmp.lt.s32.totalorder %s23, 5
      %p221 = pnand %p219, %p220
      %p222 = pneg %p221
      // Predicated region
      $region9: #{downsample3d.1} parent=5 // pred_check
        _
      $region10: #{downsample3d.1} parent=5 // pred_check_branch
        %224 = sbr.rel (%p221) target = $region12
      $region11: #{downsample3d.1} parent=5 // pred_region
        %s225 = ssub.s32 %s23, 1
        // Predicated region
        $region13: #{downsample3d.1} parent=11 // pred_check
          %p226 = pneg %p120
        $region14: #{downsample3d.1} parent=11 // pred_check_branch
          %228 = sbr.rel (%p226) target = $region16
        $region15: #{downsample3d.1} parent=11 // pred_region
          %s230 = ssub.s32 768, 768
          %231 = vsyncadd [#allocation9], %s230
          %s232 = sshll.u32 [#allocation10], 4
          %s233 = int_to_ptr.vmem [resolvable:$true] %s232
          %238 = dma.hbm_to_vmem [thread:$0]  %s2, 768, %s233, [#allocation9], 128, 128, 8
        $region16: #{downsample3d.1} parent=11 // pred_fallthru
          _
        // Predicated region
        $region17: #{downsample3d.1} parent=11 // pred_check
          %p239 = pneg %p141
        $region18: #{downsample3d.1} parent=11 // pred_check_branch
          %241 = sbr.rel (%p239) target = $region20
        $region19: #{downsample3d.1} parent=11 // pred_region
          %s243 = ssub.s32 16, 16
          %244 = vsyncadd [#allocation12], %s243
          %s246 = sshll.u32 [#allocation11], 4
          %s247 = int_to_ptr.vmem [resolvable:$true] %s246
          %249 = dma.hbm_to_vmem [thread:$0]  %s3, 16, %s247, [#allocation12]
        $region20: #{downsample3d.1} parent=11 // pred_fallthru
          _
        // Predicated region
        $region21: #{downsample3d.1} parent=11 // pred_check
          %p250 = pneg %p162
        $region22: #{downsample3d.1} parent=11 // pred_check_branch
          %252 = sbr.rel (%p250) target = $region24
        $region23: #{downsample3d.1} parent=11 // pred_region
          %s254 = ssub.s32 192, 192
          %255 = vsyncadd [#allocation12], %s254
          %s256 = sshll.u32 [#allocation13], 4
          %s257 = int_to_ptr.vmem [resolvable:$true] %s256
          %262 = dma.hbm_to_vmem [thread:$0]  %s4, 192, %s257, [#allocation12], 64, 64, 4
        $region24: #{downsample3d.1} parent=11 // pred_fallthru
          _
        // Predicated region
        $region25: #{downsample3d.1} parent=11 // pred_check
          %p263 = pneg %p183
        $region26: #{downsample3d.1} parent=11 // pred_check_branch
          %265 = sbr.rel (%p263) target = $region28
        $region27: #{downsample3d.1} parent=11 // pred_region
          %s267 = ssub.s32 16, 16
          %268 = vsyncadd [#allocation15], %s267
          %s270 = sshll.u32 [#allocation14], 4
          %s271 = int_to_ptr.vmem [resolvable:$true] %s270
          %273 = dma.hbm_to_vmem [thread:$0]  %s5, 16, %s271, [#allocation15]
        $region28: #{downsample3d.1} parent=11 // pred_fallthru
          _
      $region12: #{downsample3d.1} parent=5 // pred_fallthru
        _
      %p274 = scmp.lt.s32.totalorder %s23, 4
      // Predicated region
      $region29: #{downsample3d.1} parent=5 // pred_check
        %p275 = pneg %p274
      $region30: #{downsample3d.1} parent=5 // pred_check_branch
        %277 = sbr.rel (%p275) target = $region32
      $region31: #{downsample3d.1} parent=5 // pred_region
        // Predicated region
        $region33: #{downsample3d.1} parent=31 // pred_check
          %p278 = pneg %p57
        $region34: #{downsample3d.1} parent=31 // pred_check_branch
          %280 = sbr.rel (%p278) target = $region36
        $region35: #{downsample3d.1} parent=31 // pred_region
          #allocation18 [shape = 'u32[6]{0}', space=smem, size = 0x18, scoped, tag = 'DMA stride descriptor']
          %s281 = sand.u32 %s47, 1
          %s282 = scalar_lea.sflag [#allocation6], %s281
          %s283 = sand.u32 %s47, 1
          %s284 = smul.addr %s283, 1024
          %s285 = scalar_lea.vmem [#allocation5], %s284
          %s286 = smul.u32 4, %s31
          %s288 = ssub.s32 16384, 16384
          %289 = vsyncadd %s282, %s288
          %s290 = smul.addr %s30, 256
          %s291 = sadd.s32 %s286, %s290
          %s292 = smul.addr %s291, 128
          %s293 = scalar_lea.hbm %s0, %s292
          %s295 = sshll.u32 1, 14
          %s296 = sxor.u32 4294967295, %s295
          %s298 = sld [smem:[#allocation0]]
          %s299 = sadd.s32 2, %s298
          %s301 = sshll.u32 7, 26
          %s302 = sxor.u32 4294967295, %s301
          %s303 = sand.u32 0, %s302
          %s304 = sshll.u32 %s299, 26
          %s305 = sor.u32 %s303, %s304
          %s306 = sshll.u32 %s285, 4
          %s307 = int_to_ptr.vmem [resolvable:$true] %s306
          %313 = sst [smem:[#allocation18]] 1024
          %s314 = scalar_lea.smem [#allocation18], 1
          %315 = sst [smem:[%s314]] 512
          %s316 = scalar_lea.smem [#allocation18], 2
          %317 = sst [smem:[%s316]] 4
          %s318 = scalar_lea.smem [#allocation18], 3
          %319 = sst [smem:[%s318]] 128
          %s320 = scalar_lea.smem [#allocation18], 4
          %321 = sst [smem:[%s320]] 128
          %s322 = scalar_lea.smem [#allocation18], 5
          %323 = sst [smem:[%s322]] 8
          %325 = dma.general %s293, 16384, %s307, %s282, [#allocation17], [#allocation18], %s305, 0
        $region36: #{downsample3d.1} parent=31 // pred_fallthru
          _
        // Predicated region
        $region37: #{downsample3d.1} parent=31 // pred_check
          %p326 = pneg %p93
        $region38: #{downsample3d.1} parent=31 // pred_check_branch
          %328 = sbr.rel (%p326) target = $region40
        $region39: #{downsample3d.1} parent=31 // pred_region
          #allocation20 [shape = 'u32[6]{0}', space=smem, size = 0x18, scoped, tag = 'DMA stride descriptor']
          %s329 = sand.u32 %s23, 1
          %s330 = scalar_lea.sflag [#allocation9], %s329
          %s331 = sand.u32 %s83, 1
          %s332 = smul.addr %s331, 128
          %s333 = scalar_lea.vmem [#allocation8], %s332
          %s334 = smul.u32 %s31, 4
          %s335 = ssub.s32 %s334, 1
          %p336 = scmp.gt.s32.totalorder %s335, 0
          %s337 = scalar_select %p336, %s335, 0
          %s339 = ssub.s32 2048, 2048
          %340 = vsyncadd %s330, %s339
          %s341 = sadd.s32 %s337, 16
          %s342 = smul.addr %s30, 256
          %s343 = sadd.s32 %s341, %s342
          %s344 = smul.addr %s343, 128
          %s345 = scalar_lea.hbm %s1, %s344
          %s347 = sshll.u32 1, 14
          %s348 = sxor.u32 4294967295, %s347
          %s350 = sld [smem:[#allocation0]]
          %s351 = sadd.s32 2, %s350
          %s353 = sshll.u32 7, 26
          %s354 = sxor.u32 4294967295, %s353
          %s355 = sand.u32 0, %s354
          %s356 = sshll.u32 %s351, 26
          %s357 = sor.u32 %s355, %s356
          %s358 = sshll.u32 %s333, 4
          %s359 = int_to_ptr.vmem [resolvable:$true] %s358
          %365 = sst [smem:[#allocation20]] 4096
          %s366 = scalar_lea.smem [#allocation20], 1
          %367 = sst [smem:[%s366]] 256
          %s368 = scalar_lea.smem [#allocation20], 2
          %369 = sst [smem:[%s368]] 2
          %s370 = scalar_lea.smem [#allocation20], 3
          %371 = sst [smem:[%s370]] 1024
          %s372 = scalar_lea.smem [#allocation20], 4
          %373 = sst [smem:[%s372]] 128
          %s374 = scalar_lea.smem [#allocation20], 5
          %375 = sst [smem:[%s374]] 8
          %377 = dma.general %s345, 2048, %s359, %s330, [#allocation19], [#allocation20], %s357, 0
        $region40: #{downsample3d.1} parent=31 // pred_fallthru
          _
      $region32: #{downsample3d.1} parent=5 // pred_fallthru
        _
      %p378 = scmp.le.s32.totalorder 1, %s23
      %p379 = scmp.lt.s32.totalorder %s23, 5
      %p380 = pnand %p378, %p379
      %p381 = pneg %p380
      // Predicated region
      $region41: #{downsample3d.1} parent=5 // pred_check
        _
      $region42: #{downsample3d.1} parent=5 // pred_check_branch
        %383 = sbr.rel (%p380) target = $region44
      $region43: #{downsample3d.1} parent=5 // pred_region
        %s384 = ssub.s32 %s23, 1
        %s385 = sand.u32 %s50, 1
        %s386 = scalar_lea.sflag [#allocation6], %s385
        %s387 = sand.u32 %s50, 1
        %s388 = smul.addr %s387, 1024
        %s389 = scalar_lea.vmem [#allocation5], %s388
        // Predicated region
        $region45: #{downsample3d.1} parent=43 // pred_check
          %p390 = pneg %p63
        $region46: #{downsample3d.1} parent=43 // pred_check_branch
          %392 = sbr.rel (%p390) target = $region48
        $region47: #{downsample3d.1} parent=43 // pred_region
          %393 = dma.done %s386, 16384
        $region48: #{downsample3d.1} parent=43 // pred_fallthru
          _
        %s394 = sand.u32 %s28, 1
        %s395 = scalar_lea.sflag [#allocation9], %s394
        %s396 = sand.u32 %s86, 1
        %s397 = smul.addr %s396, 128
        %s398 = scalar_lea.vmem [#allocation8], %s397
        // Predicated region
        $region49: #{downsample3d.1} parent=43 // pred_check
          %p399 = pneg %p99
        $region50: #{downsample3d.1} parent=43 // pred_check_branch
          %401 = sbr.rel (%p399) target = $region52
        $region51: #{downsample3d.1} parent=43 // pred_region
          %402 = dma.done %s395, 2048
        $region52: #{downsample3d.1} parent=43 // pred_fallthru
          _
        // Predicated region
        $region53: #{downsample3d.1} parent=43 // pred_check
          %p403 = pneg %p120
        $region54: #{downsample3d.1} parent=43 // pred_check_branch
          %405 = sbr.rel (%p403) target = $region56
        $region55: #{downsample3d.1} parent=43 // pred_region
          %406 = dma.done [#allocation9], 768
        $region56: #{downsample3d.1} parent=43 // pred_fallthru
          _
        // Predicated region
        $region57: #{downsample3d.1} parent=43 // pred_check
          %p407 = pneg %p141
        $region58: #{downsample3d.1} parent=43 // pred_check_branch
          %409 = sbr.rel (%p407) target = $region60
        $region59: #{downsample3d.1} parent=43 // pred_region
          %410 = dma.done [#allocation12], 16
        $region60: #{downsample3d.1} parent=43 // pred_fallthru
          _
        // Predicated region
        $region61: #{downsample3d.1} parent=43 // pred_check
          %p411 = pneg %p162
        $region62: #{downsample3d.1} parent=43 // pred_check_branch
          %413 = sbr.rel (%p411) target = $region64
        $region63: #{downsample3d.1} parent=43 // pred_region
          %414 = dma.done [#allocation12], 192
        $region64: #{downsample3d.1} parent=43 // pred_fallthru
          _
        // Predicated region
        $region65: #{downsample3d.1} parent=43 // pred_check
          %p415 = pneg %p183
        $region66: #{downsample3d.1} parent=43 // pred_check_branch
          %417 = sbr.rel (%p415) target = $region68
        $region67: #{downsample3d.1} parent=43 // pred_region
          %418 = dma.done [#allocation15], 16
        $region68: #{downsample3d.1} parent=43 // pred_fallthru
          _
        %s419 = sand.u32 %s50, 1
        %s420 = scalar_lea.sflag [#allocation6], %s419
        %s421 = sand.u32 %s50, 1
        %s422 = smul.addr %s421, 1024
        %s423 = scalar_lea.vmem [#allocation5], %s422
        %p424 = pneg %p63
        %p425 = pneg %p60
        %s426 = sand.u32 %s28, 1
        %s427 = scalar_lea.sflag [#allocation9], %s426
        %s428 = sand.u32 %s86, 1
        %s429 = smul.addr %s428, 128
        %s430 = scalar_lea.vmem [#allocation8], %s429
        %p431 = pneg %p99
        %p432 = pneg %p96
        %p433 = pneg %p120
        %p434 = pneg %p117
        %p435 = pneg %p141
        %p436 = pneg %p138
        %p437 = pneg %p162
        %p438 = pneg %p159
        %p439 = pneg %p183
        %p440 = pneg %p180
        %p441 = pneg %p211
        %p442 = pneg %p208
        %s443 = sand.u32 %s198, 1
        %s444 = scalar_lea.sflag [#allocation7], %s443
        %s445 = sand.u32 %s198, 1
        %s446 = smul.addr %s445, 256
        %s447 = scalar_lea.vmem [#allocation16], %s446
        %s448 = smul.u32 4, %s33
        %s449 = smul.u32 %s33, 4
        %s450 = ssub.s32 %s449, 1
        %p451 = scmp.gt.s32.totalorder %s450, 0
        %s452 = scalar_select %p451, %s450, 0
        %s453 = smul.u32 4, %s33
        %v454 = vld [vmem:[%s389] sm:$0xff]
        %v455 = vld [vmem:[%s389 + $0x8] sm:$0xff]
        %v456 = vld [vmem:[%s389 + $0x10] sm:$0xff]
        %v457 = vld [vmem:[%s389 + $0x18] sm:$0xff]
        %v458 = vld [vmem:[%s389 + $0x80] sm:$0xff]
        %v459 = vld [vmem:[%s389 + $0x88] sm:$0xff]
        %v460 = vld [vmem:[%s389 + $0x90] sm:$0xff]
        %v461 = vld [vmem:[%s389 + $0x98] sm:$0xff]
        %v462 = vld [vmem:[%s389 + $0x100] sm:$0xff]
        %v463 = vld [vmem:[%s389 + $0x108] sm:$0xff]
        %v464 = vld [vmem:[%s389 + $0x110] sm:$0xff]
        %v465 = vld [vmem:[%s389 + $0x118] sm:$0xff]
        %v466 = vld [vmem:[%s389 + $0x180] sm:$0xff]
        %v467 = vld [vmem:[%s389 + $0x188] sm:$0xff]
        %v468 = vld [vmem:[%s389 + $0x190] sm:$0xff]
        %v469 = vld [vmem:[%s389 + $0x198] sm:$0xff]
        %v470 = vld [vmem:[%s389 + $0x200] sm:$0xff]
        %v471 = vld [vmem:[%s389 + $0x208] sm:$0xff]
        %v472 = vld [vmem:[%s389 + $0x210] sm:$0xff]
        %v473 = vld [vmem:[%s389 + $0x218] sm:$0xff]
        %v474 = vld [vmem:[%s389 + $0x280] sm:$0xff]
        %v475 = vld [vmem:[%s389 + $0x288] sm:$0xff]
        %v476 = vld [vmem:[%s389 + $0x290] sm:$0xff]
        %v477 = vld [vmem:[%s389 + $0x298] sm:$0xff]
        %v478 = vld [vmem:[%s389 + $0x300] sm:$0xff]
        %v479 = vld [vmem:[%s389 + $0x308] sm:$0xff]
        %v480 = vld [vmem:[%s389 + $0x310] sm:$0xff]
        %v481 = vld [vmem:[%s389 + $0x318] sm:$0xff]
        %v482 = vld [vmem:[%s389 + $0x380] sm:$0xff]
        %v483 = vld [vmem:[%s389 + $0x388] sm:$0xff]
        %v484 = vld [vmem:[%s389 + $0x390] sm:$0xff]
        %v485 = vld [vmem:[%s389 + $0x398] sm:$0xff]
        %s486 = scalar_lea.vmem %s389, 32 [#allocation5]
        %v487 = vld [vmem:[%s486] sm:$0xff]
        %v488 = vld [vmem:[%s486 + $0x8] sm:$0xff]
        %v489 = vld [vmem:[%s486 + $0x10] sm:$0xff]
        %v490 = vld [vmem:[%s486 + $0x18] sm:$0xff]
        %v491 = vld [vmem:[%s486 + $0x80] sm:$0xff]
        %v492 = vld [vmem:[%s486 + $0x88] sm:$0xff]
        %v493 = vld [vmem:[%s486 + $0x90] sm:$0xff]
        %v494 = vld [vmem:[%s486 + $0x98] sm:$0xff]
        %v495 = vld [vmem:[%s486 + $0x100] sm:$0xff]
        %v496 = vld [vmem:[%s486 + $0x108] sm:$0xff]
        %v497 = vld [vmem:[%s486 + $0x110] sm:$0xff]
        %v498 = vld [vmem:[%s486 + $0x118] sm:$0xff]
        %v499 = vld [vmem:[%s486 + $0x180] sm:$0xff]
        %v500 = vld [vmem:[%s486 + $0x188] sm:$0xff]
        %v501 = vld [vmem:[%s486 + $0x190] sm:$0xff]
        %v502 = vld [vmem:[%s486 + $0x198] sm:$0xff]
        %v503 = vld [vmem:[%s486 + $0x200] sm:$0xff]
        %v504 = vld [vmem:[%s486 + $0x208] sm:$0xff]
        %v505 = vld [vmem:[%s486 + $0x210] sm:$0xff]
        %v506 = vld [vmem:[%s486 + $0x218] sm:$0xff]
        %v507 = vld [vmem:[%s486 + $0x280] sm:$0xff]
        %v508 = vld [vmem:[%s486 + $0x288] sm:$0xff]
        %v509 = vld [vmem:[%s486 + $0x290] sm:$0xff]
        %v510 = vld [vmem:[%s486 + $0x298] sm:$0xff]
        %v511 = vld [vmem:[%s486 + $0x300] sm:$0xff]
        %v512 = vld [vmem:[%s486 + $0x308] sm:$0xff]
        %v513 = vld [vmem:[%s486 + $0x310] sm:$0xff]
        %v514 = vld [vmem:[%s486 + $0x318] sm:$0xff]
        %v515 = vld [vmem:[%s486 + $0x380] sm:$0xff]
        %v516 = vld [vmem:[%s486 + $0x388] sm:$0xff]
        %v517 = vld [vmem:[%s486 + $0x390] sm:$0xff]
        %v518 = vld [vmem:[%s486 + $0x398] sm:$0xff]
        %s519 = scalar_lea.vmem %s389, 64 [#allocation5]
        %v520 = vld [vmem:[%s519] sm:$0xff]
        %v521 = vld [vmem:[%s519 + $0x8] sm:$0xff]
        %v522 = vld [vmem:[%s519 + $0x10] sm:$0xff]
        %v523 = vld [vmem:[%s519 + $0x18] sm:$0xff]
        %v524 = vld [vmem:[%s519 + $0x80] sm:$0xff]
        %v525 = vld [vmem:[%s519 + $0x88] sm:$0xff]
        %v526 = vld [vmem:[%s519 + $0x90] sm:$0xff]
        %v527 = vld [vmem:[%s519 + $0x98] sm:$0xff]
        %v528 = vld [vmem:[%s519 + $0x100] sm:$0xff]
        %v529 = vld [vmem:[%s519 + $0x108] sm:$0xff]
        %v530 = vld [vmem:[%s519 + $0x110] sm:$0xff]
        %v531 = vld [vmem:[%s519 + $0x118] sm:$0xff]
        %v532 = vld [vmem:[%s519 + $0x180] sm:$0xff]
        %v533 = vld [vmem:[%s519 + $0x188] sm:$0xff]
        %v534 = vld [vmem:[%s519 + $0x190] sm:$0xff]
        %v535 = vld [vmem:[%s519 + $0x198] sm:$0xff]
        %v536 = vld [vmem:[%s519 + $0x200] sm:$0xff]
        %v537 = vld [vmem:[%s519 + $0x208] sm:$0xff]
        %v538 = vld [vmem:[%s519 + $0x210] sm:$0xff]
        %v539 = vld [vmem:[%s519 + $0x218] sm:$0xff]
        %v540 = vld [vmem:[%s519 + $0x280] sm:$0xff]
        %v541 = vld [vmem:[%s519 + $0x288] sm:$0xff]
        %v542 = vld [vmem:[%s519 + $0x290] sm:$0xff]
        %v543 = vld [vmem:[%s519 + $0x298] sm:$0xff]
        %v544 = vld [vmem:[%s519 + $0x300] sm:$0xff]
        %v545 = vld [vmem:[%s519 + $0x308] sm:$0xff]
        %v546 = vld [vmem:[%s519 + $0x310] sm:$0xff]
        %v547 = vld [vmem:[%s519 + $0x318] sm:$0xff]
        %v548 = vld [vmem:[%s519 + $0x380] sm:$0xff]
        %v549 = vld [vmem:[%s519 + $0x388] sm:$0xff]
        %v550 = vld [vmem:[%s519 + $0x390] sm:$0xff]
        %v551 = vld [vmem:[%s519 + $0x398] sm:$0xff]
        %s552 = scalar_lea.vmem %s389, 96 [#allocation5]
        %v553 = vld [vmem:[%s552] sm:$0xff]
        %v554 = vld [vmem:[%s552 + $0x8] sm:$0xff]
        %v555 = vld [vmem:[%s552 + $0x10] sm:$0xff]
        %v556 = vld [vmem:[%s552 + $0x18] sm:$0xff]
        %v557 = vld [vmem:[%s552 + $0x80] sm:$0xff]
        %v558 = vld [vmem:[%s552 + $0x88] sm:$0xff]
        %v559 = vld [vmem:[%s552 + $0x90] sm:$0xff]
        %v560 = vld [vmem:[%s552 + $0x98] sm:$0xff]
        %v561 = vld [vmem:[%s552 + $0x100] sm:$0xff]
        %v562 = vld [vmem:[%s552 + $0x108] sm:$0xff]
        %v563 = vld [vmem:[%s552 + $0x110] sm:$0xff]
        %v564 = vld [vmem:[%s552 + $0x118] sm:$0xff]
        %v565 = vld [vmem:[%s552 + $0x180] sm:$0xff]
        %v566 = vld [vmem:[%s552 + $0x188] sm:$0xff]
        %v567 = vld [vmem:[%s552 + $0x190] sm:$0xff]
        %v568 = vld [vmem:[%s552 + $0x198] sm:$0xff]
        %v569 = vld [vmem:[%s552 + $0x200] sm:$0xff]
        %v570 = vld [vmem:[%s552 + $0x208] sm:$0xff]
        %v571 = vld [vmem:[%s552 + $0x210] sm:$0xff]
        %v572 = vld [vmem:[%s552 + $0x218] sm:$0xff]
        %v573 = vld [vmem:[%s552 + $0x280] sm:$0xff]
        %v574 = vld [vmem:[%s552 + $0x288] sm:$0xff]
        %v575 = vld [vmem:[%s552 + $0x290] sm:$0xff]
        %v576 = vld [vmem:[%s552 + $0x298] sm:$0xff]
        %v577 = vld [vmem:[%s552 + $0x300] sm:$0xff]
        %v578 = vld [vmem:[%s552 + $0x308] sm:$0xff]
        %v579 = vld [vmem:[%s552 + $0x310] sm:$0xff]
        %v580 = vld [vmem:[%s552 + $0x318] sm:$0xff]
        %v581 = vld [vmem:[%s552 + $0x380] sm:$0xff]
        %v582 = vld [vmem:[%s552 + $0x388] sm:$0xff]
        %v583 = vld [vmem:[%s552 + $0x390] sm:$0xff]
        %v584 = vld [vmem:[%s552 + $0x398] sm:$0xff]
        %v585 = vld [vmem:[%s398] sm:$0xff]
        %v586 = vld [vmem:[%s398 + $0x10] sm:$0xff]
        %v587 = vld [vmem:[%s398 + $0x20] sm:$0xff]
        %v588 = vld [vmem:[%s398 + $0x30] sm:$0xff]
        %v589 = vld [vmem:[%s398 + $0x40] sm:$0xff]
        %v590 = vld [vmem:[%s398 + $0x50] sm:$0xff]
        %v591 = vld [vmem:[%s398 + $0x60] sm:$0xff]
        %v592 = vld [vmem:[%s398 + $0x70] sm:$0xff]
        %s593 = scalar_lea.vmem %s398, 8 [#allocation8]
        %v594 = vld [vmem:[%s593] sm:$0xff]
        %v595 = vld [vmem:[%s593 + $0x10] sm:$0xff]
        %v596 = vld [vmem:[%s593 + $0x20] sm:$0xff]
        %v597 = vld [vmem:[%s593 + $0x30] sm:$0xff]
        %v598 = vld [vmem:[%s593 + $0x40] sm:$0xff]
        %v599 = vld [vmem:[%s593 + $0x50] sm:$0xff]
        %v600 = vld [vmem:[%s593 + $0x60] sm:$0xff]
        %v601 = vld [vmem:[%s593 + $0x70] sm:$0xff]
        %vm602 = vcmask 24576
        %603 = vst.msk [vmem:[#allocation2] sm:$0x1] %vm602, 0.0
        %604 = vst.msk [vmem:[#allocation2 + $0x8] sm:$0x1] %vm602, 0.0
        %605 = vst.msk [vmem:[#allocation2 + $0x10] sm:$0x1] %vm602, 0.0
        %606 = vst.msk [vmem:[#allocation2 + $0x18] sm:$0x1] %vm602, 0.0
        %607 = vst.msk [vmem:[#allocation2 + $0x20] sm:$0x1] %vm602, 0.0
        %608 = vst.msk [vmem:[#allocation2 + $0x28] sm:$0x1] %vm602, 0.0
        %609 = vst.msk [vmem:[#allocation2 + $0x30] sm:$0x1] %vm602, 0.0
        %610 = vst.msk [vmem:[#allocation2 + $0x38] sm:$0x1] %vm602, 0.0
        %611 = vst.msk [vmem:[#allocation2 + $0x40] sm:$0x1] %vm602, 0.0
        %612 = vst.msk [vmem:[#allocation2 + $0x48] sm:$0x1] %vm602, 0.0
        %613 = vst.msk [vmem:[#allocation2 + $0x50] sm:$0x1] %vm602, 0.0
        %614 = vst.msk [vmem:[#allocation2 + $0x58] sm:$0x1] %vm602, 0.0
        %615 = vst.msk [vmem:[#allocation2 + $0x60] sm:$0x1] %vm602, 0.0
        %616 = vst.msk [vmem:[#allocation2 + $0x68] sm:$0x1] %vm602, 0.0
        %617 = vst.msk [vmem:[#allocation2 + $0x70] sm:$0x1] %vm602, 0.0
        %618 = vst.msk [vmem:[#allocation2 + $0x78] sm:$0x1] %vm602, 0.0
        %619 = vst.msk [vmem:[#allocation2 + $0x80] sm:$0x1] %vm602, 0.0
        %620 = vst.msk [vmem:[#allocation2 + $0x88] sm:$0x1] %vm602, 0.0
        %621 = vst.msk [vmem:[#allocation2 + $0x90] sm:$0x1] %vm602, 0.0
        %622 = vst.msk [vmem:[#allocation2 + $0x98] sm:$0x1] %vm602, 0.0
        %623 = vst.msk [vmem:[#allocation2 + $0xa0] sm:$0x1] %vm602, 0.0
        %624 = vst.msk [vmem:[#allocation2 + $0xa8] sm:$0x1] %vm602, 0.0
        %625 = vst.msk [vmem:[#allocation2 + $0xb0] sm:$0x1] %vm602, 0.0
        %626 = vst.msk [vmem:[#allocation2 + $0xb8] sm:$0x1] %vm602, 0.0
        %627 = vst.msk [vmem:[#allocation2 + $0xc0] sm:$0x1] %vm602, 0.0
        %628 = vst.msk [vmem:[#allocation2 + $0xc8] sm:$0x1] %vm602, 0.0
        %629 = vst.msk [vmem:[#allocation2 + $0xd0] sm:$0x1] %vm602, 0.0
        %630 = vst.msk [vmem:[#allocation2 + $0xd8] sm:$0x1] %vm602, 0.0
        %631 = vst.msk [vmem:[#allocation2 + $0xe0] sm:$0x1] %vm602, 0.0
        %632 = vst.msk [vmem:[#allocation2 + $0xe8] sm:$0x1] %vm602, 0.0
        %633 = vst.msk [vmem:[#allocation2 + $0xf0] sm:$0x1] %vm602, 0.0
        %634 = vst.msk [vmem:[#allocation2 + $0xf8] sm:$0x1] %vm602, 0.0
        %vm635 = vcmask 30720
        %636 = vst.msk [vmem:[#allocation2 + $0x1] sm:$0x7f] %vm635, %v594
        %637 = vst.msk [vmem:[#allocation2 + $0x21] sm:$0x7f] %vm635, %v595
        %638 = vst.msk [vmem:[#allocation2 + $0x41] sm:$0x7f] %vm635, %v596
        %639 = vst.msk [vmem:[#allocation2 + $0x61] sm:$0x7f] %vm635, %v597
        %640 = vst.msk [vmem:[#allocation2 + $0x81] sm:$0x7f] %vm635, %v598
        %641 = vst.msk [vmem:[#allocation2 + $0xa1] sm:$0x7f] %vm635, %v599
        %642 = vst.msk [vmem:[#allocation2 + $0xc1] sm:$0x7f] %vm635, %v600
        %643 = vst.msk [vmem:[#allocation2 + $0xe1] sm:$0x7f] %vm635, %v601
        %s644 = scalar_lea.vmem [#allocation2], 8
        %645 = vst.msk [vmem:[%s644 + $0x1] sm:$0x7f] %vm635, %v553
        %646 = vst.msk [vmem:[%s644 + $0x9] sm:$0x7f] %vm635, %v554
        %647 = vst.msk [vmem:[%s644 + $0x11] sm:$0x7f] %vm635, %v555
        %648 = vst.msk [vmem:[%s644 + $0x21] sm:$0x7f] %vm635, %v557
        %649 = vst.msk [vmem:[%s644 + $0x29] sm:$0x7f] %vm635, %v558
        %650 = vst.msk [vmem:[%s644 + $0x31] sm:$0x7f] %vm635, %v559
        %651 = vst.msk [vmem:[%s644 + $0x41] sm:$0x7f] %vm635, %v561
        %652 = vst.msk [vmem:[%s644 + $0x49] sm:$0x7f] %vm635, %v562
        %653 = vst.msk [vmem:[%s644 + $0x51] sm:$0x7f] %vm635, %v563
        %654 = vst.msk [vmem:[%s644 + $0x61] sm:$0x7f] %vm635, %v565
        %655 = vst.msk [vmem:[%s644 + $0x69] sm:$0x7f] %vm635, %v566
        %656 = vst.msk [vmem:[%s644 + $0x71] sm:$0x7f] %vm635, %v567
        %657 = vst.msk [vmem:[%s644 + $0x81] sm:$0x7f] %vm635, %v569
        %658 = vst.msk [vmem:[%s644 + $0x89] sm:$0x7f] %vm635, %v570
        %659 = vst.msk [vmem:[%s644 + $0x91] sm:$0x7f] %vm635, %v571
        %660 = vst.msk [vmem:[%s644 + $0xa1] sm:$0x7f] %vm635, %v573
        %661 = vst.msk [vmem:[%s644 + $0xa9] sm:$0x7f] %vm635, %v574
        %662 = vst.msk [vmem:[%s644 + $0xb1] sm:$0x7f] %vm635, %v575
        %663 = vst.msk [vmem:[%s644 + $0xc1] sm:$0x7f] %vm635, %v577
        %664 = vst.msk [vmem:[%s644 + $0xc9] sm:$0x7f] %vm635, %v578
        %665 = vst.msk [vmem:[%s644 + $0xd1] sm:$0x7f] %vm635, %v579
        %666 = vst.msk [vmem:[%s644 + $0xe1] sm:$0x7f] %vm635, %v581
        %667 = vst.msk [vmem:[%s644 + $0xe9] sm:$0x7f] %vm635, %v582
        %668 = vst.msk [vmem:[%s644 + $0xf1] sm:$0x7f] %vm635, %v583
        %677 = vrot.lane.b32.xlu0 %v585, 4
        %v678 = vpop.permute.xlu0 %677
        %679 = vrot.lane.b32.xlu0 %v586, 4
        %v680 = vpop.permute.xlu0 %679
        %681 = vrot.lane.b32.xlu0 %v587, 4
        %v682 = vpop.permute.xlu0 %681
        %683 = vrot.lane.b32.xlu0 %v588, 4
        %v684 = vpop.permute.xlu0 %683
        %685 = vrot.lane.b32.xlu0 %v589, 4
        %v686 = vpop.permute.xlu0 %685
        %687 = vrot.lane.b32.xlu0 %v590, 4
        %v688 = vpop.permute.xlu0 %687
        %689 = vrot.lane.b32.xlu0 %v591, 4
        %v690 = vpop.permute.xlu0 %689
        %691 = vrot.lane.b32.xlu0 %v592, 4
        %v692 = vpop.permute.xlu0 %691
        %vm701 = vcmask 64544
        %702 = vst.msk [vmem:[#allocation2] sm:$0xff] %vm701, %v678
        %703 = vst.msk [vmem:[#allocation2 + $0x20] sm:$0xff] %vm701, %v680
        %704 = vst.msk [vmem:[#allocation2 + $0x40] sm:$0xff] %vm701, %v682
        %705 = vst.msk [vmem:[#allocation2 + $0x60] sm:$0xff] %vm701, %v684
        %706 = vst.msk [vmem:[#allocation2 + $0x80] sm:$0xff] %vm701, %v686
        %707 = vst.msk [vmem:[#allocation2 + $0xa0] sm:$0xff] %vm701, %v688
        %708 = vst.msk [vmem:[#allocation2 + $0xc0] sm:$0xff] %vm701, %v690
        %709 = vst.msk [vmem:[#allocation2 + $0xe0] sm:$0xff] %vm701, %v692
        %718 = vrot.lane.b32.xlu0 %v594, 8
        %v719 = vpop.permute.xlu0 %718
        %720 = vrot.lane.b32.xlu0 %v595, 8
        %v721 = vpop.permute.xlu0 %720
        %722 = vrot.lane.b32.xlu0 %v596, 8
        %v723 = vpop.permute.xlu0 %722
        %724 = vrot.lane.b32.xlu0 %v597, 8
        %v725 = vpop.permute.xlu0 %724
        %726 = vrot.lane.b32.xlu0 %v598, 8
        %v727 = vpop.permute.xlu0 %726
        %728 = vrot.lane.b32.xlu0 %v599, 8
        %v729 = vpop.permute.xlu0 %728
        %730 = vrot.lane.b32.xlu0 %v600, 8
        %v731 = vpop.permute.xlu0 %730
        %732 = vrot.lane.b32.xlu0 %v601, 8
        %v733 = vpop.permute.xlu0 %732
        %vm742 = vcmask 97344
        %743 = vst.msk [vmem:[#allocation2] sm:$0xff] %vm742, %v719
        %744 = vst.msk [vmem:[#allocation2 + $0x20] sm:$0xff] %vm742, %v721
        %745 = vst.msk [vmem:[#allocation2 + $0x40] sm:$0xff] %vm742, %v723
        %746 = vst.msk [vmem:[#allocation2 + $0x60] sm:$0xff] %vm742, %v725
        %747 = vst.msk [vmem:[#allocation2 + $0x80] sm:$0xff] %vm742, %v727
        %748 = vst.msk [vmem:[#allocation2 + $0xa0] sm:$0xff] %vm742, %v729
        %749 = vst.msk [vmem:[#allocation2 + $0xc0] sm:$0xff] %vm742, %v731
        %750 = vst.msk [vmem:[#allocation2 + $0xe0] sm:$0xff] %vm742, %v733
        %775 = vrot.lane.b32.xlu0 %v520, 4
        %v776 = vpop.permute.xlu0 %775
        %777 = vrot.lane.b32.xlu0 %v521, 4
        %v778 = vpop.permute.xlu0 %777
        %779 = vrot.lane.b32.xlu0 %v522, 4
        %v780 = vpop.permute.xlu0 %779
        %781 = vrot.lane.b32.xlu0 %v524, 4
        %v782 = vpop.permute.xlu0 %781
        %783 = vrot.lane.b32.xlu0 %v525, 4
        %v784 = vpop.permute.xlu0 %783
        %785 = vrot.lane.b32.xlu0 %v526, 4
        %v786 = vpop.permute.xlu0 %785
        %787 = vrot.lane.b32.xlu0 %v528, 4
        %v788 = vpop.permute.xlu0 %787
        %789 = vrot.lane.b32.xlu0 %v529, 4
        %v790 = vpop.permute.xlu0 %789
        %791 = vrot.lane.b32.xlu0 %v530, 4
        %v792 = vpop.permute.xlu0 %791
        %793 = vrot.lane.b32.xlu0 %v532, 4
        %v794 = vpop.permute.xlu0 %793
        %795 = vrot.lane.b32.xlu0 %v533, 4
        %v796 = vpop.permute.xlu0 %795
        %797 = vrot.lane.b32.xlu0 %v534, 4
        %v798 = vpop.permute.xlu0 %797
        %799 = vrot.lane.b32.xlu0 %v536, 4
        %v800 = vpop.permute.xlu0 %799
        %801 = vrot.lane.b32.xlu0 %v537, 4
        %v802 = vpop.permute.xlu0 %801
        %803 = vrot.lane.b32.xlu0 %v538, 4
        %v804 = vpop.permute.xlu0 %803
        %805 = vrot.lane.b32.xlu0 %v540, 4
        %v806 = vpop.permute.xlu0 %805
        %807 = vrot.lane.b32.xlu0 %v541, 4
        %v808 = vpop.permute.xlu0 %807
        %809 = vrot.lane.b32.xlu0 %v542, 4
        %v810 = vpop.permute.xlu0 %809
        %811 = vrot.lane.b32.xlu0 %v544, 4
        %v812 = vpop.permute.xlu0 %811
        %813 = vrot.lane.b32.xlu0 %v545, 4
        %v814 = vpop.permute.xlu0 %813
        %815 = vrot.lane.b32.xlu0 %v546, 4
        %v816 = vpop.permute.xlu0 %815
        %817 = vrot.lane.b32.xlu0 %v548, 4
        %v818 = vpop.permute.xlu0 %817
        %819 = vrot.lane.b32.xlu0 %v549, 4
        %v820 = vpop.permute.xlu0 %819
        %821 = vrot.lane.b32.xlu0 %v550, 4
        %v822 = vpop.permute.xlu0 %821
        %847 = vst.msk [vmem:[%s644] sm:$0xff] %vm701, %v776
        %848 = vst.msk [vmem:[%s644 + $0x8] sm:$0xff] %vm701, %v778
        %849 = vst.msk [vmem:[%s644 + $0x10] sm:$0xff] %vm701, %v780
        %850 = vst.msk [vmem:[%s644 + $0x20] sm:$0xff] %vm701, %v782
        %851 = vst.msk [vmem:[%s644 + $0x28] sm:$0xff] %vm701, %v784
        %852 = vst.msk [vmem:[%s644 + $0x30] sm:$0xff] %vm701, %v786
        %853 = vst.msk [vmem:[%s644 + $0x40] sm:$0xff] %vm701, %v788
        %854 = vst.msk [vmem:[%s644 + $0x48] sm:$0xff] %vm701, %v790
        %855 = vst.msk [vmem:[%s644 + $0x50] sm:$0xff] %vm701, %v792
        %856 = vst.msk [vmem:[%s644 + $0x60] sm:$0xff] %vm701, %v794
        %857 = vst.msk [vmem:[%s644 + $0x68] sm:$0xff] %vm701, %v796
        %858 = vst.msk [vmem:[%s644 + $0x70] sm:$0xff] %vm701, %v798
        %859 = vst.msk [vmem:[%s644 + $0x80] sm:$0xff] %vm701, %v800
        %860 = vst.msk [vmem:[%s644 + $0x88] sm:$0xff] %vm701, %v802
        %861 = vst.msk [vmem:[%s644 + $0x90] sm:$0xff] %vm701, %v804
        %862 = vst.msk [vmem:[%s644 + $0xa0] sm:$0xff] %vm701, %v806
        %863 = vst.msk [vmem:[%s644 + $0xa8] sm:$0xff] %vm701, %v808
        %864 = vst.msk [vmem:[%s644 + $0xb0] sm:$0xff] %vm701, %v810
        %865 = vst.msk [vmem:[%s644 + $0xc0] sm:$0xff] %vm701, %v812
        %866 = vst.msk [vmem:[%s644 + $0xc8] sm:$0xff] %vm701, %v814
        %867 = vst.msk [vmem:[%s644 + $0xd0] sm:$0xff] %vm701, %v816
        %868 = vst.msk [vmem:[%s644 + $0xe0] sm:$0xff] %vm701, %v818
        %869 = vst.msk [vmem:[%s644 + $0xe8] sm:$0xff] %vm701, %v820
        %870 = vst.msk [vmem:[%s644 + $0xf0] sm:$0xff] %vm701, %v822
        %895 = vrot.lane.b32.xlu0 %v553, 8
        %v896 = vpop.permute.xlu0 %895
        %897 = vrot.lane.b32.xlu0 %v554, 8
        %v898 = vpop.permute.xlu0 %897
        %899 = vrot.lane.b32.xlu0 %v555, 8
        %v900 = vpop.permute.xlu0 %899
        %901 = vrot.lane.b32.xlu0 %v557, 8
        %v902 = vpop.permute.xlu0 %901
        %903 = vrot.lane.b32.xlu0 %v558, 8
        %v904 = vpop.permute.xlu0 %903
        %905 = vrot.lane.b32.xlu0 %v559, 8
        %v906 = vpop.permute.xlu0 %905
        %907 = vrot.lane.b32.xlu0 %v561, 8
        %v908 = vpop.permute.xlu0 %907
        %909 = vrot.lane.b32.xlu0 %v562, 8
        %v910 = vpop.permute.xlu0 %909
        %911 = vrot.lane.b32.xlu0 %v563, 8
        %v912 = vpop.permute.xlu0 %911
        %913 = vrot.lane.b32.xlu0 %v565, 8
        %v914 = vpop.permute.xlu0 %913
        %915 = vrot.lane.b32.xlu0 %v566, 8
        %v916 = vpop.permute.xlu0 %915
        %917 = vrot.lane.b32.xlu0 %v567, 8
        %v918 = vpop.permute.xlu0 %917
        %919 = vrot.lane.b32.xlu0 %v569, 8
        %v920 = vpop.permute.xlu0 %919
        %921 = vrot.lane.b32.xlu0 %v570, 8
        %v922 = vpop.permute.xlu0 %921
        %923 = vrot.lane.b32.xlu0 %v571, 8
        %v924 = vpop.permute.xlu0 %923
        %925 = vrot.lane.b32.xlu0 %v573, 8
        %v926 = vpop.permute.xlu0 %925
        %927 = vrot.lane.b32.xlu0 %v574, 8
        %v928 = vpop.permute.xlu0 %927
        %929 = vrot.lane.b32.xlu0 %v575, 8
        %v930 = vpop.permute.xlu0 %929
        %931 = vrot.lane.b32.xlu0 %v577, 8
        %v932 = vpop.permute.xlu0 %931
        %933 = vrot.lane.b32.xlu0 %v578, 8
        %v934 = vpop.permute.xlu0 %933
        %935 = vrot.lane.b32.xlu0 %v579, 8
        %v936 = vpop.permute.xlu0 %935
        %937 = vrot.lane.b32.xlu0 %v581, 8
        %v938 = vpop.permute.xlu0 %937
        %939 = vrot.lane.b32.xlu0 %v582, 8
        %v940 = vpop.permute.xlu0 %939
        %941 = vrot.lane.b32.xlu0 %v583, 8
        %v942 = vpop.permute.xlu0 %941
        %967 = vst.msk [vmem:[%s644] sm:$0xff] %vm742, %v896
        %968 = vst.msk [vmem:[%s644 + $0x8] sm:$0xff] %vm742, %v898
        %969 = vst.msk [vmem:[%s644 + $0x10] sm:$0xff] %vm742, %v900
        %970 = vst.msk [vmem:[%s644 + $0x20] sm:$0xff] %vm742, %v902
        %971 = vst.msk [vmem:[%s644 + $0x28] sm:$0xff] %vm742, %v904
        %972 = vst.msk [vmem:[%s644 + $0x30] sm:$0xff] %vm742, %v906
        %973 = vst.msk [vmem:[%s644 + $0x40] sm:$0xff] %vm742, %v908
        %974 = vst.msk [vmem:[%s644 + $0x48] sm:$0xff] %vm742, %v910
        %975 = vst.msk [vmem:[%s644 + $0x50] sm:$0xff] %vm742, %v912
        %976 = vst.msk [vmem:[%s644 + $0x60] sm:$0xff] %vm742, %v914
        %977 = vst.msk [vmem:[%s644 + $0x68] sm:$0xff] %vm742, %v916
        %978 = vst.msk [vmem:[%s644 + $0x70] sm:$0xff] %vm742, %v918
        %979 = vst.msk [vmem:[%s644 + $0x80] sm:$0xff] %vm742, %v920
        %980 = vst.msk [vmem:[%s644 + $0x88] sm:$0xff] %vm742, %v922
        %981 = vst.msk [vmem:[%s644 + $0x90] sm:$0xff] %vm742, %v924
        %982 = vst.msk [vmem:[%s644 + $0xa0] sm:$0xff] %vm742, %v926
        %983 = vst.msk [vmem:[%s644 + $0xa8] sm:$0xff] %vm742, %v928
        %984 = vst.msk [vmem:[%s644 + $0xb0] sm:$0xff] %vm742, %v930
        %985 = vst.msk [vmem:[%s644 + $0xc0] sm:$0xff] %vm742, %v932
        %986 = vst.msk [vmem:[%s644 + $0xc8] sm:$0xff] %vm742, %v934
        %987 = vst.msk [vmem:[%s644 + $0xd0] sm:$0xff] %vm742, %v936
        %988 = vst.msk [vmem:[%s644 + $0xe0] sm:$0xff] %vm742, %v938
        %989 = vst.msk [vmem:[%s644 + $0xe8] sm:$0xff] %vm742, %v940
        %990 = vst.msk [vmem:[%s644 + $0xf0] sm:$0xff] %vm742, %v942
        %p991 = scmp.eq.s32.totalorder %s33, 0
        // Predicated region
        $region69: #{downsample3d.1} parent=43 // pred_check
          %p992 = pneg %p991
        $region70: #{downsample3d.1} parent=43 // pred_check_branch
          %994 = sbr.rel (%p992) target = $region72
        $region71: #{downsample3d.1} parent=43 // pred_region
          %vm995 = vcmask 97280
          %996 = vst.msk [vmem:[#allocation2] sm:$0xff] %vm995, 0.0
          %997 = vst.msk [vmem:[#allocation2 + $0x20] sm:$0xff] %vm995, 0.0
          %998 = vst.msk [vmem:[#allocation2 + $0x40] sm:$0xff] %vm995, 0.0
          %999 = vst.msk [vmem:[#allocation2 + $0x60] sm:$0xff] %vm995, 0.0
          %1000 = vst.msk [vmem:[#allocation2 + $0x80] sm:$0xff] %vm995, 0.0
          %1001 = vst.msk [vmem:[#allocation2 + $0xa0] sm:$0xff] %vm995, 0.0
          %1002 = vst.msk [vmem:[#allocation2 + $0xc0] sm:$0xff] %vm995, 0.0
          %1003 = vst.msk [vmem:[#allocation2 + $0xe0] sm:$0xff] %vm995, 0.0
        $region72: #{downsample3d.1} parent=43 // pred_fallthru
          _
        %v1004 = vld [vmem:[#allocation2] sm:$0xff]
        %v1005 = vld [vmem:[#allocation2 + $0x8] sm:$0xff]
        %v1006 = vld [vmem:[#allocation2 + $0x10] sm:$0xff]
        %v1007 = vld [vmem:[#allocation2 + $0x18] sm:$0xff]
        %v1008 = vld [vmem:[#allocation2 + $0x20] sm:$0xff]
        %v1009 = vld [vmem:[#allocation2 + $0x28] sm:$0xff]
        %v1010 = vld [vmem:[#allocation2 + $0x30] sm:$0xff]
        %v1011 = vld [vmem:[#allocation2 + $0x38] sm:$0xff]
        %v1012 = vld [vmem:[#allocation2 + $0x40] sm:$0xff]
        %v1013 = vld [vmem:[#allocation2 + $0x48] sm:$0xff]
        %v1014 = vld [vmem:[#allocation2 + $0x50] sm:$0xff]
        %v1015 = vld [vmem:[#allocation2 + $0x58] sm:$0xff]
        %v1016 = vld [vmem:[#allocation2 + $0x60] sm:$0xff]
        %v1017 = vld [vmem:[#allocation2 + $0x68] sm:$0xff]
        %v1018 = vld [vmem:[#allocation2 + $0x70] sm:$0xff]
        %v1019 = vld [vmem:[#allocation2 + $0x78] sm:$0xff]
        %v1020 = vld [vmem:[#allocation2 + $0x80] sm:$0xff]
        %v1021 = vld [vmem:[#allocation2 + $0x88] sm:$0xff]
        %v1022 = vld [vmem:[#allocation2 + $0x90] sm:$0xff]
        %v1023 = vld [vmem:[#allocation2 + $0x98] sm:$0xff]
        %v1024 = vld [vmem:[#allocation2 + $0xa0] sm:$0xff]
        %v1025 = vld [vmem:[#allocation2 + $0xa8] sm:$0xff]
        %v1026 = vld [vmem:[#allocation2 + $0xb0] sm:$0xff]
        %v1027 = vld [vmem:[#allocation2 + $0xb8] sm:$0xff]
        %v1028 = vld [vmem:[#allocation2 + $0xc0] sm:$0xff]
        %v1029 = vld [vmem:[#allocation2 + $0xc8] sm:$0xff]
        %v1030 = vld [vmem:[#allocation2 + $0xd0] sm:$0xff]
        %v1031 = vld [vmem:[#allocation2 + $0xd8] sm:$0xff]
        %v1032 = vld [vmem:[#allocation2 + $0xe0] sm:$0xff]
        %v1033 = vld [vmem:[#allocation2 + $0xe8] sm:$0xff]
        %v1034 = vld [vmem:[#allocation2 + $0xf0] sm:$0xff]
        %v1035 = vld [vmem:[#allocation2 + $0xf8] sm:$0xff]
        %v1036 = vld [vmem:[#allocation10] sm:$0xff]
        %v1037 = vld [vmem:[#allocation10 + $0x8] sm:$0xf]
        %vm1038 = vcmask 97280
        %v1040 = vsel %vm1038, %v1004, 0
        %v1043 = vsel %vm1038, %v1005, 0
        %v1046 = vsel %vm1038, %v1006, 0
        %v1049 = vsel %vm1038, %v1007, 0
        %v1052 = vsel %vm1038, %v1008, 0
        %v1055 = vsel %vm1038, %v1009, 0
        %v1058 = vsel %vm1038, %v1010, 0
        %v1061 = vsel %vm1038, %v1011, 0
        %v1064 = vsel %vm1038, %v1012, 0
        %v1067 = vsel %vm1038, %v1013, 0
        %v1070 = vsel %vm1038, %v1014, 0
        %v1073 = vsel %vm1038, %v1015, 0
        %v1076 = vsel %vm1038, %v1016, 0
        %v1079 = vsel %vm1038, %v1017, 0
        %v1082 = vsel %vm1038, %v1018, 0
        %v1085 = vsel %vm1038, %v1019, 0
        %v1088 = vsel %vm1038, %v1020, 0
        %v1091 = vsel %vm1038, %v1021, 0
        %v1094 = vsel %vm1038, %v1022, 0
        %v1097 = vsel %vm1038, %v1023, 0
        %v1100 = vsel %vm1038, %v1024, 0
        %v1103 = vsel %vm1038, %v1025, 0
        %v1106 = vsel %vm1038, %v1026, 0
        %v1109 = vsel %vm1038, %v1027, 0
        %v1112 = vsel %vm1038, %v1028, 0
        %v1115 = vsel %vm1038, %v1029, 0
        %v1118 = vsel %vm1038, %v1030, 0
        %v1121 = vsel %vm1038, %v1031, 0
        %v1124 = vsel %vm1038, %v1032, 0
        %v1127 = vsel %vm1038, %v1033, 0
        %v1130 = vsel %vm1038, %v1034, 0
        %v1133 = vsel %vm1038, %v1035, 0
        %vm1135 = vcmask 1043456
        %v1137 = vsel %vm1135, %v1037, 0
        %1139 = vmatprep.subr.mxu0 0.0
        %1140 = vmatpush1.msra.mxu0 %v1036
        %1141 = vmatprep.subr.mxu0 0.0
        %1142 = vmatpush1.msra.mxu0 %v1137
        %1143 = vmatprep.subr.mxu0 0.0
        %1144 = vmatpush1.msra.mxu0 0.0
        %1145 = vmatprep.subr.mxu0 0.0
        %1146 = vmatpush1.msra.mxu0 0.0
        %1147 = vmatprep.subr.mxu0 0.0
        %1148 = vmatpush1.msra.mxu0 0.0
        %1149 = vmatprep.subr.mxu0 0.0
        %1150 = vmatpush1.msra.mxu0 0.0
        %1151 = vmatprep.subr.mxu0 0.0
        %1152 = vmatpush1.msra.mxu0 0.0
        %1153 = vmatprep.subr.mxu0 0.0
        %1154 = vmatpush1.msra.mxu0 0.0
        %1155 = vmatprep.subr.mxu0 0.0
        %1156 = vmatpush1.msra.mxu0 0.0
        %1157 = vmatprep.subr.mxu0 0.0
        %1158 = vmatpush1.msra.mxu0 0.0
        %1159 = vmatprep.subr.mxu0 0.0
        %1160 = vmatpush1.msra.mxu0 0.0
        %1161 = vmatprep.subr.mxu0 0.0
        %1162 = vmatpush1.msra.mxu0 0.0
        %1163 = vmatprep.subr.mxu0 0.0
        %1164 = vmatpush1.msra.mxu0 0.0
        %1165 = vmatprep.subr.mxu0 0.0
        %1166 = vmatpush1.msra.mxu0 0.0
        %1167 = vmatprep.subr.mxu0 0.0
        %1168 = vmatpush1.msra.mxu0 0.0
        %1169 = vmatprep.subr.mxu0 0.0
        %1170 = vmatpush1.msra.mxu0 0.0
        %1171 = vmatprep.subr.mxu0 0.0
        %1172 = vmatpush1.msra.mxu0 0.0
        %1173 = vmatprep.subr.mxu0 0.0
        %1174 = vmatpush1.msra.mxu0 0.0
        %1175 = vmatprep.subr.mxu0 0.0
        %1176 = vmatpush1.msra.mxu0 0.0
        %1177 = vmatprep.subr.mxu0 0.0
        %1178 = vmatpush1.msra.mxu0 0.0
        %1179 = vmatprep.subr.mxu0 0.0
        %1180 = vmatpush1.msra.mxu0 0.0
        %1181 = vmatprep.subr.mxu0 0.0
        %1182 = vmatpush1.msra.mxu0 0.0
        %1183 = vmatprep.subr.mxu0 0.0
        %1184 = vmatpush1.msra.mxu0 0.0
        %1185 = vmatprep.subr.mxu0 0.0
        %1186 = vmatpush1.msra.mxu0 0.0
        %1187 = vmatprep.subr.mxu0 0.0
        %1188 = vmatpush1.msra.mxu0 0.0
        %1189 = vmatprep.subr.mxu0 0.0
        %1190 = vmatpush1.msra.mxu0 0.0
        %1191 = vmatprep.subr.mxu0 0.0
        %1192 = vmatpush1.msra.mxu0 0.0
        %1193 = vmatprep.subr.mxu0 0.0
        %1194 = vmatpush1.msra.mxu0 0.0
        %1195 = vmatprep.subr.mxu0 0.0
        %1196 = vmatpush1.msra.mxu0 0.0
        %1197 = vmatprep.subr.mxu0 0.0
        %1198 = vmatpush1.msra.mxu0 0.0
        %1199 = vmatprep.subr.mxu0 0.0
        %1200 = vmatpush1.msra.mxu0 0.0
        %1201 = vmatprep.subr.mxu0 0.0
        %1202 = vmatpush1.msra.mxu0 0.0
        %1203 = vmatprep.mubr.f32.mxu0 0.0
        %1204 = vmatmul.mubr.f32.gmra.mrb[0].mxu0 %v1040
        %v1205 = vpop.f32.mrb[0].mxu0
        %v1206 = vadd.f32 0.0, %v1205
        %v1207 = vpop.f32.mrb[0].mxu0
        %1208 = vmatprep.mubr.f32.mxu0 0.0
        %1209 = vmatmul.mubr.f32.gmra.mrb[0].mxu0 %v1043
        %v1210 = vpop.f32.mrb[0].mxu0
        %v1211 = vadd.f32 0.0, %v1210
        %v1212 = vpop.f32.mrb[0].mxu0
        %1213 = vmatprep.mubr.f32.mxu0 0.0
        %1214 = vmatmul.mubr.f32.gmra.mrb[0].mxu0 %v1046
        %v1215 = vpop.f32.mrb[0].mxu0
        %v1216 = vadd.f32 0.0, %v1215
        %v1217 = vpop.f32.mrb[0].mxu0
        %1218 = vmatprep.mubr.f32.mxu0 0.0
        %1219 = vmatmul.mubr.f32.gmra.mrb[0].mxu0 %v1049
        %v1220 = vpop.f32.mrb[0].mxu0
        %v1221 = vadd.f32 0.0, %v1220
        %v1222 = vpop.f32.mrb[0].mxu0
        %1223 = vmatprep.mubr.f32.mxu0 0.0
        %1224 = vmatmul.mubr.f32.gmra.mrb[0].mxu0 %v1052
        %v1225 = vpop.f32.mrb[0].mxu0
        %v1226 = vadd.f32 0.0, %v1225
        %v1227 = vpop.f32.mrb[0].mxu0
        %1228 = vmatprep.mubr.f32.mxu0 0.0
        %1229 = vmatmul.mubr.f32.gmra.mrb[0].mxu0 %v1055
        %v1230 = vpop.f32.mrb[0].mxu0
        %v1231 = vadd.f32 0.0, %v1230
        %v1232 = vpop.f32.mrb[0].mxu0
        %1233 = vmatprep.mubr.f32.mxu0 0.0
        %1234 = vmatmul.mubr.f32.gmra.mrb[0].mxu0 %v1058
        %v1235 = vpop.f32.mrb[0].mxu0
        %v1236 = vadd.f32 0.0, %v1235
        %v1237 = vpop.f32.mrb[0].mxu0
        %1238 = vmatprep.mubr.f32.mxu0 0.0
        %1239 = vmatmul.mubr.f32.gmra.mrb[0].mxu0 %v1061
        %v1240 = vpop.f32.mrb[0].mxu0
        %v1241 = vadd.f32 0.0, %v1240
        %v1242 = vpop.f32.mrb[0].mxu0
        %1243 = vmatprep.mubr.f32.mxu0 0.0
        %1244 = vmatmul.mubr.f32.gmra.mrb[0].mxu0 %v1064
        %v1245 = vpop.f32.mrb[0].mxu0
        %v1246 = vadd.f32 0.0, %v1245
        %v1247 = vpop.f32.mrb[0].mxu0
        %1248 = vmatprep.mubr.f32.mxu0 0.0
        %1249 = vmatmul.mubr.f32.gmra.mrb[0].mxu0 %v1067
        %v1250 = vpop.f32.mrb[0].mxu0
        %v1251 = vadd.f32 0.0, %v1250
        %v1252 = vpop.f32.mrb[0].mxu0
        %1253 = vmatprep.mubr.f32.mxu0 0.0
        %1254 = vmatmul.mubr.f32.gmra.mrb[0].mxu0 %v1070
        %v1255 = vpop.f32.mrb[0].mxu0
        %v1256 = vadd.f32 0.0, %v1255
        %v1257 = vpop.f32.mrb[0].mxu0
        %1258 = vmatprep.mubr.f32.mxu0 0.0
        %1259 = vmatmul.mubr.f32.gmra.mrb[0].mxu0 %v1073
        %v1260 = vpop.f32.mrb[0].mxu0
        %v1261 = vadd.f32 0.0, %v1260
        %v1262 = vpop.f32.mrb[0].mxu0
        %1263 = vmatprep.mubr.f32.mxu0 0.0
        %1264 = vmatmul.mubr.f32.gmra.mrb[0].mxu0 %v1076
        %v1265 = vpop.f32.mrb[0].mxu0
        %v1266 = vadd.f32 0.0, %v1265
        %v1267 = vpop.f32.mrb[0].mxu0
        %1268 = vmatprep.mubr.f32.mxu0 0.0
        %1269 = vmatmul.mubr.f32.gmra.mrb[0].mxu0 %v1079
        %v1270 = vpop.f32.mrb[0].mxu0
        %v1271 = vadd.f32 0.0, %v1270
        %v1272 = vpop.f32.mrb[0].mxu0
        %1273 = vmatprep.mubr.f32.mxu0 0.0
        %1274 = vmatmul.mubr.f32.gmra.mrb[0].mxu0 %v1082
        %v1275 = vpop.f32.mrb[0].mxu0
        %v1276 = vadd.f32 0.0, %v1275
        %v1277 = vpop.f32.mrb[0].mxu0
        %1278 = vmatprep.mubr.f32.mxu0 0.0
        %1279 = vmatmul.mubr.f32.gmra.mrb[0].mxu0 %v1085
        %v1280 = vpop.f32.mrb[0].mxu0
        %v1281 = vadd.f32 0.0, %v1280
        %v1282 = vpop.f32.mrb[0].mxu0
        %1283 = vmatprep.mubr.f32.mxu0 0.0
        %1284 = vmatmul.mubr.f32.gmra.mrb[0].mxu0 %v1088
        %v1285 = vpop.f32.mrb[0].mxu0
        %v1286 = vadd.f32 0.0, %v1285
        %v1287 = vpop.f32.mrb[0].mxu0
        %1288 = vmatprep.mubr.f32.mxu0 0.0
        %1289 = vmatmul.mubr.f32.gmra.mrb[0].mxu0 %v1091
        %v1290 = vpop.f32.mrb[0].mxu0
        %v1291 = vadd.f32 0.0, %v1290
        %v1292 = vpop.f32.mrb[0].mxu0
        %1293 = vmatprep.mubr.f32.mxu0 0.0
        %1294 = vmatmul.mubr.f32.gmra.mrb[0].mxu0 %v1094
        %v1295 = vpop.f32.mrb[0].mxu0
        %v1296 = vadd.f32 0.0, %v1295
        %v1297 = vpop.f32.mrb[0].mxu0
        %1298 = vmatprep.mubr.f32.mxu0 0.0
        %1299 = vmatmul.mubr.f32.gmra.mrb[0].mxu0 %v1097
        %v1300 = vpop.f32.mrb[0].mxu0
        %v1301 = vadd.f32 0.0, %v1300
        %v1302 = vpop.f32.mrb[0].mxu0
        %1303 = vmatprep.mubr.f32.mxu0 0.0
        %1304 = vmatmul.mubr.f32.gmra.mrb[0].mxu0 %v1100
        %v1305 = vpop.f32.mrb[0].mxu0
        %v1306 = vadd.f32 0.0, %v1305
        %v1307 = vpop.f32.mrb[0].mxu0
        %1308 = vmatprep.mubr.f32.mxu0 0.0
        %1309 = vmatmul.mubr.f32.gmra.mrb[0].mxu0 %v1103
        %v1310 = vpop.f32.mrb[0].mxu0
        %v1311 = vadd.f32 0.0, %v1310
        %v1312 = vpop.f32.mrb[0].mxu0
        %1313 = vmatprep.mubr.f32.mxu0 0.0
        %1314 = vmatmul.mubr.f32.gmra.mrb[0].mxu0 %v1106
        %v1315 = vpop.f32.mrb[0].mxu0
        %v1316 = vadd.f32 0.0, %v1315
        %v1317 = vpop.f32.mrb[0].mxu0
        %1318 = vmatprep.mubr.f32.mxu0 0.0
        %1319 = vmatmul.mubr.f32.gmra.mrb[0].mxu0 %v1109
        %v1320 = vpop.f32.mrb[0].mxu0
        %v1321 = vadd.f32 0.0, %v1320
        %v1322 = vpop.f32.mrb[0].mxu0
        %1323 = vmatprep.mubr.f32.mxu0 0.0
        %1324 = vmatmul.mubr.f32.gmra.mrb[0].mxu0 %v1112
        %v1325 = vpop.f32.mrb[0].mxu0
        %v1326 = vadd.f32 0.0, %v1325
        %v1327 = vpop.f32.mrb[0].mxu0
        %1328 = vmatprep.mubr.f32.mxu0 0.0
        %1329 = vmatmul.mubr.f32.gmra.mrb[0].mxu0 %v1115
        %v1330 = vpop.f32.mrb[0].mxu0
        %v1331 = vadd.f32 0.0, %v1330
        %v1332 = vpop.f32.mrb[0].mxu0
        %1333 = vmatprep.mubr.f32.mxu0 0.0
        %1334 = vmatmul.mubr.f32.gmra.mrb[0].mxu0 %v1118
        %v1335 = vpop.f32.mrb[0].mxu0
        %v1336 = vadd.f32 0.0, %v1335
        %v1337 = vpop.f32.mrb[0].mxu0
        %1338 = vmatprep.mubr.f32.mxu0 0.0
        %1339 = vmatmul.mubr.f32.gmra.mrb[0].mxu0 %v1121
        %v1340 = vpop.f32.mrb[0].mxu0
        %v1341 = vadd.f32 0.0, %v1340
        %v1342 = vpop.f32.mrb[0].mxu0
        %1343 = vmatprep.mubr.f32.mxu0 0.0
        %1344 = vmatmul.mubr.f32.gmra.mrb[0].mxu0 %v1124
        %v1345 = vpop.f32.mrb[0].mxu0
        %v1346 = vadd.f32 0.0, %v1345
        %v1347 = vpop.f32.mrb[0].mxu0
        %1348 = vmatprep.mubr.f32.mxu0 0.0
        %1349 = vmatmul.mubr.f32.gmra.mrb[0].mxu0 %v1127
        %v1350 = vpop.f32.mrb[0].mxu0
        %v1351 = vadd.f32 0.0, %v1350
        %v1352 = vpop.f32.mrb[0].mxu0
        %1353 = vmatprep.mubr.f32.mxu0 0.0
        %1354 = vmatmul.mubr.f32.gmra.mrb[0].mxu0 %v1130
        %v1355 = vpop.f32.mrb[0].mxu0
        %v1356 = vadd.f32 0.0, %v1355
        %v1357 = vpop.f32.mrb[0].mxu0
        %1358 = vmatprep.mubr.f32.mxu0 0.0
        %1359 = vmatmul.mubr.f32.gmra.mrb[0].mxu0 %v1133
        %v1360 = vpop.f32.mrb[0].mxu0
        %v1361 = vadd.f32 0.0, %v1360
        %v1362 = vpop.f32.mrb[0].mxu0
        %1363 = vdwg.mxu0
        %v1364 = vld [vmem:[#allocation11] sm:$0x1]
        %v1366 = vlaneseq
        %v1367 = vshrl.u32 %v1366, 7
        %v1368 = vsub.s32 0, %v1367
        %v1369 = vrot.slane %v1364, %v1368
        %v1371 = vadd.f32 %v1206, %v1369
        %v1372 = vadd.f32 %v1211, %v1369
        %v1373 = vadd.f32 %v1216, %v1369
        %v1374 = vadd.f32 %v1221, %v1369
        %v1375 = vadd.f32 %v1226, %v1369
        %v1376 = vadd.f32 %v1231, %v1369
        %v1377 = vadd.f32 %v1236, %v1369
        %v1378 = vadd.f32 %v1241, %v1369
        %v1379 = vadd.f32 %v1246, %v1369
        %v1380 = vadd.f32 %v1251, %v1369
        %v1381 = vadd.f32 %v1256, %v1369
        %v1382 = vadd.f32 %v1261, %v1369
        %v1383 = vadd.f32 %v1266, %v1369
        %v1384 = vadd.f32 %v1271, %v1369
        %v1385 = vadd.f32 %v1276, %v1369
        %v1386 = vadd.f32 %v1281, %v1369
        %v1387 = vadd.f32 %v1286, %v1369
        %v1388 = vadd.f32 %v1291, %v1369
        %v1389 = vadd.f32 %v1296, %v1369
        %v1390 = vadd.f32 %v1301, %v1369
        %v1391 = vadd.f32 %v1306, %v1369
        %v1392 = vadd.f32 %v1311, %v1369
        %v1393 = vadd.f32 %v1316, %v1369
        %v1394 = vadd.f32 %v1321, %v1369
        %v1395 = vadd.f32 %v1326, %v1369
        %v1396 = vadd.f32 %v1331, %v1369
        %v1397 = vadd.f32 %v1336, %v1369
        %v1398 = vadd.f32 %v1341, %v1369
        %v1399 = vadd.f32 %v1346, %v1369
        %v1400 = vadd.f32 %v1351, %v1369
        %v1401 = vadd.f32 %v1356, %v1369
        %v1402 = vadd.f32 %v1361, %v1369
        %vm1403 = vcmask 31744
        %1404 = vst.msk [vmem:[#allocation3] sm:$0xff] %vm1403, %v1371
        %1405 = vst.msk [vmem:[#allocation3 + $0x8] sm:$0xff] %vm1403, %v1372
        %1406 = vst.msk [vmem:[#allocation3 + $0x10] sm:$0xff] %vm1403, %v1373
        %1407 = vst.msk [vmem:[#allocation3 + $0x18] sm:$0xff] %vm1403, %v1374
        %1408 = vst.msk [vmem:[#allocation3 + $0x20] sm:$0xff] %vm1403, %v1375
        %1409 = vst.msk [vmem:[#allocation3 + $0x28] sm:$0xff] %vm1403, %v1376
        %1410 = vst.msk [vmem:[#allocation3 + $0x30] sm:$0xff] %vm1403, %v1377
        %1411 = vst.msk [vmem:[#allocation3 + $0x38] sm:$0xff] %vm1403, %v1378
        %1412 = vst.msk [vmem:[#allocation3 + $0x40] sm:$0xff] %vm1403, %v1379
        %1413 = vst.msk [vmem:[#allocation3 + $0x48] sm:$0xff] %vm1403, %v1380
        %1414 = vst.msk [vmem:[#allocation3 + $0x50] sm:$0xff] %vm1403, %v1381
        %1415 = vst.msk [vmem:[#allocation3 + $0x58] sm:$0xff] %vm1403, %v1382
        %1416 = vst.msk [vmem:[#allocation3 + $0x60] sm:$0xff] %vm1403, %v1383
        %1417 = vst.msk [vmem:[#allocation3 + $0x68] sm:$0xff] %vm1403, %v1384
        %1418 = vst.msk [vmem:[#allocation3 + $0x70] sm:$0xff] %vm1403, %v1385
        %1419 = vst.msk [vmem:[#allocation3 + $0x78] sm:$0xff] %vm1403, %v1386
        %1420 = vst.msk [vmem:[#allocation3 + $0x80] sm:$0xff] %vm1403, %v1387
        %1421 = vst.msk [vmem:[#allocation3 + $0x88] sm:$0xff] %vm1403, %v1388
        %1422 = vst.msk [vmem:[#allocation3 + $0x90] sm:$0xff] %vm1403, %v1389
        %1423 = vst.msk [vmem:[#allocation3 + $0x98] sm:$0xff] %vm1403, %v1390
        %1424 = vst.msk [vmem:[#allocation3 + $0xa0] sm:$0xff] %vm1403, %v1391
        %1425 = vst.msk [vmem:[#allocation3 + $0xa8] sm:$0xff] %vm1403, %v1392
        %1426 = vst.msk [vmem:[#allocation3 + $0xb0] sm:$0xff] %vm1403, %v1393
        %1427 = vst.msk [vmem:[#allocation3 + $0xb8] sm:$0xff] %vm1403, %v1394
        %1428 = vst.msk [vmem:[#allocation3 + $0xc0] sm:$0xff] %vm1403, %v1395
        %1429 = vst.msk [vmem:[#allocation3 + $0xc8] sm:$0xff] %vm1403, %v1396
        %1430 = vst.msk [vmem:[#allocation3 + $0xd0] sm:$0xff] %vm1403, %v1397
        %1431 = vst.msk [vmem:[#allocation3 + $0xd8] sm:$0xff] %vm1403, %v1398
        %1432 = vst.msk [vmem:[#allocation3 + $0xe0] sm:$0xff] %vm1403, %v1399
        %1433 = vst.msk [vmem:[#allocation3 + $0xe8] sm:$0xff] %vm1403, %v1400
        %1434 = vst.msk [vmem:[#allocation3 + $0xf0] sm:$0xff] %vm1403, %v1401
        %1435 = vst.msk [vmem:[#allocation3 + $0xf8] sm:$0xff] %vm1403, %v1402
        %1436 = vst.msk [vmem:[#allocation2] sm:$0x1] %vm602, 0.0
        %1437 = vst.msk [vmem:[#allocation2 + $0x8] sm:$0x1] %vm602, 0.0
        %1438 = vst.msk [vmem:[#allocation2 + $0x10] sm:$0x1] %vm602, 0.0
        %1439 = vst.msk [vmem:[#allocation2 + $0x18] sm:$0x1] %vm602, 0.0
        %1440 = vst.msk [vmem:[#allocation2 + $0x20] sm:$0x1] %vm602, 0.0
        %1441 = vst.msk [vmem:[#allocation2 + $0x28] sm:$0x1] %vm602, 0.0
        %1442 = vst.msk [vmem:[#allocation2 + $0x30] sm:$0x1] %vm602, 0.0
        %1443 = vst.msk [vmem:[#allocation2 + $0x38] sm:$0x1] %vm602, 0.0
        %1444 = vst.msk [vmem:[#allocation2 + $0x40] sm:$0x1] %vm602, 0.0
        %1445 = vst.msk [vmem:[#allocation2 + $0x48] sm:$0x1] %vm602, 0.0
        %1446 = vst.msk [vmem:[#allocation2 + $0x50] sm:$0x1] %vm602, 0.0
        %1447 = vst.msk [vmem:[#allocation2 + $0x58] sm:$0x1] %vm602, 0.0
        %1448 = vst.msk [vmem:[#allocation2 + $0x60] sm:$0x1] %vm602, 0.0
        %1449 = vst.msk [vmem:[#allocation2 + $0x68] sm:$0x1] %vm602, 0.0
        %1450 = vst.msk [vmem:[#allocation2 + $0x70] sm:$0x1] %vm602, 0.0
        %1451 = vst.msk [vmem:[#allocation2 + $0x78] sm:$0x1] %vm602, 0.0
        %1452 = vst.msk [vmem:[#allocation2 + $0x80] sm:$0x1] %vm602, 0.0
        %1453 = vst.msk [vmem:[#allocation2 + $0x88] sm:$0x1] %vm602, 0.0
        %1454 = vst.msk [vmem:[#allocation2 + $0x90] sm:$0x1] %vm602, 0.0
        %1455 = vst.msk [vmem:[#allocation2 + $0x98] sm:$0x1] %vm602, 0.0
        %1456 = vst.msk [vmem:[#allocation2 + $0xa0] sm:$0x1] %vm602, 0.0
        %1457 = vst.msk [vmem:[#allocation2 + $0xa8] sm:$0x1] %vm602, 0.0
        %1458 = vst.msk [vmem:[#allocation2 + $0xb0] sm:$0x1] %vm602, 0.0
        %1459 = vst.msk [vmem:[#allocation2 + $0xb8] sm:$0x1] %vm602, 0.0
        %1460 = vst.msk [vmem:[#allocation2 + $0xc0] sm:$0x1] %vm602, 0.0
        %1461 = vst.msk [vmem:[#allocation2 + $0xc8] sm:$0x1] %vm602, 0.0
        %1462 = vst.msk [vmem:[#allocation2 + $0xd0] sm:$0x1] %vm602, 0.0
        %1463 = vst.msk [vmem:[#allocation2 + $0xd8] sm:$0x1] %vm602, 0.0
        %1464 = vst.msk [vmem:[#allocation2 + $0xe0] sm:$0x1] %vm602, 0.0
        %1465 = vst.msk [vmem:[#allocation2 + $0xe8] sm:$0x1] %vm602, 0.0
        %1466 = vst.msk [vmem:[#allocation2 + $0xf0] sm:$0x1] %vm602, 0.0
        %1467 = vst.msk [vmem:[#allocation2 + $0xf8] sm:$0x1] %vm602, 0.0
        %1468 = vst.msk [vmem:[#allocation2 + $0x1] sm:$0x7f] %vm635, %v487
        %1469 = vst.msk [vmem:[#allocation2 + $0x9] sm:$0x7f] %vm635, %v488
        %1470 = vst.msk [vmem:[#allocation2 + $0x11] sm:$0x7f] %vm635, %v489
        %1471 = vst.msk [vmem:[#allocation2 + $0x19] sm:$0x7f] %vm635, %v490
        %1472 = vst.msk [vmem:[#allocation2 + $0x21] sm:$0x7f] %vm635, %v491
        %1473 = vst.msk [vmem:[#allocation2 + $0x29] sm:$0x7f] %vm635, %v492
        %1474 = vst.msk [vmem:[#allocation2 + $0x31] sm:$0x7f] %vm635, %v493
        %1475 = vst.msk [vmem:[#allocation2 + $0x39] sm:$0x7f] %vm635, %v494
        %1476 = vst.msk [vmem:[#allocation2 + $0x41] sm:$0x7f] %vm635, %v495
        %1477 = vst.msk [vmem:[#allocation2 + $0x49] sm:$0x7f] %vm635, %v496
        %1478 = vst.msk [vmem:[#allocation2 + $0x51] sm:$0x7f] %vm635, %v497
        %1479 = vst.msk [vmem:[#allocation2 + $0x59] sm:$0x7f] %vm635, %v498
        %1480 = vst.msk [vmem:[#allocation2 + $0x61] sm:$0x7f] %vm635, %v499
        %1481 = vst.msk [vmem:[#allocation2 + $0x69] sm:$0x7f] %vm635, %v500
        %1482 = vst.msk [vmem:[#allocation2 + $0x71] sm:$0x7f] %vm635, %v501
        %1483 = vst.msk [vmem:[#allocation2 + $0x79] sm:$0x7f] %vm635, %v502
        %1484 = vst.msk [vmem:[#allocation2 + $0x81] sm:$0x7f] %vm635, %v503
        %1485 = vst.msk [vmem:[#allocation2 + $0x89] sm:$0x7f] %vm635, %v504
        %1486 = vst.msk [vmem:[#allocation2 + $0x91] sm:$0x7f] %vm635, %v505
        %1487 = vst.msk [vmem:[#allocation2 + $0x99] sm:$0x7f] %vm635, %v506
        %1488 = vst.msk [vmem:[#allocation2 + $0xa1] sm:$0x7f] %vm635, %v507
        %1489 = vst.msk [vmem:[#allocation2 + $0xa9] sm:$0x7f] %vm635, %v508
        %1490 = vst.msk [vmem:[#allocation2 + $0xb1] sm:$0x7f] %vm635, %v509
        %1491 = vst.msk [vmem:[#allocation2 + $0xb9] sm:$0x7f] %vm635, %v510
        %1492 = vst.msk [vmem:[#allocation2 + $0xc1] sm:$0x7f] %vm635, %v511
        %1493 = vst.msk [vmem:[#allocation2 + $0xc9] sm:$0x7f] %vm635, %v512
        %1494 = vst.msk [vmem:[#allocation2 + $0xd1] sm:$0x7f] %vm635, %v513
        %1495 = vst.msk [vmem:[#allocation2 + $0xd9] sm:$0x7f] %vm635, %v514
        %1496 = vst.msk [vmem:[#allocation2 + $0xe1] sm:$0x7f] %vm635, %v515
        %1497 = vst.msk [vmem:[#allocation2 + $0xe9] sm:$0x7f] %vm635, %v516
        %1498 = vst.msk [vmem:[#allocation2 + $0xf1] sm:$0x7f] %vm635, %v517
        %1499 = vst.msk [vmem:[#allocation2 + $0xf9] sm:$0x7f] %vm635, %v518
        %1532 = vrot.lane.b32.xlu0 %v454, 4
        %v1533 = vpop.permute.xlu0 %1532
        %1534 = vrot.lane.b32.xlu0 %v455, 4
        %v1535 = vpop.permute.xlu0 %1534
        %1536 = vrot.lane.b32.xlu0 %v456, 4
        %v1537 = vpop.permute.xlu0 %1536
        %1538 = vrot.lane.b32.xlu0 %v457, 4
        %v1539 = vpop.permute.xlu0 %1538
        %1540 = vrot.lane.b32.xlu0 %v458, 4
        %v1541 = vpop.permute.xlu0 %1540
        %1542 = vrot.lane.b32.xlu0 %v459, 4
        %v1543 = vpop.permute.xlu0 %1542
        %1544 = vrot.lane.b32.xlu0 %v460, 4
        %v1545 = vpop.permute.xlu0 %1544
        %1546 = vrot.lane.b32.xlu0 %v461, 4
        %v1547 = vpop.permute.xlu0 %1546
        %1548 = vrot.lane.b32.xlu0 %v462, 4
        %v1549 = vpop.permute.xlu0 %1548
        %1550 = vrot.lane.b32.xlu0 %v463, 4
        %v1551 = vpop.permute.xlu0 %1550
        %1552 = vrot.lane.b32.xlu0 %v464, 4
        %v1553 = vpop.permute.xlu0 %1552
        %1554 = vrot.lane.b32.xlu0 %v465, 4
        %v1555 = vpop.permute.xlu0 %1554
        %1556 = vrot.lane.b32.xlu0 %v466, 4
        %v1557 = vpop.permute.xlu0 %1556
        %1558 = vrot.lane.b32.xlu0 %v467, 4
        %v1559 = vpop.permute.xlu0 %1558
        %1560 = vrot.lane.b32.xlu0 %v468, 4
        %v1561 = vpop.permute.xlu0 %1560
        %1562 = vrot.lane.b32.xlu0 %v469, 4
        %v1563 = vpop.permute.xlu0 %1562
        %1564 = vrot.lane.b32.xlu0 %v470, 4
        %v1565 = vpop.permute.xlu0 %1564
        %1566 = vrot.lane.b32.xlu0 %v471, 4
        %v1567 = vpop.permute.xlu0 %1566
        %1568 = vrot.lane.b32.xlu0 %v472, 4
        %v1569 = vpop.permute.xlu0 %1568
        %1570 = vrot.lane.b32.xlu0 %v473, 4
        %v1571 = vpop.permute.xlu0 %1570
        %1572 = vrot.lane.b32.xlu0 %v474, 4
        %v1573 = vpop.permute.xlu0 %1572
        %1574 = vrot.lane.b32.xlu0 %v475, 4
        %v1575 = vpop.permute.xlu0 %1574
        %1576 = vrot.lane.b32.xlu0 %v476, 4
        %v1577 = vpop.permute.xlu0 %1576
        %1578 = vrot.lane.b32.xlu0 %v477, 4
        %v1579 = vpop.permute.xlu0 %1578
        %1580 = vrot.lane.b32.xlu0 %v478, 4
        %v1581 = vpop.permute.xlu0 %1580
        %1582 = vrot.lane.b32.xlu0 %v479, 4
        %v1583 = vpop.permute.xlu0 %1582
        %1584 = vrot.lane.b32.xlu0 %v480, 4
        %v1585 = vpop.permute.xlu0 %1584
        %1586 = vrot.lane.b32.xlu0 %v481, 4
        %v1587 = vpop.permute.xlu0 %1586
        %1588 = vrot.lane.b32.xlu0 %v482, 4
        %v1589 = vpop.permute.xlu0 %1588
        %1590 = vrot.lane.b32.xlu0 %v483, 4
        %v1591 = vpop.permute.xlu0 %1590
        %1592 = vrot.lane.b32.xlu0 %v484, 4
        %v1593 = vpop.permute.xlu0 %1592
        %1594 = vrot.lane.b32.xlu0 %v485, 4
        %v1595 = vpop.permute.xlu0 %1594
        %1628 = vst.msk [vmem:[#allocation2] sm:$0xff] %vm701, %v1533
        %1629 = vst.msk [vmem:[#allocation2 + $0x8] sm:$0xff] %vm701, %v1535
        %1630 = vst.msk [vmem:[#allocation2 + $0x10] sm:$0xff] %vm701, %v1537
        %1631 = vst.msk [vmem:[#allocation2 + $0x18] sm:$0xff] %vm701, %v1539
        %1632 = vst.msk [vmem:[#allocation2 + $0x20] sm:$0xff] %vm701, %v1541
        %1633 = vst.msk [vmem:[#allocation2 + $0x28] sm:$0xff] %vm701, %v1543
        %1634 = vst.msk [vmem:[#allocation2 + $0x30] sm:$0xff] %vm701, %v1545
        %1635 = vst.msk [vmem:[#allocation2 + $0x38] sm:$0xff] %vm701, %v1547
        %1636 = vst.msk [vmem:[#allocation2 + $0x40] sm:$0xff] %vm701, %v1549
        %1637 = vst.msk [vmem:[#allocation2 + $0x48] sm:$0xff] %vm701, %v1551
        %1638 = vst.msk [vmem:[#allocation2 + $0x50] sm:$0xff] %vm701, %v1553
        %1639 = vst.msk [vmem:[#allocation2 + $0x58] sm:$0xff] %vm701, %v1555
        %1640 = vst.msk [vmem:[#allocation2 + $0x60] sm:$0xff] %vm701, %v1557
        %1641 = vst.msk [vmem:[#allocation2 + $0x68] sm:$0xff] %vm701, %v1559
        %1642 = vst.msk [vmem:[#allocation2 + $0x70] sm:$0xff] %vm701, %v1561
        %1643 = vst.msk [vmem:[#allocation2 + $0x78] sm:$0xff] %vm701, %v1563
        %1644 = vst.msk [vmem:[#allocation2 + $0x80] sm:$0xff] %vm701, %v1565
        %1645 = vst.msk [vmem:[#allocation2 + $0x88] sm:$0xff] %vm701, %v1567
        %1646 = vst.msk [vmem:[#allocation2 + $0x90] sm:$0xff] %vm701, %v1569
        %1647 = vst.msk [vmem:[#allocation2 + $0x98] sm:$0xff] %vm701, %v1571
        %1648 = vst.msk [vmem:[#allocation2 + $0xa0] sm:$0xff] %vm701, %v1573
        %1649 = vst.msk [vmem:[#allocation2 + $0xa8] sm:$0xff] %vm701, %v1575
        %1650 = vst.msk [vmem:[#allocation2 + $0xb0] sm:$0xff] %vm701, %v1577
        %1651 = vst.msk [vmem:[#allocation2 + $0xb8] sm:$0xff] %vm701, %v1579
        %1652 = vst.msk [vmem:[#allocation2 + $0xc0] sm:$0xff] %vm701, %v1581
        %1653 = vst.msk [vmem:[#allocation2 + $0xc8] sm:$0xff] %vm701, %v1583
        %1654 = vst.msk [vmem:[#allocation2 + $0xd0] sm:$0xff] %vm701, %v1585
        %1655 = vst.msk [vmem:[#allocation2 + $0xd8] sm:$0xff] %vm701, %v1587
        %1656 = vst.msk [vmem:[#allocation2 + $0xe0] sm:$0xff] %vm701, %v1589
        %1657 = vst.msk [vmem:[#allocation2 + $0xe8] sm:$0xff] %vm701, %v1591
        %1658 = vst.msk [vmem:[#allocation2 + $0xf0] sm:$0xff] %vm701, %v1593
        %1659 = vst.msk [vmem:[#allocation2 + $0xf8] sm:$0xff] %vm701, %v1595
        %1692 = vrot.lane.b32.xlu0 %v487, 8
        %v1693 = vpop.permute.xlu0 %1692
        %1694 = vrot.lane.b32.xlu0 %v488, 8
        %v1695 = vpop.permute.xlu0 %1694
        %1696 = vrot.lane.b32.xlu0 %v489, 8
        %v1697 = vpop.permute.xlu0 %1696
        %1698 = vrot.lane.b32.xlu0 %v490, 8
        %v1699 = vpop.permute.xlu0 %1698
        %1700 = vrot.lane.b32.xlu0 %v491, 8
        %v1701 = vpop.permute.xlu0 %1700
        %1702 = vrot.lane.b32.xlu0 %v492, 8
        %v1703 = vpop.permute.xlu0 %1702
        %1704 = vrot.lane.b32.xlu0 %v493, 8
        %v1705 = vpop.permute.xlu0 %1704
        %1706 = vrot.lane.b32.xlu0 %v494, 8
        %v1707 = vpop.permute.xlu0 %1706
        %1708 = vrot.lane.b32.xlu0 %v495, 8
        %v1709 = vpop.permute.xlu0 %1708
        %1710 = vrot.lane.b32.xlu0 %v496, 8
        %v1711 = vpop.permute.xlu0 %1710
        %1712 = vrot.lane.b32.xlu0 %v497, 8
        %v1713 = vpop.permute.xlu0 %1712
        %1714 = vrot.lane.b32.xlu0 %v498, 8
        %v1715 = vpop.permute.xlu0 %1714
        %1716 = vrot.lane.b32.xlu0 %v499, 8
        %v1717 = vpop.permute.xlu0 %1716
        %1718 = vrot.lane.b32.xlu0 %v500, 8
        %v1719 = vpop.permute.xlu0 %1718
        %1720 = vrot.lane.b32.xlu0 %v501, 8
        %v1721 = vpop.permute.xlu0 %1720
        %1722 = vrot.lane.b32.xlu0 %v502, 8
        %v1723 = vpop.permute.xlu0 %1722
        %1724 = vrot.lane.b32.xlu0 %v503, 8
        %v1725 = vpop.permute.xlu0 %1724
        %1726 = vrot.lane.b32.xlu0 %v504, 8
        %v1727 = vpop.permute.xlu0 %1726
        %1728 = vrot.lane.b32.xlu0 %v505, 8
        %v1729 = vpop.permute.xlu0 %1728
        %1730 = vrot.lane.b32.xlu0 %v506, 8
        %v1731 = vpop.permute.xlu0 %1730
        %1732 = vrot.lane.b32.xlu0 %v507, 8
        %v1733 = vpop.permute.xlu0 %1732
        %1734 = vrot.lane.b32.xlu0 %v508, 8
        %v1735 = vpop.permute.xlu0 %1734
        %1736 = vrot.lane.b32.xlu0 %v509, 8
        %v1737 = vpop.permute.xlu0 %1736
        %1738 = vrot.lane.b32.xlu0 %v510, 8
        %v1739 = vpop.permute.xlu0 %1738
        %1740 = vrot.lane.b32.xlu0 %v511, 8
        %v1741 = vpop.permute.xlu0 %1740
        %1742 = vrot.lane.b32.xlu0 %v512, 8
        %v1743 = vpop.permute.xlu0 %1742
        %1744 = vrot.lane.b32.xlu0 %v513, 8
        %v1745 = vpop.permute.xlu0 %1744
        %1746 = vrot.lane.b32.xlu0 %v514, 8
        %v1747 = vpop.permute.xlu0 %1746
        %1748 = vrot.lane.b32.xlu0 %v515, 8
        %v1749 = vpop.permute.xlu0 %1748
        %1750 = vrot.lane.b32.xlu0 %v516, 8
        %v1751 = vpop.permute.xlu0 %1750
        %1752 = vrot.lane.b32.xlu0 %v517, 8
        %v1753 = vpop.permute.xlu0 %1752
        %1754 = vrot.lane.b32.xlu0 %v518, 8
        %v1755 = vpop.permute.xlu0 %1754
        %1788 = vst.msk [vmem:[#allocation2] sm:$0xff] %vm742, %v1693
        %1789 = vst.msk [vmem:[#allocation2 + $0x8] sm:$0xff] %vm742, %v1695
        %1790 = vst.msk [vmem:[#allocation2 + $0x10] sm:$0xff] %vm742, %v1697
        %1791 = vst.msk [vmem:[#allocation2 + $0x18] sm:$0xff] %vm742, %v1699
        %1792 = vst.msk [vmem:[#allocation2 + $0x20] sm:$0xff] %vm742, %v1701
        %1793 = vst.msk [vmem:[#allocation2 + $0x28] sm:$0xff] %vm742, %v1703
        %1794 = vst.msk [vmem:[#allocation2 + $0x30] sm:$0xff] %vm742, %v1705
        %1795 = vst.msk [vmem:[#allocation2 + $0x38] sm:$0xff] %vm742, %v1707
        %1796 = vst.msk [vmem:[#allocation2 + $0x40] sm:$0xff] %vm742, %v1709
        %1797 = vst.msk [vmem:[#allocation2 + $0x48] sm:$0xff] %vm742, %v1711
        %1798 = vst.msk [vmem:[#allocation2 + $0x50] sm:$0xff] %vm742, %v1713
        %1799 = vst.msk [vmem:[#allocation2 + $0x58] sm:$0xff] %vm742, %v1715
        %1800 = vst.msk [vmem:[#allocation2 + $0x60] sm:$0xff] %vm742, %v1717
        %1801 = vst.msk [vmem:[#allocation2 + $0x68] sm:$0xff] %vm742, %v1719
        %1802 = vst.msk [vmem:[#allocation2 + $0x70] sm:$0xff] %vm742, %v1721
        %1803 = vst.msk [vmem:[#allocation2 + $0x78] sm:$0xff] %vm742, %v1723
        %1804 = vst.msk [vmem:[#allocation2 + $0x80] sm:$0xff] %vm742, %v1725
        %1805 = vst.msk [vmem:[#allocation2 + $0x88] sm:$0xff] %vm742, %v1727
        %1806 = vst.msk [vmem:[#allocation2 + $0x90] sm:$0xff] %vm742, %v1729
        %1807 = vst.msk [vmem:[#allocation2 + $0x98] sm:$0xff] %vm742, %v1731
        %1808 = vst.msk [vmem:[#allocation2 + $0xa0] sm:$0xff] %vm742, %v1733
        %1809 = vst.msk [vmem:[#allocation2 + $0xa8] sm:$0xff] %vm742, %v1735
        %1810 = vst.msk [vmem:[#allocation2 + $0xb0] sm:$0xff] %vm742, %v1737
        %1811 = vst.msk [vmem:[#allocation2 + $0xb8] sm:$0xff] %vm742, %v1739
        %1812 = vst.msk [vmem:[#allocation2 + $0xc0] sm:$0xff] %vm742, %v1741
        %1813 = vst.msk [vmem:[#allocation2 + $0xc8] sm:$0xff] %vm742, %v1743
        %1814 = vst.msk [vmem:[#allocation2 + $0xd0] sm:$0xff] %vm742, %v1745
        %1815 = vst.msk [vmem:[#allocation2 + $0xd8] sm:$0xff] %vm742, %v1747
        %1816 = vst.msk [vmem:[#allocation2 + $0xe0] sm:$0xff] %vm742, %v1749
        %1817 = vst.msk [vmem:[#allocation2 + $0xe8] sm:$0xff] %vm742, %v1751
        %1818 = vst.msk [vmem:[#allocation2 + $0xf0] sm:$0xff] %vm742, %v1753
        %1819 = vst.msk [vmem:[#allocation2 + $0xf8] sm:$0xff] %vm742, %v1755
        %v1820 = vld [vmem:[#allocation3] sm:$0xff]
        %v1821 = vld [vmem:[#allocation3 + $0x8] sm:$0xff]
        %v1822 = vld [vmem:[#allocation3 + $0x10] sm:$0xff]
        %v1823 = vld [vmem:[#allocation3 + $0x18] sm:$0xff]
        %v1824 = vld [vmem:[#allocation3 + $0x20] sm:$0xff]
        %v1825 = vld [vmem:[#allocation3 + $0x28] sm:$0xff]
        %v1826 = vld [vmem:[#allocation3 + $0x30] sm:$0xff]
        %v1827 = vld [vmem:[#allocation3 + $0x38] sm:$0xff]
        %v1828 = vld [vmem:[#allocation3 + $0x40] sm:$0xff]
        %v1829 = vld [vmem:[#allocation3 + $0x48] sm:$0xff]
        %v1830 = vld [vmem:[#allocation3 + $0x50] sm:$0xff]
        %v1831 = vld [vmem:[#allocation3 + $0x58] sm:$0xff]
        %v1832 = vld [vmem:[#allocation3 + $0x60] sm:$0xff]
        %v1833 = vld [vmem:[#allocation3 + $0x68] sm:$0xff]
        %v1834 = vld [vmem:[#allocation3 + $0x70] sm:$0xff]
        %v1835 = vld [vmem:[#allocation3 + $0x78] sm:$0xff]
        %v1836 = vld [vmem:[#allocation3 + $0x80] sm:$0xff]
        %v1837 = vld [vmem:[#allocation3 + $0x88] sm:$0xff]
        %v1838 = vld [vmem:[#allocation3 + $0x90] sm:$0xff]
        %v1839 = vld [vmem:[#allocation3 + $0x98] sm:$0xff]
        %v1840 = vld [vmem:[#allocation3 + $0xa0] sm:$0xff]
        %v1841 = vld [vmem:[#allocation3 + $0xa8] sm:$0xff]
        %v1842 = vld [vmem:[#allocation3 + $0xb0] sm:$0xff]
        %v1843 = vld [vmem:[#allocation3 + $0xb8] sm:$0xff]
        %v1844 = vld [vmem:[#allocation3 + $0xc0] sm:$0xff]
        %v1845 = vld [vmem:[#allocation3 + $0xc8] sm:$0xff]
        %v1846 = vld [vmem:[#allocation3 + $0xd0] sm:$0xff]
        %v1847 = vld [vmem:[#allocation3 + $0xd8] sm:$0xff]
        %v1848 = vld [vmem:[#allocation3 + $0xe0] sm:$0xff]
        %v1849 = vld [vmem:[#allocation3 + $0xe8] sm:$0xff]
        %v1850 = vld [vmem:[#allocation3 + $0xf0] sm:$0xff]
        %v1851 = vld [vmem:[#allocation3 + $0xf8] sm:$0xff]
        %v1852 = vld [vmem:[#allocation2] sm:$0xff]
        %v1853 = vld [vmem:[#allocation2 + $0x8] sm:$0xff]
        %v1854 = vld [vmem:[#allocation2 + $0x10] sm:$0xff]
        %v1855 = vld [vmem:[#allocation2 + $0x18] sm:$0xff]
        %v1856 = vld [vmem:[#allocation2 + $0x20] sm:$0xff]
        %v1857 = vld [vmem:[#allocation2 + $0x28] sm:$0xff]
        %v1858 = vld [vmem:[#allocation2 + $0x30] sm:$0xff]
        %v1859 = vld [vmem:[#allocation2 + $0x38] sm:$0xff]
        %v1860 = vld [vmem:[#allocation2 + $0x40] sm:$0xff]
        %v1861 = vld [vmem:[#allocation2 + $0x48] sm:$0xff]
        %v1862 = vld [vmem:[#allocation2 + $0x50] sm:$0xff]
        %v1863 = vld [vmem:[#allocation2 + $0x58] sm:$0xff]
        %v1864 = vld [vmem:[#allocation2 + $0x60] sm:$0xff]
        %v1865 = vld [vmem:[#allocation2 + $0x68] sm:$0xff]
        %v1866 = vld [vmem:[#allocation2 + $0x70] sm:$0xff]
        %v1867 = vld [vmem:[#allocation2 + $0x78] sm:$0xff]
        %v1868 = vld [vmem:[#allocation2 + $0x80] sm:$0xff]
        %v1869 = vld [vmem:[#allocation2 + $0x88] sm:$0xff]
        %v1870 = vld [vmem:[#allocation2 + $0x90] sm:$0xff]
        %v1871 = vld [vmem:[#allocation2 + $0x98] sm:$0xff]
        %v1872 = vld [vmem:[#allocation2 + $0xa0] sm:$0xff]
        %v1873 = vld [vmem:[#allocation2 + $0xa8] sm:$0xff]
        %v1874 = vld [vmem:[#allocation2 + $0xb0] sm:$0xff]
        %v1875 = vld [vmem:[#allocation2 + $0xb8] sm:$0xff]
        %v1876 = vld [vmem:[#allocation2 + $0xc0] sm:$0xff]
        %v1877 = vld [vmem:[#allocation2 + $0xc8] sm:$0xff]
        %v1878 = vld [vmem:[#allocation2 + $0xd0] sm:$0xff]
        %v1879 = vld [vmem:[#allocation2 + $0xd8] sm:$0xff]
        %v1880 = vld [vmem:[#allocation2 + $0xe0] sm:$0xff]
        %v1881 = vld [vmem:[#allocation2 + $0xe8] sm:$0xff]
        %v1882 = vld [vmem:[#allocation2 + $0xf0] sm:$0xff]
        %v1883 = vld [vmem:[#allocation2 + $0xf8] sm:$0xff]
        %s1884 = scalar_lea.vmem [#allocation10], 16
        %v1885 = vld [vmem:[%s1884] sm:$0xff]
        %v1886 = vld [vmem:[%s1884 + $0x8] sm:$0xf]
        %v1888 = vsel %vm1038, %v1852, 0
        %v1891 = vsel %vm1038, %v1853, 0
        %v1894 = vsel %vm1038, %v1854, 0
        %v1897 = vsel %vm1038, %v1855, 0
        %v1900 = vsel %vm1038, %v1856, 0
        %v1903 = vsel %vm1038, %v1857, 0
        %v1906 = vsel %vm1038, %v1858, 0
        %v1909 = vsel %vm1038, %v1859, 0
        %v1912 = vsel %vm1038, %v1860, 0
        %v1915 = vsel %vm1038, %v1861, 0
        %v1918 = vsel %vm1038, %v1862, 0
        %v1921 = vsel %vm1038, %v1863, 0
        %v1924 = vsel %vm1038, %v1864, 0
        %v1927 = vsel %vm1038, %v1865, 0
        %v1930 = vsel %vm1038, %v1866, 0
        %v1933 = vsel %vm1038, %v1867, 0
        %v1936 = vsel %vm1038, %v1868, 0
        %v1939 = vsel %vm1038, %v1869, 0
        %v1942 = vsel %vm1038, %v1870, 0
        %v1945 = vsel %vm1038, %v1871, 0
        %v1948 = vsel %vm1038, %v1872, 0
        %v1951 = vsel %vm1038, %v1873, 0
        %v1954 = vsel %vm1038, %v1874, 0
        %v1957 = vsel %vm1038, %v1875, 0
        %v1960 = vsel %vm1038, %v1876, 0
        %v1963 = vsel %vm1038, %v1877, 0
        %v1966 = vsel %vm1038, %v1878, 0
        %v1969 = vsel %vm1038, %v1879, 0
        %v1972 = vsel %vm1038, %v1880, 0
        %v1975 = vsel %vm1038, %v1881, 0
        %v1978 = vsel %vm1038, %v1882, 0
        %v1981 = vsel %vm1038, %v1883, 0
        %v1984 = vsel %vm1135, %v1886, 0
        %1986 = vmatprep.subr.mxu0 0.0
        %1987 = vmatpush1.msra.mxu0 %v1885
        %1988 = vmatprep.subr.mxu0 0.0
        %1989 = vmatpush1.msra.mxu0 %v1984
        %1990 = vmatprep.subr.mxu0 0.0
        %1991 = vmatpush1.msra.mxu0 0.0
        %1992 = vmatprep.subr.mxu0 0.0
        %1993 = vmatpush1.msra.mxu0 0.0
        %1994 = vmatprep.subr.mxu0 0.0
        %1995 = vmatpush1.msra.mxu0 0.0
        %1996 = vmatprep.subr.mxu0 0.0
        %1997 = vmatpush1.msra.mxu0 0.0
        %1998 = vmatprep.subr.mxu0 0.0
        %1999 = vmatpush1.msra.mxu0 0.0
        %2000 = vmatprep.subr.mxu0 0.0
        %2001 = vmatpush1.msra.mxu0 0.0
        %2002 = vmatprep.subr.mxu0 0.0
        %2003 = vmatpush1.msra.mxu0 0.0
        %2004 = vmatprep.subr.mxu0 0.0
        %2005 = vmatpush1.msra.mxu0 0.0
        %2006 = vmatprep.subr.mxu0 0.0
        %2007 = vmatpush1.msra.mxu0 0.0
        %2008 = vmatprep.subr.mxu0 0.0
        %2009 = vmatpush1.msra.mxu0 0.0
        %2010 = vmatprep.subr.mxu0 0.0
        %2011 = vmatpush1.msra.mxu0 0.0
        %2012 = vmatprep.subr.mxu0 0.0
        %2013 = vmatpush1.msra.mxu0 0.0
        %2014 = vmatprep.subr.mxu0 0.0
        %2015 = vmatpush1.msra.mxu0 0.0
        %2016 = vmatprep.subr.mxu0 0.0
        %2017 = vmatpush1.msra.mxu0 0.0
        %2018 = vmatprep.subr.mxu0 0.0
        %2019 = vmatpush1.msra.mxu0 0.0
        %2020 = vmatprep.subr.mxu0 0.0
        %2021 = vmatpush1.msra.mxu0 0.0
        %2022 = vmatprep.subr.mxu0 0.0
        %2023 = vmatpush1.msra.mxu0 0.0
        %2024 = vmatprep.subr.mxu0 0.0
        %2025 = vmatpush1.msra.mxu0 0.0
        %2026 = vmatprep.subr.mxu0 0.0
        %2027 = vmatpush1.msra.mxu0 0.0
        %2028 = vmatprep.subr.mxu0 0.0
        %2029 = vmatpush1.msra.mxu0 0.0
        %2030 = vmatprep.subr.mxu0 0.0
        %2031 = vmatpush1.msra.mxu0 0.0
        %2032 = vmatprep.subr.mxu0 0.0
        %2033 = vmatpush1.msra.mxu0 0.0
        %2034 = vmatprep.subr.mxu0 0.0
        %2035 = vmatpush1.msra.mxu0 0.0
        %2036 = vmatprep.subr.mxu0 0.0
        %2037 = vmatpush1.msra.mxu0 0.0
        %2038 = vmatprep.subr.mxu0 0.0
        %2039 = vmatpush1.msra.mxu0 0.0
        %2040 = vmatprep.subr.mxu0 0.0
        %2041 = vmatpush1.msra.mxu0 0.0
        %2042 = vmatprep.subr.mxu0 0.0
        %2043 = vmatpush1.msra.mxu0 0.0
        %2044 = vmatprep.subr.mxu0 0.0
        %2045 = vmatpush1.msra.mxu0 0.0
        %2046 = vmatprep.subr.mxu0 0.0
        %2047 = vmatpush1.msra.mxu0 0.0
        %2048 = vmatprep.subr.mxu0 0.0
        %2049 = vmatpush1.msra.mxu0 0.0
        %2050 = vmatprep.mubr.f32.mxu0 0.0
        %2051 = vmatmul.mubr.f32.gmra.mrb[0].mxu0 %v1888
        %v2052 = vpop.f32.mrb[0].mxu0
        %v2053 = vadd.f32 0.0, %v2052
        %v2054 = vpop.f32.mrb[0].mxu0
        %2055 = vmatprep.mubr.f32.mxu0 0.0
        %2056 = vmatmul.mubr.f32.gmra.mrb[0].mxu0 %v1891
        %v2057 = vpop.f32.mrb[0].mxu0
        %v2058 = vadd.f32 0.0, %v2057
        %v2059 = vpop.f32.mrb[0].mxu0
        %2060 = vmatprep.mubr.f32.mxu0 0.0
        %2061 = vmatmul.mubr.f32.gmra.mrb[0].mxu0 %v1894
        %v2062 = vpop.f32.mrb[0].mxu0
        %v2063 = vadd.f32 0.0, %v2062
        %v2064 = vpop.f32.mrb[0].mxu0
        %2065 = vmatprep.mubr.f32.mxu0 0.0
        %2066 = vmatmul.mubr.f32.gmra.mrb[0].mxu0 %v1897
        %v2067 = vpop.f32.mrb[0].mxu0
        %v2068 = vadd.f32 0.0, %v2067
        %v2069 = vpop.f32.mrb[0].mxu0
        %2070 = vmatprep.mubr.f32.mxu0 0.0
        %2071 = vmatmul.mubr.f32.gmra.mrb[0].mxu0 %v1900
        %v2072 = vpop.f32.mrb[0].mxu0
        %v2073 = vadd.f32 0.0, %v2072
        %v2074 = vpop.f32.mrb[0].mxu0
        %2075 = vmatprep.mubr.f32.mxu0 0.0
        %2076 = vmatmul.mubr.f32.gmra.mrb[0].mxu0 %v1903
        %v2077 = vpop.f32.mrb[0].mxu0
        %v2078 = vadd.f32 0.0, %v2077
        %v2079 = vpop.f32.mrb[0].mxu0
        %2080 = vmatprep.mubr.f32.mxu0 0.0
        %2081 = vmatmul.mubr.f32.gmra.mrb[0].mxu0 %v1906
        %v2082 = vpop.f32.mrb[0].mxu0
        %v2083 = vadd.f32 0.0, %v2082
        %v2084 = vpop.f32.mrb[0].mxu0
        %2085 = vmatprep.mubr.f32.mxu0 0.0
        %2086 = vmatmul.mubr.f32.gmra.mrb[0].mxu0 %v1909
        %v2087 = vpop.f32.mrb[0].mxu0
        %v2088 = vadd.f32 0.0, %v2087
        %v2089 = vpop.f32.mrb[0].mxu0
        %2090 = vmatprep.mubr.f32.mxu0 0.0
        %2091 = vmatmul.mubr.f32.gmra.mrb[0].mxu0 %v1912
        %v2092 = vpop.f32.mrb[0].mxu0
        %v2093 = vadd.f32 0.0, %v2092
        %v2094 = vpop.f32.mrb[0].mxu0
        %2095 = vmatprep.mubr.f32.mxu0 0.0
        %2096 = vmatmul.mubr.f32.gmra.mrb[0].mxu0 %v1915
        %v2097 = vpop.f32.mrb[0].mxu0
        %v2098 = vadd.f32 0.0, %v2097
        %v2099 = vpop.f32.mrb[0].mxu0
        %2100 = vmatprep.mubr.f32.mxu0 0.0
        %2101 = vmatmul.mubr.f32.gmra.mrb[0].mxu0 %v1918
        %v2102 = vpop.f32.mrb[0].mxu0
        %v2103 = vadd.f32 0.0, %v2102
        %v2104 = vpop.f32.mrb[0].mxu0
        %2105 = vmatprep.mubr.f32.mxu0 0.0
        %2106 = vmatmul.mubr.f32.gmra.mrb[0].mxu0 %v1921
        %v2107 = vpop.f32.mrb[0].mxu0
        %v2108 = vadd.f32 0.0, %v2107
        %v2109 = vpop.f32.mrb[0].mxu0
        %2110 = vmatprep.mubr.f32.mxu0 0.0
        %2111 = vmatmul.mubr.f32.gmra.mrb[0].mxu0 %v1924
        %v2112 = vpop.f32.mrb[0].mxu0
        %v2113 = vadd.f32 0.0, %v2112
        %v2114 = vpop.f32.mrb[0].mxu0
        %2115 = vmatprep.mubr.f32.mxu0 0.0
        %2116 = vmatmul.mubr.f32.gmra.mrb[0].mxu0 %v1927
        %v2117 = vpop.f32.mrb[0].mxu0
        %v2118 = vadd.f32 0.0, %v2117
        %v2119 = vpop.f32.mrb[0].mxu0
        %2120 = vmatprep.mubr.f32.mxu0 0.0
        %2121 = vmatmul.mubr.f32.gmra.mrb[0].mxu0 %v1930
        %v2122 = vpop.f32.mrb[0].mxu0
        %v2123 = vadd.f32 0.0, %v2122
        %v2124 = vpop.f32.mrb[0].mxu0
        %2125 = vmatprep.mubr.f32.mxu0 0.0
        %2126 = vmatmul.mubr.f32.gmra.mrb[0].mxu0 %v1933
        %v2127 = vpop.f32.mrb[0].mxu0
        %v2128 = vadd.f32 0.0, %v2127
        %v2129 = vpop.f32.mrb[0].mxu0
        %2130 = vmatprep.mubr.f32.mxu0 0.0
        %2131 = vmatmul.mubr.f32.gmra.mrb[0].mxu0 %v1936
        %v2132 = vpop.f32.mrb[0].mxu0
        %v2133 = vadd.f32 0.0, %v2132
        %v2134 = vpop.f32.mrb[0].mxu0
        %2135 = vmatprep.mubr.f32.mxu0 0.0
        %2136 = vmatmul.mubr.f32.gmra.mrb[0].mxu0 %v1939
        %v2137 = vpop.f32.mrb[0].mxu0
        %v2138 = vadd.f32 0.0, %v2137
        %v2139 = vpop.f32.mrb[0].mxu0
        %2140 = vmatprep.mubr.f32.mxu0 0.0
        %2141 = vmatmul.mubr.f32.gmra.mrb[0].mxu0 %v1942
        %v2142 = vpop.f32.mrb[0].mxu0
        %v2143 = vadd.f32 0.0, %v2142
        %v2144 = vpop.f32.mrb[0].mxu0
        %2145 = vmatprep.mubr.f32.mxu0 0.0
        %2146 = vmatmul.mubr.f32.gmra.mrb[0].mxu0 %v1945
        %v2147 = vpop.f32.mrb[0].mxu0
        %v2148 = vadd.f32 0.0, %v2147
        %v2149 = vpop.f32.mrb[0].mxu0
        %2150 = vmatprep.mubr.f32.mxu0 0.0
        %2151 = vmatmul.mubr.f32.gmra.mrb[0].mxu0 %v1948
        %v2152 = vpop.f32.mrb[0].mxu0
        %v2153 = vadd.f32 0.0, %v2152
        %v2154 = vpop.f32.mrb[0].mxu0
        %2155 = vmatprep.mubr.f32.mxu0 0.0
        %2156 = vmatmul.mubr.f32.gmra.mrb[0].mxu0 %v1951
        %v2157 = vpop.f32.mrb[0].mxu0
        %v2158 = vadd.f32 0.0, %v2157
        %v2159 = vpop.f32.mrb[0].mxu0
        %2160 = vmatprep.mubr.f32.mxu0 0.0
        %2161 = vmatmul.mubr.f32.gmra.mrb[0].mxu0 %v1954
        %v2162 = vpop.f32.mrb[0].mxu0
        %v2163 = vadd.f32 0.0, %v2162
        %v2164 = vpop.f32.mrb[0].mxu0
        %2165 = vmatprep.mubr.f32.mxu0 0.0
        %2166 = vmatmul.mubr.f32.gmra.mrb[0].mxu0 %v1957
        %v2167 = vpop.f32.mrb[0].mxu0
        %v2168 = vadd.f32 0.0, %v2167
        %v2169 = vpop.f32.mrb[0].mxu0
        %2170 = vmatprep.mubr.f32.mxu0 0.0
        %2171 = vmatmul.mubr.f32.gmra.mrb[0].mxu0 %v1960
        %v2172 = vpop.f32.mrb[0].mxu0
        %v2173 = vadd.f32 0.0, %v2172
        %v2174 = vpop.f32.mrb[0].mxu0
        %2175 = vmatprep.mubr.f32.mxu0 0.0
        %2176 = vmatmul.mubr.f32.gmra.mrb[0].mxu0 %v1963
        %v2177 = vpop.f32.mrb[0].mxu0
        %v2178 = vadd.f32 0.0, %v2177
        %v2179 = vpop.f32.mrb[0].mxu0
        %2180 = vmatprep.mubr.f32.mxu0 0.0
        %2181 = vmatmul.mubr.f32.gmra.mrb[0].mxu0 %v1966
        %v2182 = vpop.f32.mrb[0].mxu0
        %v2183 = vadd.f32 0.0, %v2182
        %v2184 = vpop.f32.mrb[0].mxu0
        %2185 = vmatprep.mubr.f32.mxu0 0.0
        %2186 = vmatmul.mubr.f32.gmra.mrb[0].mxu0 %v1969
        %v2187 = vpop.f32.mrb[0].mxu0
        %v2188 = vadd.f32 0.0, %v2187
        %v2189 = vpop.f32.mrb[0].mxu0
        %2190 = vmatprep.mubr.f32.mxu0 0.0
        %2191 = vmatmul.mubr.f32.gmra.mrb[0].mxu0 %v1972
        %v2192 = vpop.f32.mrb[0].mxu0
        %v2193 = vadd.f32 0.0, %v2192
        %v2194 = vpop.f32.mrb[0].mxu0
        %2195 = vmatprep.mubr.f32.mxu0 0.0
        %2196 = vmatmul.mubr.f32.gmra.mrb[0].mxu0 %v1975
        %v2197 = vpop.f32.mrb[0].mxu0
        %v2198 = vadd.f32 0.0, %v2197
        %v2199 = vpop.f32.mrb[0].mxu0
        %2200 = vmatprep.mubr.f32.mxu0 0.0
        %2201 = vmatmul.mubr.f32.gmra.mrb[0].mxu0 %v1978
        %v2202 = vpop.f32.mrb[0].mxu0
        %v2203 = vadd.f32 0.0, %v2202
        %v2204 = vpop.f32.mrb[0].mxu0
        %2205 = vmatprep.mubr.f32.mxu0 0.0
        %2206 = vmatmul.mubr.f32.gmra.mrb[0].mxu0 %v1981
        %v2207 = vpop.f32.mrb[0].mxu0
        %v2208 = vadd.f32 0.0, %v2207
        %v2209 = vpop.f32.mrb[0].mxu0
        %2210 = vdwg.mxu0
        %v2211 = vadd.f32 %v1820, %v2053
        %v2212 = vadd.f32 %v1821, %v2058
        %v2213 = vadd.f32 %v1822, %v2063
        %v2214 = vadd.f32 %v1823, %v2068
        %v2215 = vadd.f32 %v1824, %v2073
        %v2216 = vadd.f32 %v1825, %v2078
        %v2217 = vadd.f32 %v1826, %v2083
        %v2218 = vadd.f32 %v1827, %v2088
        %v2219 = vadd.f32 %v1828, %v2093
        %v2220 = vadd.f32 %v1829, %v2098
        %v2221 = vadd.f32 %v1830, %v2103
        %v2222 = vadd.f32 %v1831, %v2108
        %v2223 = vadd.f32 %v1832, %v2113
        %v2224 = vadd.f32 %v1833, %v2118
        %v2225 = vadd.f32 %v1834, %v2123
        %v2226 = vadd.f32 %v1835, %v2128
        %v2227 = vadd.f32 %v1836, %v2133
        %v2228 = vadd.f32 %v1837, %v2138
        %v2229 = vadd.f32 %v1838, %v2143
        %v2230 = vadd.f32 %v1839, %v2148
        %v2231 = vadd.f32 %v1840, %v2153
        %v2232 = vadd.f32 %v1841, %v2158
        %v2233 = vadd.f32 %v1842, %v2163
        %v2234 = vadd.f32 %v1843, %v2168
        %v2235 = vadd.f32 %v1844, %v2173
        %v2236 = vadd.f32 %v1845, %v2178
        %v2237 = vadd.f32 %v1846, %v2183
        %v2238 = vadd.f32 %v1847, %v2188
        %v2239 = vadd.f32 %v1848, %v2193
        %v2240 = vadd.f32 %v1849, %v2198
        %v2241 = vadd.f32 %v1850, %v2203
        %v2242 = vadd.f32 %v1851, %v2208
        %2243 = vst.msk [vmem:[#allocation3] sm:$0xff] %vm1403, %v2211
        %2244 = vst.msk [vmem:[#allocation3 + $0x8] sm:$0xff] %vm1403, %v2212
        %2245 = vst.msk [vmem:[#allocation3 + $0x10] sm:$0xff] %vm1403, %v2213
        %2246 = vst.msk [vmem:[#allocation3 + $0x18] sm:$0xff] %vm1403, %v2214
        %2247 = vst.msk [vmem:[#allocation3 + $0x20] sm:$0xff] %vm1403, %v2215
        %2248 = vst.msk [vmem:[#allocation3 + $0x28] sm:$0xff] %vm1403, %v2216
        %2249 = vst.msk [vmem:[#allocation3 + $0x30] sm:$0xff] %vm1403, %v2217
        %2250 = vst.msk [vmem:[#allocation3 + $0x38] sm:$0xff] %vm1403, %v2218
        %2251 = vst.msk [vmem:[#allocation3 + $0x40] sm:$0xff] %vm1403, %v2219
        %2252 = vst.msk [vmem:[#allocation3 + $0x48] sm:$0xff] %vm1403, %v2220
        %2253 = vst.msk [vmem:[#allocation3 + $0x50] sm:$0xff] %vm1403, %v2221
        %2254 = vst.msk [vmem:[#allocation3 + $0x58] sm:$0xff] %vm1403, %v2222
        %2255 = vst.msk [vmem:[#allocation3 + $0x60] sm:$0xff] %vm1403, %v2223
        %2256 = vst.msk [vmem:[#allocation3 + $0x68] sm:$0xff] %vm1403, %v2224
        %2257 = vst.msk [vmem:[#allocation3 + $0x70] sm:$0xff] %vm1403, %v2225
        %2258 = vst.msk [vmem:[#allocation3 + $0x78] sm:$0xff] %vm1403, %v2226
        %2259 = vst.msk [vmem:[#allocation3 + $0x80] sm:$0xff] %vm1403, %v2227
        %2260 = vst.msk [vmem:[#allocation3 + $0x88] sm:$0xff] %vm1403, %v2228
        %2261 = vst.msk [vmem:[#allocation3 + $0x90] sm:$0xff] %vm1403, %v2229
        %2262 = vst.msk [vmem:[#allocation3 + $0x98] sm:$0xff] %vm1403, %v2230
        %2263 = vst.msk [vmem:[#allocation3 + $0xa0] sm:$0xff] %vm1403, %v2231
        %2264 = vst.msk [vmem:[#allocation3 + $0xa8] sm:$0xff] %vm1403, %v2232
        %2265 = vst.msk [vmem:[#allocation3 + $0xb0] sm:$0xff] %vm1403, %v2233
        %2266 = vst.msk [vmem:[#allocation3 + $0xb8] sm:$0xff] %vm1403, %v2234
        %2267 = vst.msk [vmem:[#allocation3 + $0xc0] sm:$0xff] %vm1403, %v2235
        %2268 = vst.msk [vmem:[#allocation3 + $0xc8] sm:$0xff] %vm1403, %v2236
        %2269 = vst.msk [vmem:[#allocation3 + $0xd0] sm:$0xff] %vm1403, %v2237
        %2270 = vst.msk [vmem:[#allocation3 + $0xd8] sm:$0xff] %vm1403, %v2238
        %2271 = vst.msk [vmem:[#allocation3 + $0xe0] sm:$0xff] %vm1403, %v2239
        %2272 = vst.msk [vmem:[#allocation3 + $0xe8] sm:$0xff] %vm1403, %v2240
        %2273 = vst.msk [vmem:[#allocation3 + $0xf0] sm:$0xff] %vm1403, %v2241
        %2274 = vst.msk [vmem:[#allocation3 + $0xf8] sm:$0xff] %vm1403, %v2242
        %2275 = vst.msk [vmem:[#allocation2] sm:$0x1] %vm602, 0.0
        %2276 = vst.msk [vmem:[#allocation2 + $0x8] sm:$0x1] %vm602, 0.0
        %2277 = vst.msk [vmem:[#allocation2 + $0x10] sm:$0x1] %vm602, 0.0
        %2278 = vst.msk [vmem:[#allocation2 + $0x18] sm:$0x1] %vm602, 0.0
        %2279 = vst.msk [vmem:[#allocation2 + $0x20] sm:$0x1] %vm602, 0.0
        %2280 = vst.msk [vmem:[#allocation2 + $0x28] sm:$0x1] %vm602, 0.0
        %2281 = vst.msk [vmem:[#allocation2 + $0x30] sm:$0x1] %vm602, 0.0
        %2282 = vst.msk [vmem:[#allocation2 + $0x38] sm:$0x1] %vm602, 0.0
        %2283 = vst.msk [vmem:[#allocation2 + $0x40] sm:$0x1] %vm602, 0.0
        %2284 = vst.msk [vmem:[#allocation2 + $0x48] sm:$0x1] %vm602, 0.0
        %2285 = vst.msk [vmem:[#allocation2 + $0x50] sm:$0x1] %vm602, 0.0
        %2286 = vst.msk [vmem:[#allocation2 + $0x58] sm:$0x1] %vm602, 0.0
        %2287 = vst.msk [vmem:[#allocation2 + $0x60] sm:$0x1] %vm602, 0.0
        %2288 = vst.msk [vmem:[#allocation2 + $0x68] sm:$0x1] %vm602, 0.0
        %2289 = vst.msk [vmem:[#allocation2 + $0x70] sm:$0x1] %vm602, 0.0
        %2290 = vst.msk [vmem:[#allocation2 + $0x78] sm:$0x1] %vm602, 0.0
        %2291 = vst.msk [vmem:[#allocation2 + $0x80] sm:$0x1] %vm602, 0.0
        %2292 = vst.msk [vmem:[#allocation2 + $0x88] sm:$0x1] %vm602, 0.0
        %2293 = vst.msk [vmem:[#allocation2 + $0x90] sm:$0x1] %vm602, 0.0
        %2294 = vst.msk [vmem:[#allocation2 + $0x98] sm:$0x1] %vm602, 0.0
        %2295 = vst.msk [vmem:[#allocation2 + $0xa0] sm:$0x1] %vm602, 0.0
        %2296 = vst.msk [vmem:[#allocation2 + $0xa8] sm:$0x1] %vm602, 0.0
        %2297 = vst.msk [vmem:[#allocation2 + $0xb0] sm:$0x1] %vm602, 0.0
        %2298 = vst.msk [vmem:[#allocation2 + $0xb8] sm:$0x1] %vm602, 0.0
        %2299 = vst.msk [vmem:[#allocation2 + $0xc0] sm:$0x1] %vm602, 0.0
        %2300 = vst.msk [vmem:[#allocation2 + $0xc8] sm:$0x1] %vm602, 0.0
        %2301 = vst.msk [vmem:[#allocation2 + $0xd0] sm:$0x1] %vm602, 0.0
        %2302 = vst.msk [vmem:[#allocation2 + $0xd8] sm:$0x1] %vm602, 0.0
        %2303 = vst.msk [vmem:[#allocation2 + $0xe0] sm:$0x1] %vm602, 0.0
        %2304 = vst.msk [vmem:[#allocation2 + $0xe8] sm:$0x1] %vm602, 0.0
        %2305 = vst.msk [vmem:[#allocation2 + $0xf0] sm:$0x1] %vm602, 0.0
        %2306 = vst.msk [vmem:[#allocation2 + $0xf8] sm:$0x1] %vm602, 0.0
        %2307 = vst.msk [vmem:[#allocation2 + $0x1] sm:$0x7f] %vm635, %v553
        %2308 = vst.msk [vmem:[#allocation2 + $0x9] sm:$0x7f] %vm635, %v554
        %2309 = vst.msk [vmem:[#allocation2 + $0x11] sm:$0x7f] %vm635, %v555
        %2310 = vst.msk [vmem:[#allocation2 + $0x19] sm:$0x7f] %vm635, %v556
        %2311 = vst.msk [vmem:[#allocation2 + $0x21] sm:$0x7f] %vm635, %v557
        %2312 = vst.msk [vmem:[#allocation2 + $0x29] sm:$0x7f] %vm635, %v558
        %2313 = vst.msk [vmem:[#allocation2 + $0x31] sm:$0x7f] %vm635, %v559
        %2314 = vst.msk [vmem:[#allocation2 + $0x39] sm:$0x7f] %vm635, %v560
        %2315 = vst.msk [vmem:[#allocation2 + $0x41] sm:$0x7f] %vm635, %v561
        %2316 = vst.msk [vmem:[#allocation2 + $0x49] sm:$0x7f] %vm635, %v562
        %2317 = vst.msk [vmem:[#allocation2 + $0x51] sm:$0x7f] %vm635, %v563
        %2318 = vst.msk [vmem:[#allocation2 + $0x59] sm:$0x7f] %vm635, %v564
        %2319 = vst.msk [vmem:[#allocation2 + $0x61] sm:$0x7f] %vm635, %v565
        %2320 = vst.msk [vmem:[#allocation2 + $0x69] sm:$0x7f] %vm635, %v566
        %2321 = vst.msk [vmem:[#allocation2 + $0x71] sm:$0x7f] %vm635, %v567
        %2322 = vst.msk [vmem:[#allocation2 + $0x79] sm:$0x7f] %vm635, %v568
        %2323 = vst.msk [vmem:[#allocation2 + $0x81] sm:$0x7f] %vm635, %v569
        %2324 = vst.msk [vmem:[#allocation2 + $0x89] sm:$0x7f] %vm635, %v570
        %2325 = vst.msk [vmem:[#allocation2 + $0x91] sm:$0x7f] %vm635, %v571
        %2326 = vst.msk [vmem:[#allocation2 + $0x99] sm:$0x7f] %vm635, %v572
        %2327 = vst.msk [vmem:[#allocation2 + $0xa1] sm:$0x7f] %vm635, %v573
        %2328 = vst.msk [vmem:[#allocation2 + $0xa9] sm:$0x7f] %vm635, %v574
        %2329 = vst.msk [vmem:[#allocation2 + $0xb1] sm:$0x7f] %vm635, %v575
        %2330 = vst.msk [vmem:[#allocation2 + $0xb9] sm:$0x7f] %vm635, %v576
        %2331 = vst.msk [vmem:[#allocation2 + $0xc1] sm:$0x7f] %vm635, %v577
        %2332 = vst.msk [vmem:[#allocation2 + $0xc9] sm:$0x7f] %vm635, %v578
        %2333 = vst.msk [vmem:[#allocation2 + $0xd1] sm:$0x7f] %vm635, %v579
        %2334 = vst.msk [vmem:[#allocation2 + $0xd9] sm:$0x7f] %vm635, %v580
        %2335 = vst.msk [vmem:[#allocation2 + $0xe1] sm:$0x7f] %vm635, %v581
        %2336 = vst.msk [vmem:[#allocation2 + $0xe9] sm:$0x7f] %vm635, %v582
        %2337 = vst.msk [vmem:[#allocation2 + $0xf1] sm:$0x7f] %vm635, %v583
        %2338 = vst.msk [vmem:[#allocation2 + $0xf9] sm:$0x7f] %vm635, %v584
        %2347 = vrot.lane.b32.xlu0 %v523, 4
        %v2348 = vpop.permute.xlu0 %2347
        %2349 = vrot.lane.b32.xlu0 %v527, 4
        %v2350 = vpop.permute.xlu0 %2349
        %2351 = vrot.lane.b32.xlu0 %v531, 4
        %v2352 = vpop.permute.xlu0 %2351
        %2353 = vrot.lane.b32.xlu0 %v535, 4
        %v2354 = vpop.permute.xlu0 %2353
        %2355 = vrot.lane.b32.xlu0 %v539, 4
        %v2356 = vpop.permute.xlu0 %2355
        %2357 = vrot.lane.b32.xlu0 %v543, 4
        %v2358 = vpop.permute.xlu0 %2357
        %2359 = vrot.lane.b32.xlu0 %v547, 4
        %v2360 = vpop.permute.xlu0 %2359
        %2361 = vrot.lane.b32.xlu0 %v551, 4
        %v2362 = vpop.permute.xlu0 %2361
        %2371 = vst.msk [vmem:[#allocation2] sm:$0xff] %vm701, %v776
        %2372 = vst.msk [vmem:[#allocation2 + $0x8] sm:$0xff] %vm701, %v778
        %2373 = vst.msk [vmem:[#allocation2 + $0x10] sm:$0xff] %vm701, %v780
        %2374 = vst.msk [vmem:[#allocation2 + $0x18] sm:$0xff] %vm701, %v2348
        %2375 = vst.msk [vmem:[#allocation2 + $0x20] sm:$0xff] %vm701, %v782
        %2376 = vst.msk [vmem:[#allocation2 + $0x28] sm:$0xff] %vm701, %v784
        %2377 = vst.msk [vmem:[#allocation2 + $0x30] sm:$0xff] %vm701, %v786
        %2378 = vst.msk [vmem:[#allocation2 + $0x38] sm:$0xff] %vm701, %v2350
        %2379 = vst.msk [vmem:[#allocation2 + $0x40] sm:$0xff] %vm701, %v788
        %2380 = vst.msk [vmem:[#allocation2 + $0x48] sm:$0xff] %vm701, %v790
        %2381 = vst.msk [vmem:[#allocation2 + $0x50] sm:$0xff] %vm701, %v792
        %2382 = vst.msk [vmem:[#allocation2 + $0x58] sm:$0xff] %vm701, %v2352
        %2383 = vst.msk [vmem:[#allocation2 + $0x60] sm:$0xff] %vm701, %v794
        %2384 = vst.msk [vmem:[#allocation2 + $0x68] sm:$0xff] %vm701, %v796
        %2385 = vst.msk [vmem:[#allocation2 + $0x70] sm:$0xff] %vm701, %v798
        %2386 = vst.msk [vmem:[#allocation2 + $0x78] sm:$0xff] %vm701, %v2354
        %2387 = vst.msk [vmem:[#allocation2 + $0x80] sm:$0xff] %vm701, %v800
        %2388 = vst.msk [vmem:[#allocation2 + $0x88] sm:$0xff] %vm701, %v802
        %2389 = vst.msk [vmem:[#allocation2 + $0x90] sm:$0xff] %vm701, %v804
        %2390 = vst.msk [vmem:[#allocation2 + $0x98] sm:$0xff] %vm701, %v2356
        %2391 = vst.msk [vmem:[#allocation2 + $0xa0] sm:$0xff] %vm701, %v806
        %2392 = vst.msk [vmem:[#allocation2 + $0xa8] sm:$0xff] %vm701, %v808
        %2393 = vst.msk [vmem:[#allocation2 + $0xb0] sm:$0xff] %vm701, %v810
        %2394 = vst.msk [vmem:[#allocation2 + $0xb8] sm:$0xff] %vm701, %v2358
        %2395 = vst.msk [vmem:[#allocation2 + $0xc0] sm:$0xff] %vm701, %v812
        %2396 = vst.msk [vmem:[#allocation2 + $0xc8] sm:$0xff] %vm701, %v814
        %2397 = vst.msk [vmem:[#allocation2 + $0xd0] sm:$0xff] %vm701, %v816
        %2398 = vst.msk [vmem:[#allocation2 + $0xd8] sm:$0xff] %vm701, %v2360
        %2399 = vst.msk [vmem:[#allocation2 + $0xe0] sm:$0xff] %vm701, %v818
        %2400 = vst.msk [vmem:[#allocation2 + $0xe8] sm:$0xff] %vm701, %v820
        %2401 = vst.msk [vmem:[#allocation2 + $0xf0] sm:$0xff] %vm701, %v822
        %2402 = vst.msk [vmem:[#allocation2 + $0xf8] sm:$0xff] %vm701, %v2362
        %2411 = vrot.lane.b32.xlu0 %v556, 8
        %v2412 = vpop.permute.xlu0 %2411
        %2413 = vrot.lane.b32.xlu0 %v560, 8
        %v2414 = vpop.permute.xlu0 %2413
        %2415 = vrot.lane.b32.xlu0 %v564, 8
        %v2416 = vpop.permute.xlu0 %2415
        %2417 = vrot.lane.b32.xlu0 %v568, 8
        %v2418 = vpop.permute.xlu0 %2417
        %2419 = vrot.lane.b32.xlu0 %v572, 8
        %v2420 = vpop.permute.xlu0 %2419
        %2421 = vrot.lane.b32.xlu0 %v576, 8
        %v2422 = vpop.permute.xlu0 %2421
        %2423 = vrot.lane.b32.xlu0 %v580, 8
        %v2424 = vpop.permute.xlu0 %2423
        %2425 = vrot.lane.b32.xlu0 %v584, 8
        %v2426 = vpop.permute.xlu0 %2425
        %2435 = vst.msk [vmem:[#allocation2] sm:$0xff] %vm742, %v896
        %2436 = vst.msk [vmem:[#allocation2 + $0x8] sm:$0xff] %vm742, %v898
        %2437 = vst.msk [vmem:[#allocation2 + $0x10] sm:$0xff] %vm742, %v900
        %2438 = vst.msk [vmem:[#allocation2 + $0x18] sm:$0xff] %vm742, %v2412
        %2439 = vst.msk [vmem:[#allocation2 + $0x20] sm:$0xff] %vm742, %v902
        %2440 = vst.msk [vmem:[#allocation2 + $0x28] sm:$0xff] %vm742, %v904
        %2441 = vst.msk [vmem:[#allocation2 + $0x30] sm:$0xff] %vm742, %v906
        %2442 = vst.msk [vmem:[#allocation2 + $0x38] sm:$0xff] %vm742, %v2414
        %2443 = vst.msk [vmem:[#allocation2 + $0x40] sm:$0xff] %vm742, %v908
        %2444 = vst.msk [vmem:[#allocation2 + $0x48] sm:$0xff] %vm742, %v910
        %2445 = vst.msk [vmem:[#allocation2 + $0x50] sm:$0xff] %vm742, %v912
        %2446 = vst.msk [vmem:[#allocation2 + $0x58] sm:$0xff] %vm742, %v2416
        %2447 = vst.msk [vmem:[#allocation2 + $0x60] sm:$0xff] %vm742, %v914
        %2448 = vst.msk [vmem:[#allocation2 + $0x68] sm:$0xff] %vm742, %v916
        %2449 = vst.msk [vmem:[#allocation2 + $0x70] sm:$0xff] %vm742, %v918
        %2450 = vst.msk [vmem:[#allocation2 + $0x78] sm:$0xff] %vm742, %v2418
        %2451 = vst.msk [vmem:[#allocation2 + $0x80] sm:$0xff] %vm742, %v920
        %2452 = vst.msk [vmem:[#allocation2 + $0x88] sm:$0xff] %vm742, %v922
        %2453 = vst.msk [vmem:[#allocation2 + $0x90] sm:$0xff] %vm742, %v924
        %2454 = vst.msk [vmem:[#allocation2 + $0x98] sm:$0xff] %vm742, %v2420
        %2455 = vst.msk [vmem:[#allocation2 + $0xa0] sm:$0xff] %vm742, %v926
        %2456 = vst.msk [vmem:[#allocation2 + $0xa8] sm:$0xff] %vm742, %v928
        %2457 = vst.msk [vmem:[#allocation2 + $0xb0] sm:$0xff] %vm742, %v930
        %2458 = vst.msk [vmem:[#allocation2 + $0xb8] sm:$0xff] %vm742, %v2422
        %2459 = vst.msk [vmem:[#allocation2 + $0xc0] sm:$0xff] %vm742, %v932
        %2460 = vst.msk [vmem:[#allocation2 + $0xc8] sm:$0xff] %vm742, %v934
        %2461 = vst.msk [vmem:[#allocation2 + $0xd0] sm:$0xff] %vm742, %v936
        %2462 = vst.msk [vmem:[#allocation2 + $0xd8] sm:$0xff] %vm742, %v2424
        %2463 = vst.msk [vmem:[#allocation2 + $0xe0] sm:$0xff] %vm742, %v938
        %2464 = vst.msk [vmem:[#allocation2 + $0xe8] sm:$0xff] %vm742, %v940
        %2465 = vst.msk [vmem:[#allocation2 + $0xf0] sm:$0xff] %vm742, %v942
        %2466 = vst.msk [vmem:[#allocation2 + $0xf8] sm:$0xff] %vm742, %v2426
        %v2467 = vld [vmem:[#allocation3] sm:$0xff]
        %v2468 = vld [vmem:[#allocation3 + $0x8] sm:$0xff]
        %v2469 = vld [vmem:[#allocation3 + $0x10] sm:$0xff]
        %v2470 = vld [vmem:[#allocation3 + $0x18] sm:$0xff]
        %v2471 = vld [vmem:[#allocation3 + $0x20] sm:$0xff]
        %v2472 = vld [vmem:[#allocation3 + $0x28] sm:$0xff]
        %v2473 = vld [vmem:[#allocation3 + $0x30] sm:$0xff]
        %v2474 = vld [vmem:[#allocation3 + $0x38] sm:$0xff]
        %v2475 = vld [vmem:[#allocation3 + $0x40] sm:$0xff]
        %v2476 = vld [vmem:[#allocation3 + $0x48] sm:$0xff]
        %v2477 = vld [vmem:[#allocation3 + $0x50] sm:$0xff]
        %v2478 = vld [vmem:[#allocation3 + $0x58] sm:$0xff]
        %v2479 = vld [vmem:[#allocation3 + $0x60] sm:$0xff]
        %v2480 = vld [vmem:[#allocation3 + $0x68] sm:$0xff]
        %v2481 = vld [vmem:[#allocation3 + $0x70] sm:$0xff]
        %v2482 = vld [vmem:[#allocation3 + $0x78] sm:$0xff]
        %v2483 = vld [vmem:[#allocation3 + $0x80] sm:$0xff]
        %v2484 = vld [vmem:[#allocation3 + $0x88] sm:$0xff]
        %v2485 = vld [vmem:[#allocation3 + $0x90] sm:$0xff]
        %v2486 = vld [vmem:[#allocation3 + $0x98] sm:$0xff]
        %v2487 = vld [vmem:[#allocation3 + $0xa0] sm:$0xff]
        %v2488 = vld [vmem:[#allocation3 + $0xa8] sm:$0xff]
        %v2489 = vld [vmem:[#allocation3 + $0xb0] sm:$0xff]
        %v2490 = vld [vmem:[#allocation3 + $0xb8] sm:$0xff]
        %v2491 = vld [vmem:[#allocation3 + $0xc0] sm:$0xff]
        %v2492 = vld [vmem:[#allocation3 + $0xc8] sm:$0xff]
        %v2493 = vld [vmem:[#allocation3 + $0xd0] sm:$0xff]
        %v2494 = vld [vmem:[#allocation3 + $0xd8] sm:$0xff]
        %v2495 = vld [vmem:[#allocation3 + $0xe0] sm:$0xff]
        %v2496 = vld [vmem:[#allocation3 + $0xe8] sm:$0xff]
        %v2497 = vld [vmem:[#allocation3 + $0xf0] sm:$0xff]
        %v2498 = vld [vmem:[#allocation3 + $0xf8] sm:$0xff]
        %v2499 = vld [vmem:[#allocation2] sm:$0xff]
        %v2500 = vld [vmem:[#allocation2 + $0x8] sm:$0xff]
        %v2501 = vld [vmem:[#allocation2 + $0x10] sm:$0xff]
        %v2502 = vld [vmem:[#allocation2 + $0x18] sm:$0xff]
        %v2503 = vld [vmem:[#allocation2 + $0x20] sm:$0xff]
        %v2504 = vld [vmem:[#allocation2 + $0x28] sm:$0xff]
        %v2505 = vld [vmem:[#allocation2 + $0x30] sm:$0xff]
        %v2506 = vld [vmem:[#allocation2 + $0x38] sm:$0xff]
        %v2507 = vld [vmem:[#allocation2 + $0x40] sm:$0xff]
        %v2508 = vld [vmem:[#allocation2 + $0x48] sm:$0xff]
        %v2509 = vld [vmem:[#allocation2 + $0x50] sm:$0xff]
        %v2510 = vld [vmem:[#allocation2 + $0x58] sm:$0xff]
        %v2511 = vld [vmem:[#allocation2 + $0x60] sm:$0xff]
        %v2512 = vld [vmem:[#allocation2 + $0x68] sm:$0xff]
        %v2513 = vld [vmem:[#allocation2 + $0x70] sm:$0xff]
        %v2514 = vld [vmem:[#allocation2 + $0x78] sm:$0xff]
        %v2515 = vld [vmem:[#allocation2 + $0x80] sm:$0xff]
        %v2516 = vld [vmem:[#allocation2 + $0x88] sm:$0xff]
        %v2517 = vld [vmem:[#allocation2 + $0x90] sm:$0xff]
        %v2518 = vld [vmem:[#allocation2 + $0x98] sm:$0xff]
        %v2519 = vld [vmem:[#allocation2 + $0xa0] sm:$0xff]
        %v2520 = vld [vmem:[#allocation2 + $0xa8] sm:$0xff]
        %v2521 = vld [vmem:[#allocation2 + $0xb0] sm:$0xff]
        %v2522 = vld [vmem:[#allocation2 + $0xb8] sm:$0xff]
        %v2523 = vld [vmem:[#allocation2 + $0xc0] sm:$0xff]
        %v2524 = vld [vmem:[#allocation2 + $0xc8] sm:$0xff]
        %v2525 = vld [vmem:[#allocation2 + $0xd0] sm:$0xff]
        %v2526 = vld [vmem:[#allocation2 + $0xd8] sm:$0xff]
        %v2527 = vld [vmem:[#allocation2 + $0xe0] sm:$0xff]
        %v2528 = vld [vmem:[#allocation2 + $0xe8] sm:$0xff]
        %v2529 = vld [vmem:[#allocation2 + $0xf0] sm:$0xff]
        %v2530 = vld [vmem:[#allocation2 + $0xf8] sm:$0xff]
        %s2531 = scalar_lea.vmem [#allocation10], 32
        %v2532 = vld [vmem:[%s2531] sm:$0xff]
        %v2533 = vld [vmem:[%s2531 + $0x8] sm:$0xf]
        %v2535 = vsel %vm1038, %v2499, 0
        %v2538 = vsel %vm1038, %v2500, 0
        %v2541 = vsel %vm1038, %v2501, 0
        %v2544 = vsel %vm1038, %v2502, 0
        %v2547 = vsel %vm1038, %v2503, 0
        %v2550 = vsel %vm1038, %v2504, 0
        %v2553 = vsel %vm1038, %v2505, 0
        %v2556 = vsel %vm1038, %v2506, 0
        %v2559 = vsel %vm1038, %v2507, 0
        %v2562 = vsel %vm1038, %v2508, 0
        %v2565 = vsel %vm1038, %v2509, 0
        %v2568 = vsel %vm1038, %v2510, 0
        %v2571 = vsel %vm1038, %v2511, 0
        %v2574 = vsel %vm1038, %v2512, 0
        %v2577 = vsel %vm1038, %v2513, 0
        %v2580 = vsel %vm1038, %v2514, 0
        %v2583 = vsel %vm1038, %v2515, 0
        %v2586 = vsel %vm1038, %v2516, 0
        %v2589 = vsel %vm1038, %v2517, 0
        %v2592 = vsel %vm1038, %v2518, 0
        %v2595 = vsel %vm1038, %v2519, 0
        %v2598 = vsel %vm1038, %v2520, 0
        %v2601 = vsel %vm1038, %v2521, 0
        %v2604 = vsel %vm1038, %v2522, 0
        %v2607 = vsel %vm1038, %v2523, 0
        %v2610 = vsel %vm1038, %v2524, 0
        %v2613 = vsel %vm1038, %v2525, 0
        %v2616 = vsel %vm1038, %v2526, 0
        %v2619 = vsel %vm1038, %v2527, 0
        %v2622 = vsel %vm1038, %v2528, 0
        %v2625 = vsel %vm1038, %v2529, 0
        %v2628 = vsel %vm1038, %v2530, 0
        %v2631 = vsel %vm1135, %v2533, 0
        %2633 = vmatprep.subr.mxu0 0.0
        %2634 = vmatpush1.msra.mxu0 %v2532
        %2635 = vmatprep.subr.mxu0 0.0
        %2636 = vmatpush1.msra.mxu0 %v2631
        %2637 = vmatprep.subr.mxu0 0.0
        %2638 = vmatpush1.msra.mxu0 0.0
        %2639 = vmatprep.subr.mxu0 0.0
        %2640 = vmatpush1.msra.mxu0 0.0
        %2641 = vmatprep.subr.mxu0 0.0
        %2642 = vmatpush1.msra.mxu0 0.0
        %2643 = vmatprep.subr.mxu0 0.0
        %2644 = vmatpush1.msra.mxu0 0.0
        %2645 = vmatprep.subr.mxu0 0.0
        %2646 = vmatpush1.msra.mxu0 0.0
        %2647 = vmatprep.subr.mxu0 0.0
        %2648 = vmatpush1.msra.mxu0 0.0
        %2649 = vmatprep.subr.mxu0 0.0
        %2650 = vmatpush1.msra.mxu0 0.0
        %2651 = vmatprep.subr.mxu0 0.0
        %2652 = vmatpush1.msra.mxu0 0.0
        %2653 = vmatprep.subr.mxu0 0.0
        %2654 = vmatpush1.msra.mxu0 0.0
        %2655 = vmatprep.subr.mxu0 0.0
        %2656 = vmatpush1.msra.mxu0 0.0
        %2657 = vmatprep.subr.mxu0 0.0
        %2658 = vmatpush1.msra.mxu0 0.0
        %2659 = vmatprep.subr.mxu0 0.0
        %2660 = vmatpush1.msra.mxu0 0.0
        %2661 = vmatprep.subr.mxu0 0.0
        %2662 = vmatpush1.msra.mxu0 0.0
        %2663 = vmatprep.subr.mxu0 0.0
        %2664 = vmatpush1.msra.mxu0 0.0
        %2665 = vmatprep.subr.mxu0 0.0
        %2666 = vmatpush1.msra.mxu0 0.0
        %2667 = vmatprep.subr.mxu0 0.0
        %2668 = vmatpush1.msra.mxu0 0.0
        %2669 = vmatprep.subr.mxu0 0.0
        %2670 = vmatpush1.msra.mxu0 0.0
        %2671 = vmatprep.subr.mxu0 0.0
        %2672 = vmatpush1.msra.mxu0 0.0
        %2673 = vmatprep.subr.mxu0 0.0
        %2674 = vmatpush1.msra.mxu0 0.0
        %2675 = vmatprep.subr.mxu0 0.0
        %2676 = vmatpush1.msra.mxu0 0.0
        %2677 = vmatprep.subr.mxu0 0.0
        %2678 = vmatpush1.msra.mxu0 0.0
        %2679 = vmatprep.subr.mxu0 0.0
        %2680 = vmatpush1.msra.mxu0 0.0
        %2681 = vmatprep.subr.mxu0 0.0
        %2682 = vmatpush1.msra.mxu0 0.0
        %2683 = vmatprep.subr.mxu0 0.0
        %2684 = vmatpush1.msra.mxu0 0.0
        %2685 = vmatprep.subr.mxu0 0.0
        %2686 = vmatpush1.msra.mxu0 0.0
        %2687 = vmatprep.subr.mxu0 0.0
        %2688 = vmatpush1.msra.mxu0 0.0
        %2689 = vmatprep.subr.mxu0 0.0
        %2690 = vmatpush1.msra.mxu0 0.0
        %2691 = vmatprep.subr.mxu0 0.0
        %2692 = vmatpush1.msra.mxu0 0.0
        %2693 = vmatprep.subr.mxu0 0.0
        %2694 = vmatpush1.msra.mxu0 0.0
        %2695 = vmatprep.subr.mxu0 0.0
        %2696 = vmatpush1.msra.mxu0 0.0
        %2697 = vmatprep.mubr.f32.mxu0 0.0
        %2698 = vmatmul.mubr.f32.gmra.mrb[0].mxu0 %v2535
        %v2699 = vpop.f32.mrb[0].mxu0
        %v2700 = vadd.f32 0.0, %v2699
        %v2701 = vpop.f32.mrb[0].mxu0
        %2702 = vmatprep.mubr.f32.mxu0 0.0
        %2703 = vmatmul.mubr.f32.gmra.mrb[0].mxu0 %v2538
        %v2704 = vpop.f32.mrb[0].mxu0
        %v2705 = vadd.f32 0.0, %v2704
        %v2706 = vpop.f32.mrb[0].mxu0
        %2707 = vmatprep.mubr.f32.mxu0 0.0
        %2708 = vmatmul.mubr.f32.gmra.mrb[0].mxu0 %v2541
        %v2709 = vpop.f32.mrb[0].mxu0
        %v2710 = vadd.f32 0.0, %v2709
        %v2711 = vpop.f32.mrb[0].mxu0
        %2712 = vmatprep.mubr.f32.mxu0 0.0
        %2713 = vmatmul.mubr.f32.gmra.mrb[0].mxu0 %v2544
        %v2714 = vpop.f32.mrb[0].mxu0
        %v2715 = vadd.f32 0.0, %v2714
        %v2716 = vpop.f32.mrb[0].mxu0
        %2717 = vmatprep.mubr.f32.mxu0 0.0
        %2718 = vmatmul.mubr.f32.gmra.mrb[0].mxu0 %v2547
        %v2719 = vpop.f32.mrb[0].mxu0
        %v2720 = vadd.f32 0.0, %v2719
        %v2721 = vpop.f32.mrb[0].mxu0
        %2722 = vmatprep.mubr.f32.mxu0 0.0
        %2723 = vmatmul.mubr.f32.gmra.mrb[0].mxu0 %v2550
        %v2724 = vpop.f32.mrb[0].mxu0
        %v2725 = vadd.f32 0.0, %v2724
        %v2726 = vpop.f32.mrb[0].mxu0
        %2727 = vmatprep.mubr.f32.mxu0 0.0
        %2728 = vmatmul.mubr.f32.gmra.mrb[0].mxu0 %v2553
        %v2729 = vpop.f32.mrb[0].mxu0
        %v2730 = vadd.f32 0.0, %v2729
        %v2731 = vpop.f32.mrb[0].mxu0
        %2732 = vmatprep.mubr.f32.mxu0 0.0
        %2733 = vmatmul.mubr.f32.gmra.mrb[0].mxu0 %v2556
        %v2734 = vpop.f32.mrb[0].mxu0
        %v2735 = vadd.f32 0.0, %v2734
        %v2736 = vpop.f32.mrb[0].mxu0
        %2737 = vmatprep.mubr.f32.mxu0 0.0
        %2738 = vmatmul.mubr.f32.gmra.mrb[0].mxu0 %v2559
        %v2739 = vpop.f32.mrb[0].mxu0
        %v2740 = vadd.f32 0.0, %v2739
        %v2741 = vpop.f32.mrb[0].mxu0
        %2742 = vmatprep.mubr.f32.mxu0 0.0
        %2743 = vmatmul.mubr.f32.gmra.mrb[0].mxu0 %v2562
        %v2744 = vpop.f32.mrb[0].mxu0
        %v2745 = vadd.f32 0.0, %v2744
        %v2746 = vpop.f32.mrb[0].mxu0
        %2747 = vmatprep.mubr.f32.mxu0 0.0
        %2748 = vmatmul.mubr.f32.gmra.mrb[0].mxu0 %v2565
        %v2749 = vpop.f32.mrb[0].mxu0
        %v2750 = vadd.f32 0.0, %v2749
        %v2751 = vpop.f32.mrb[0].mxu0
        %2752 = vmatprep.mubr.f32.mxu0 0.0
        %2753 = vmatmul.mubr.f32.gmra.mrb[0].mxu0 %v2568
        %v2754 = vpop.f32.mrb[0].mxu0
        %v2755 = vadd.f32 0.0, %v2754
        %v2756 = vpop.f32.mrb[0].mxu0
        %2757 = vmatprep.mubr.f32.mxu0 0.0
        %2758 = vmatmul.mubr.f32.gmra.mrb[0].mxu0 %v2571
        %v2759 = vpop.f32.mrb[0].mxu0
        %v2760 = vadd.f32 0.0, %v2759
        %v2761 = vpop.f32.mrb[0].mxu0
        %2762 = vmatprep.mubr.f32.mxu0 0.0
        %2763 = vmatmul.mubr.f32.gmra.mrb[0].mxu0 %v2574
        %v2764 = vpop.f32.mrb[0].mxu0
        %v2765 = vadd.f32 0.0, %v2764
        %v2766 = vpop.f32.mrb[0].mxu0
        %2767 = vmatprep.mubr.f32.mxu0 0.0
        %2768 = vmatmul.mubr.f32.gmra.mrb[0].mxu0 %v2577
        %v2769 = vpop.f32.mrb[0].mxu0
        %v2770 = vadd.f32 0.0, %v2769
        %v2771 = vpop.f32.mrb[0].mxu0
        %2772 = vmatprep.mubr.f32.mxu0 0.0
        %2773 = vmatmul.mubr.f32.gmra.mrb[0].mxu0 %v2580
        %v2774 = vpop.f32.mrb[0].mxu0
        %v2775 = vadd.f32 0.0, %v2774
        %v2776 = vpop.f32.mrb[0].mxu0
        %2777 = vmatprep.mubr.f32.mxu0 0.0
        %2778 = vmatmul.mubr.f32.gmra.mrb[0].mxu0 %v2583
        %v2779 = vpop.f32.mrb[0].mxu0
        %v2780 = vadd.f32 0.0, %v2779
        %v2781 = vpop.f32.mrb[0].mxu0
        %2782 = vmatprep.mubr.f32.mxu0 0.0
        %2783 = vmatmul.mubr.f32.gmra.mrb[0].mxu0 %v2586
        %v2784 = vpop.f32.mrb[0].mxu0
        %v2785 = vadd.f32 0.0, %v2784
        %v2786 = vpop.f32.mrb[0].mxu0
        %2787 = vmatprep.mubr.f32.mxu0 0.0
        %2788 = vmatmul.mubr.f32.gmra.mrb[0].mxu0 %v2589
        %v2789 = vpop.f32.mrb[0].mxu0
        %v2790 = vadd.f32 0.0, %v2789
        %v2791 = vpop.f32.mrb[0].mxu0
        %2792 = vmatprep.mubr.f32.mxu0 0.0
        %2793 = vmatmul.mubr.f32.gmra.mrb[0].mxu0 %v2592
        %v2794 = vpop.f32.mrb[0].mxu0
        %v2795 = vadd.f32 0.0, %v2794
        %v2796 = vpop.f32.mrb[0].mxu0
        %2797 = vmatprep.mubr.f32.mxu0 0.0
        %2798 = vmatmul.mubr.f32.gmra.mrb[0].mxu0 %v2595
        %v2799 = vpop.f32.mrb[0].mxu0
        %v2800 = vadd.f32 0.0, %v2799
        %v2801 = vpop.f32.mrb[0].mxu0
        %2802 = vmatprep.mubr.f32.mxu0 0.0
        %2803 = vmatmul.mubr.f32.gmra.mrb[0].mxu0 %v2598
        %v2804 = vpop.f32.mrb[0].mxu0
        %v2805 = vadd.f32 0.0, %v2804
        %v2806 = vpop.f32.mrb[0].mxu0
        %2807 = vmatprep.mubr.f32.mxu0 0.0
        %2808 = vmatmul.mubr.f32.gmra.mrb[0].mxu0 %v2601
        %v2809 = vpop.f32.mrb[0].mxu0
        %v2810 = vadd.f32 0.0, %v2809
        %v2811 = vpop.f32.mrb[0].mxu0
        %2812 = vmatprep.mubr.f32.mxu0 0.0
        %2813 = vmatmul.mubr.f32.gmra.mrb[0].mxu0 %v2604
        %v2814 = vpop.f32.mrb[0].mxu0
        %v2815 = vadd.f32 0.0, %v2814
        %v2816 = vpop.f32.mrb[0].mxu0
        %2817 = vmatprep.mubr.f32.mxu0 0.0
        %2818 = vmatmul.mubr.f32.gmra.mrb[0].mxu0 %v2607
        %v2819 = vpop.f32.mrb[0].mxu0
        %v2820 = vadd.f32 0.0, %v2819
        %v2821 = vpop.f32.mrb[0].mxu0
        %2822 = vmatprep.mubr.f32.mxu0 0.0
        %2823 = vmatmul.mubr.f32.gmra.mrb[0].mxu0 %v2610
        %v2824 = vpop.f32.mrb[0].mxu0
        %v2825 = vadd.f32 0.0, %v2824
        %v2826 = vpop.f32.mrb[0].mxu0
        %2827 = vmatprep.mubr.f32.mxu0 0.0
        %2828 = vmatmul.mubr.f32.gmra.mrb[0].mxu0 %v2613
        %v2829 = vpop.f32.mrb[0].mxu0
        %v2830 = vadd.f32 0.0, %v2829
        %v2831 = vpop.f32.mrb[0].mxu0
        %2832 = vmatprep.mubr.f32.mxu0 0.0
        %2833 = vmatmul.mubr.f32.gmra.mrb[0].mxu0 %v2616
        %v2834 = vpop.f32.mrb[0].mxu0
        %v2835 = vadd.f32 0.0, %v2834
        %v2836 = vpop.f32.mrb[0].mxu0
        %2837 = vmatprep.mubr.f32.mxu0 0.0
        %2838 = vmatmul.mubr.f32.gmra.mrb[0].mxu0 %v2619
        %v2839 = vpop.f32.mrb[0].mxu0
        %v2840 = vadd.f32 0.0, %v2839
        %v2841 = vpop.f32.mrb[0].mxu0
        %2842 = vmatprep.mubr.f32.mxu0 0.0
        %2843 = vmatmul.mubr.f32.gmra.mrb[0].mxu0 %v2622
        %v2844 = vpop.f32.mrb[0].mxu0
        %v2845 = vadd.f32 0.0, %v2844
        %v2846 = vpop.f32.mrb[0].mxu0
        %2847 = vmatprep.mubr.f32.mxu0 0.0
        %2848 = vmatmul.mubr.f32.gmra.mrb[0].mxu0 %v2625
        %v2849 = vpop.f32.mrb[0].mxu0
        %v2850 = vadd.f32 0.0, %v2849
        %v2851 = vpop.f32.mrb[0].mxu0
        %2852 = vmatprep.mubr.f32.mxu0 0.0
        %2853 = vmatmul.mubr.f32.gmra.mrb[0].mxu0 %v2628
        %v2854 = vpop.f32.mrb[0].mxu0
        %v2855 = vadd.f32 0.0, %v2854
        %v2856 = vpop.f32.mrb[0].mxu0
        %2857 = vdwg.mxu0
        %v2858 = vadd.f32 %v2467, %v2700
        %v2859 = vadd.f32 %v2468, %v2705
        %v2860 = vadd.f32 %v2469, %v2710
        %v2861 = vadd.f32 %v2470, %v2715
        %v2862 = vadd.f32 %v2471, %v2720
        %v2863 = vadd.f32 %v2472, %v2725
        %v2864 = vadd.f32 %v2473, %v2730
        %v2865 = vadd.f32 %v2474, %v2735
        %v2866 = vadd.f32 %v2475, %v2740
        %v2867 = vadd.f32 %v2476, %v2745
        %v2868 = vadd.f32 %v2477, %v2750
        %v2869 = vadd.f32 %v2478, %v2755
        %v2870 = vadd.f32 %v2479, %v2760
        %v2871 = vadd.f32 %v2480, %v2765
        %v2872 = vadd.f32 %v2481, %v2770
        %v2873 = vadd.f32 %v2482, %v2775
        %v2874 = vadd.f32 %v2483, %v2780
        %v2875 = vadd.f32 %v2484, %v2785
        %v2876 = vadd.f32 %v2485, %v2790
        %v2877 = vadd.f32 %v2486, %v2795
        %v2878 = vadd.f32 %v2487, %v2800
        %v2879 = vadd.f32 %v2488, %v2805
        %v2880 = vadd.f32 %v2489, %v2810
        %v2881 = vadd.f32 %v2490, %v2815
        %v2882 = vadd.f32 %v2491, %v2820
        %v2883 = vadd.f32 %v2492, %v2825
        %v2884 = vadd.f32 %v2493, %v2830
        %v2885 = vadd.f32 %v2494, %v2835
        %v2886 = vadd.f32 %v2495, %v2840
        %v2887 = vadd.f32 %v2496, %v2845
        %v2888 = vadd.f32 %v2497, %v2850
        %v2889 = vadd.f32 %v2498, %v2855
        %2890 = vst.msk [vmem:[#allocation3] sm:$0xff] %vm1403, %v2858
        %2891 = vst.msk [vmem:[#allocation3 + $0x8] sm:$0xff] %vm1403, %v2859
        %2892 = vst.msk [vmem:[#allocation3 + $0x10] sm:$0xff] %vm1403, %v2860
        %2893 = vst.msk [vmem:[#allocation3 + $0x18] sm:$0xff] %vm1403, %v2861
        %2894 = vst.msk [vmem:[#allocation3 + $0x20] sm:$0xff] %vm1403, %v2862
        %2895 = vst.msk [vmem:[#allocation3 + $0x28] sm:$0xff] %vm1403, %v2863
        %2896 = vst.msk [vmem:[#allocation3 + $0x30] sm:$0xff] %vm1403, %v2864
        %2897 = vst.msk [vmem:[#allocation3 + $0x38] sm:$0xff] %vm1403, %v2865
        %2898 = vst.msk [vmem:[#allocation3 + $0x40] sm:$0xff] %vm1403, %v2866
        %2899 = vst.msk [vmem:[#allocation3 + $0x48] sm:$0xff] %vm1403, %v2867
        %2900 = vst.msk [vmem:[#allocation3 + $0x50] sm:$0xff] %vm1403, %v2868
        %2901 = vst.msk [vmem:[#allocation3 + $0x58] sm:$0xff] %vm1403, %v2869
        %2902 = vst.msk [vmem:[#allocation3 + $0x60] sm:$0xff] %vm1403, %v2870
        %2903 = vst.msk [vmem:[#allocation3 + $0x68] sm:$0xff] %vm1403, %v2871
        %2904 = vst.msk [vmem:[#allocation3 + $0x70] sm:$0xff] %vm1403, %v2872
        %2905 = vst.msk [vmem:[#allocation3 + $0x78] sm:$0xff] %vm1403, %v2873
        %2906 = vst.msk [vmem:[#allocation3 + $0x80] sm:$0xff] %vm1403, %v2874
        %2907 = vst.msk [vmem:[#allocation3 + $0x88] sm:$0xff] %vm1403, %v2875
        %2908 = vst.msk [vmem:[#allocation3 + $0x90] sm:$0xff] %vm1403, %v2876
        %2909 = vst.msk [vmem:[#allocation3 + $0x98] sm:$0xff] %vm1403, %v2877
        %2910 = vst.msk [vmem:[#allocation3 + $0xa0] sm:$0xff] %vm1403, %v2878
        %2911 = vst.msk [vmem:[#allocation3 + $0xa8] sm:$0xff] %vm1403, %v2879
        %2912 = vst.msk [vmem:[#allocation3 + $0xb0] sm:$0xff] %vm1403, %v2880
        %2913 = vst.msk [vmem:[#allocation3 + $0xb8] sm:$0xff] %vm1403, %v2881
        %2914 = vst.msk [vmem:[#allocation3 + $0xc0] sm:$0xff] %vm1403, %v2882
        %2915 = vst.msk [vmem:[#allocation3 + $0xc8] sm:$0xff] %vm1403, %v2883
        %2916 = vst.msk [vmem:[#allocation3 + $0xd0] sm:$0xff] %vm1403, %v2884
        %2917 = vst.msk [vmem:[#allocation3 + $0xd8] sm:$0xff] %vm1403, %v2885
        %2918 = vst.msk [vmem:[#allocation3 + $0xe0] sm:$0xff] %vm1403, %v2886
        %2919 = vst.msk [vmem:[#allocation3 + $0xe8] sm:$0xff] %vm1403, %v2887
        %2920 = vst.msk [vmem:[#allocation3 + $0xf0] sm:$0xff] %vm1403, %v2888
        %2921 = vst.msk [vmem:[#allocation3 + $0xf8] sm:$0xff] %vm1403, %v2889
        %v2922 = vld [vmem:[#allocation3] sm:$0xff]
        %v2923 = vld [vmem:[#allocation3 + $0x8] sm:$0xff]
        %v2924 = vld [vmem:[#allocation3 + $0x10] sm:$0xff]
        %v2925 = vld [vmem:[#allocation3 + $0x18] sm:$0xff]
        %v2926 = vld [vmem:[#allocation3 + $0x20] sm:$0xff]
        %v2927 = vld [vmem:[#allocation3 + $0x28] sm:$0xff]
        %v2928 = vld [vmem:[#allocation3 + $0x30] sm:$0xff]
        %v2929 = vld [vmem:[#allocation3 + $0x38] sm:$0xff]
        %v2930 = vld [vmem:[#allocation3 + $0x40] sm:$0xff]
        %v2931 = vld [vmem:[#allocation3 + $0x48] sm:$0xff]
        %v2932 = vld [vmem:[#allocation3 + $0x50] sm:$0xff]
        %v2933 = vld [vmem:[#allocation3 + $0x58] sm:$0xff]
        %v2934 = vld [vmem:[#allocation3 + $0x60] sm:$0xff]
        %v2935 = vld [vmem:[#allocation3 + $0x68] sm:$0xff]
        %v2936 = vld [vmem:[#allocation3 + $0x70] sm:$0xff]
        %v2937 = vld [vmem:[#allocation3 + $0x78] sm:$0xff]
        %v2938 = vld [vmem:[#allocation3 + $0x80] sm:$0xff]
        %v2939 = vld [vmem:[#allocation3 + $0x88] sm:$0xff]
        %v2940 = vld [vmem:[#allocation3 + $0x90] sm:$0xff]
        %v2941 = vld [vmem:[#allocation3 + $0x98] sm:$0xff]
        %v2942 = vld [vmem:[#allocation3 + $0xa0] sm:$0xff]
        %v2943 = vld [vmem:[#allocation3 + $0xa8] sm:$0xff]
        %v2944 = vld [vmem:[#allocation3 + $0xb0] sm:$0xff]
        %v2945 = vld [vmem:[#allocation3 + $0xb8] sm:$0xff]
        %v2946 = vld [vmem:[#allocation3 + $0xc0] sm:$0xff]
        %v2947 = vld [vmem:[#allocation3 + $0xc8] sm:$0xff]
        %v2948 = vld [vmem:[#allocation3 + $0xd0] sm:$0xff]
        %v2949 = vld [vmem:[#allocation3 + $0xd8] sm:$0xff]
        %v2950 = vld [vmem:[#allocation3 + $0xe0] sm:$0xff]
        %v2951 = vld [vmem:[#allocation3 + $0xe8] sm:$0xff]
        %v2952 = vld [vmem:[#allocation3 + $0xf0] sm:$0xff]
        %v2953 = vld [vmem:[#allocation3 + $0xf8] sm:$0xff]
        %s2954 = scalar_lea.vmem [#allocation13], 4
        %v2955 = vld [vmem:[%s2954] sm:$0xf]
        %v2957 = vsel %vm1403, %v2922, 0
        %v2960 = vsel %vm1403, %v2923, 0
        %v2963 = vsel %vm1403, %v2924, 0
        %v2966 = vsel %vm1403, %v2925, 0
        %v2969 = vsel %vm1403, %v2926, 0
        %v2972 = vsel %vm1403, %v2927, 0
        %v2975 = vsel %vm1403, %v2928, 0
        %v2978 = vsel %vm1403, %v2929, 0
        %v2981 = vsel %vm1403, %v2930, 0
        %v2984 = vsel %vm1403, %v2931, 0
        %v2987 = vsel %vm1403, %v2932, 0
        %v2990 = vsel %vm1403, %v2933, 0
        %v2993 = vsel %vm1403, %v2934, 0
        %v2996 = vsel %vm1403, %v2935, 0
        %v2999 = vsel %vm1403, %v2936, 0
        %v3002 = vsel %vm1403, %v2937, 0
        %v3005 = vsel %vm1403, %v2938, 0
        %v3008 = vsel %vm1403, %v2939, 0
        %v3011 = vsel %vm1403, %v2940, 0
        %v3014 = vsel %vm1403, %v2941, 0
        %v3017 = vsel %vm1403, %v2942, 0
        %v3020 = vsel %vm1403, %v2943, 0
        %v3023 = vsel %vm1403, %v2944, 0
        %v3026 = vsel %vm1403, %v2945, 0
        %v3029 = vsel %vm1403, %v2946, 0
        %v3032 = vsel %vm1403, %v2947, 0
        %v3035 = vsel %vm1403, %v2948, 0
        %v3038 = vsel %vm1403, %v2949, 0
        %v3041 = vsel %vm1403, %v2950, 0
        %v3044 = vsel %vm1403, %v2951, 0
        %v3047 = vsel %vm1403, %v2952, 0
        %v3050 = vsel %vm1403, %v2953, 0
        %v3053 = vsel %vm1135, %v2955, 0
        %3055 = vmatprep.subr.mxu0 0.0
        %3056 = vmatpush1.msra.mxu0 %v3053
        %3057 = vmatprep.subr.mxu0 0.0
        %3058 = vmatpush1.msra.mxu0 0.0
        %3059 = vmatprep.subr.mxu0 0.0
        %3060 = vmatpush1.msra.mxu0 0.0
        %3061 = vmatprep.subr.mxu0 0.0
        %3062 = vmatpush1.msra.mxu0 0.0
        %3063 = vmatprep.subr.mxu0 0.0
        %3064 = vmatpush1.msra.mxu0 0.0
        %3065 = vmatprep.subr.mxu0 0.0
        %3066 = vmatpush1.msra.mxu0 0.0
        %3067 = vmatprep.subr.mxu0 0.0
        %3068 = vmatpush1.msra.mxu0 0.0
        %3069 = vmatprep.subr.mxu0 0.0
        %3070 = vmatpush1.msra.mxu0 0.0
        %3071 = vmatprep.subr.mxu0 0.0
        %3072 = vmatpush1.msra.mxu0 0.0
        %3073 = vmatprep.subr.mxu0 0.0
        %3074 = vmatpush1.msra.mxu0 0.0
        %3075 = vmatprep.subr.mxu0 0.0
        %3076 = vmatpush1.msra.mxu0 0.0
        %3077 = vmatprep.subr.mxu0 0.0
        %3078 = vmatpush1.msra.mxu0 0.0
        %3079 = vmatprep.subr.mxu0 0.0
        %3080 = vmatpush1.msra.mxu0 0.0
        %3081 = vmatprep.subr.mxu0 0.0
        %3082 = vmatpush1.msra.mxu0 0.0
        %3083 = vmatprep.subr.mxu0 0.0
        %3084 = vmatpush1.msra.mxu0 0.0
        %3085 = vmatprep.subr.mxu0 0.0
        %3086 = vmatpush1.msra.mxu0 0.0
        %3087 = vmatprep.subr.mxu0 0.0
        %3088 = vmatpush1.msra.mxu0 0.0
        %3089 = vmatprep.subr.mxu0 0.0
        %3090 = vmatpush1.msra.mxu0 0.0
        %3091 = vmatprep.subr.mxu0 0.0
        %3092 = vmatpush1.msra.mxu0 0.0
        %3093 = vmatprep.subr.mxu0 0.0
        %3094 = vmatpush1.msra.mxu0 0.0
        %3095 = vmatprep.subr.mxu0 0.0
        %3096 = vmatpush1.msra.mxu0 0.0
        %3097 = vmatprep.subr.mxu0 0.0
        %3098 = vmatpush1.msra.mxu0 0.0
        %3099 = vmatprep.subr.mxu0 0.0
        %3100 = vmatpush1.msra.mxu0 0.0
        %3101 = vmatprep.subr.mxu0 0.0
        %3102 = vmatpush1.msra.mxu0 0.0
        %3103 = vmatprep.subr.mxu0 0.0
        %3104 = vmatpush1.msra.mxu0 0.0
        %3105 = vmatprep.subr.mxu0 0.0
        %3106 = vmatpush1.msra.mxu0 0.0
        %3107 = vmatprep.subr.mxu0 0.0
        %3108 = vmatpush1.msra.mxu0 0.0
        %3109 = vmatprep.subr.mxu0 0.0
        %3110 = vmatpush1.msra.mxu0 0.0
        %3111 = vmatprep.subr.mxu0 0.0
        %3112 = vmatpush1.msra.mxu0 0.0
        %3113 = vmatprep.subr.mxu0 0.0
        %3114 = vmatpush1.msra.mxu0 0.0
        %3115 = vmatprep.subr.mxu0 0.0
        %3116 = vmatpush1.msra.mxu0 0.0
        %3117 = vmatprep.subr.mxu0 0.0
        %3118 = vmatpush1.msra.mxu0 0.0
        %3119 = vmatprep.mubr.f32.mxu0 0.0
        %3120 = vmatmul.mubr.f32.gmra.mrb[0].mxu0 %v2957
        %v3121 = vpop.f32.mrb[0].mxu0
        %v3122 = vadd.f32 0.0, %v3121
        %v3123 = vpop.f32.mrb[0].mxu0
        %3124 = vmatprep.mubr.f32.mxu0 0.0
        %3125 = vmatmul.mubr.f32.gmra.mrb[0].mxu0 %v2960
        %v3126 = vpop.f32.mrb[0].mxu0
        %v3127 = vadd.f32 0.0, %v3126
        %v3128 = vpop.f32.mrb[0].mxu0
        %3129 = vmatprep.mubr.f32.mxu0 0.0
        %3130 = vmatmul.mubr.f32.gmra.mrb[0].mxu0 %v2963
        %v3131 = vpop.f32.mrb[0].mxu0
        %v3132 = vadd.f32 0.0, %v3131
        %v3133 = vpop.f32.mrb[0].mxu0
        %3134 = vmatprep.mubr.f32.mxu0 0.0
        %3135 = vmatmul.mubr.f32.gmra.mrb[0].mxu0 %v2966
        %v3136 = vpop.f32.mrb[0].mxu0
        %v3137 = vadd.f32 0.0, %v3136
        %v3138 = vpop.f32.mrb[0].mxu0
        %3139 = vmatprep.mubr.f32.mxu0 0.0
        %3140 = vmatmul.mubr.f32.gmra.mrb[0].mxu0 %v2969
        %v3141 = vpop.f32.mrb[0].mxu0
        %v3142 = vadd.f32 0.0, %v3141
        %v3143 = vpop.f32.mrb[0].mxu0
        %3144 = vmatprep.mubr.f32.mxu0 0.0
        %3145 = vmatmul.mubr.f32.gmra.mrb[0].mxu0 %v2972
        %v3146 = vpop.f32.mrb[0].mxu0
        %v3147 = vadd.f32 0.0, %v3146
        %v3148 = vpop.f32.mrb[0].mxu0
        %3149 = vmatprep.mubr.f32.mxu0 0.0
        %3150 = vmatmul.mubr.f32.gmra.mrb[0].mxu0 %v2975
        %v3151 = vpop.f32.mrb[0].mxu0
        %v3152 = vadd.f32 0.0, %v3151
        %v3153 = vpop.f32.mrb[0].mxu0
        %3154 = vmatprep.mubr.f32.mxu0 0.0
        %3155 = vmatmul.mubr.f32.gmra.mrb[0].mxu0 %v2978
        %v3156 = vpop.f32.mrb[0].mxu0
        %v3157 = vadd.f32 0.0, %v3156
        %v3158 = vpop.f32.mrb[0].mxu0
        %3159 = vmatprep.mubr.f32.mxu0 0.0
        %3160 = vmatmul.mubr.f32.gmra.mrb[0].mxu0 %v2981
        %v3161 = vpop.f32.mrb[0].mxu0
        %v3162 = vadd.f32 0.0, %v3161
        %v3163 = vpop.f32.mrb[0].mxu0
        %3164 = vmatprep.mubr.f32.mxu0 0.0
        %3165 = vmatmul.mubr.f32.gmra.mrb[0].mxu0 %v2984
        %v3166 = vpop.f32.mrb[0].mxu0
        %v3167 = vadd.f32 0.0, %v3166
        %v3168 = vpop.f32.mrb[0].mxu0
        %3169 = vmatprep.mubr.f32.mxu0 0.0
        %3170 = vmatmul.mubr.f32.gmra.mrb[0].mxu0 %v2987
        %v3171 = vpop.f32.mrb[0].mxu0
        %v3172 = vadd.f32 0.0, %v3171
        %v3173 = vpop.f32.mrb[0].mxu0
        %3174 = vmatprep.mubr.f32.mxu0 0.0
        %3175 = vmatmul.mubr.f32.gmra.mrb[0].mxu0 %v2990
        %v3176 = vpop.f32.mrb[0].mxu0
        %v3177 = vadd.f32 0.0, %v3176
        %v3178 = vpop.f32.mrb[0].mxu0
        %3179 = vmatprep.mubr.f32.mxu0 0.0
        %3180 = vmatmul.mubr.f32.gmra.mrb[0].mxu0 %v2993
        %v3181 = vpop.f32.mrb[0].mxu0
        %v3182 = vadd.f32 0.0, %v3181
        %v3183 = vpop.f32.mrb[0].mxu0
        %3184 = vmatprep.mubr.f32.mxu0 0.0
        %3185 = vmatmul.mubr.f32.gmra.mrb[0].mxu0 %v2996
        %v3186 = vpop.f32.mrb[0].mxu0
        %v3187 = vadd.f32 0.0, %v3186
        %v3188 = vpop.f32.mrb[0].mxu0
        %3189 = vmatprep.mubr.f32.mxu0 0.0
        %3190 = vmatmul.mubr.f32.gmra.mrb[0].mxu0 %v2999
        %v3191 = vpop.f32.mrb[0].mxu0
        %v3192 = vadd.f32 0.0, %v3191
        %v3193 = vpop.f32.mrb[0].mxu0
        %3194 = vmatprep.mubr.f32.mxu0 0.0
        %3195 = vmatmul.mubr.f32.gmra.mrb[0].mxu0 %v3002
        %v3196 = vpop.f32.mrb[0].mxu0
        %v3197 = vadd.f32 0.0, %v3196
        %v3198 = vpop.f32.mrb[0].mxu0
        %3199 = vmatprep.mubr.f32.mxu0 0.0
        %3200 = vmatmul.mubr.f32.gmra.mrb[0].mxu0 %v3005
        %v3201 = vpop.f32.mrb[0].mxu0
        %v3202 = vadd.f32 0.0, %v3201
        %v3203 = vpop.f32.mrb[0].mxu0
        %3204 = vmatprep.mubr.f32.mxu0 0.0
        %3205 = vmatmul.mubr.f32.gmra.mrb[0].mxu0 %v3008
        %v3206 = vpop.f32.mrb[0].mxu0
        %v3207 = vadd.f32 0.0, %v3206
        %v3208 = vpop.f32.mrb[0].mxu0
        %3209 = vmatprep.mubr.f32.mxu0 0.0
        %3210 = vmatmul.mubr.f32.gmra.mrb[0].mxu0 %v3011
        %v3211 = vpop.f32.mrb[0].mxu0
        %v3212 = vadd.f32 0.0, %v3211
        %v3213 = vpop.f32.mrb[0].mxu0
        %3214 = vmatprep.mubr.f32.mxu0 0.0
        %3215 = vmatmul.mubr.f32.gmra.mrb[0].mxu0 %v3014
        %v3216 = vpop.f32.mrb[0].mxu0
        %v3217 = vadd.f32 0.0, %v3216
        %v3218 = vpop.f32.mrb[0].mxu0
        %3219 = vmatprep.mubr.f32.mxu0 0.0
        %3220 = vmatmul.mubr.f32.gmra.mrb[0].mxu0 %v3017
        %v3221 = vpop.f32.mrb[0].mxu0
        %v3222 = vadd.f32 0.0, %v3221
        %v3223 = vpop.f32.mrb[0].mxu0
        %3224 = vmatprep.mubr.f32.mxu0 0.0
        %3225 = vmatmul.mubr.f32.gmra.mrb[0].mxu0 %v3020
        %v3226 = vpop.f32.mrb[0].mxu0
        %v3227 = vadd.f32 0.0, %v3226
        %v3228 = vpop.f32.mrb[0].mxu0
        %3229 = vmatprep.mubr.f32.mxu0 0.0
        %3230 = vmatmul.mubr.f32.gmra.mrb[0].mxu0 %v3023
        %v3231 = vpop.f32.mrb[0].mxu0
        %v3232 = vadd.f32 0.0, %v3231
        %v3233 = vpop.f32.mrb[0].mxu0
        %3234 = vmatprep.mubr.f32.mxu0 0.0
        %3235 = vmatmul.mubr.f32.gmra.mrb[0].mxu0 %v3026
        %v3236 = vpop.f32.mrb[0].mxu0
        %v3237 = vadd.f32 0.0, %v3236
        %v3238 = vpop.f32.mrb[0].mxu0
        %3239 = vmatprep.mubr.f32.mxu0 0.0
        %3240 = vmatmul.mubr.f32.gmra.mrb[0].mxu0 %v3029
        %v3241 = vpop.f32.mrb[0].mxu0
        %v3242 = vadd.f32 0.0, %v3241
        %v3243 = vpop.f32.mrb[0].mxu0
        %3244 = vmatprep.mubr.f32.mxu0 0.0
        %3245 = vmatmul.mubr.f32.gmra.mrb[0].mxu0 %v3032
        %v3246 = vpop.f32.mrb[0].mxu0
        %v3247 = vadd.f32 0.0, %v3246
        %v3248 = vpop.f32.mrb[0].mxu0
        %3249 = vmatprep.mubr.f32.mxu0 0.0
        %3250 = vmatmul.mubr.f32.gmra.mrb[0].mxu0 %v3035
        %v3251 = vpop.f32.mrb[0].mxu0
        %v3252 = vadd.f32 0.0, %v3251
        %v3253 = vpop.f32.mrb[0].mxu0
        %3254 = vmatprep.mubr.f32.mxu0 0.0
        %3255 = vmatmul.mubr.f32.gmra.mrb[0].mxu0 %v3038
        %v3256 = vpop.f32.mrb[0].mxu0
        %v3257 = vadd.f32 0.0, %v3256
        %v3258 = vpop.f32.mrb[0].mxu0
        %3259 = vmatprep.mubr.f32.mxu0 0.0
        %3260 = vmatmul.mubr.f32.gmra.mrb[0].mxu0 %v3041
        %v3261 = vpop.f32.mrb[0].mxu0
        %v3262 = vadd.f32 0.0, %v3261
        %v3263 = vpop.f32.mrb[0].mxu0
        %3264 = vmatprep.mubr.f32.mxu0 0.0
        %3265 = vmatmul.mubr.f32.gmra.mrb[0].mxu0 %v3044
        %v3266 = vpop.f32.mrb[0].mxu0
        %v3267 = vadd.f32 0.0, %v3266
        %v3268 = vpop.f32.mrb[0].mxu0
        %3269 = vmatprep.mubr.f32.mxu0 0.0
        %3270 = vmatmul.mubr.f32.gmra.mrb[0].mxu0 %v3047
        %v3271 = vpop.f32.mrb[0].mxu0
        %v3272 = vadd.f32 0.0, %v3271
        %v3273 = vpop.f32.mrb[0].mxu0
        %3274 = vmatprep.mubr.f32.mxu0 0.0
        %3275 = vmatmul.mubr.f32.gmra.mrb[0].mxu0 %v3050
        %v3276 = vpop.f32.mrb[0].mxu0
        %v3277 = vadd.f32 0.0, %v3276
        %v3278 = vpop.f32.mrb[0].mxu0
        %3279 = vdwg.mxu0
        %3280 = vst.msk [vmem:[#allocation4] sm:$0xff] %vm1403, %v3122
        %3281 = vst.msk [vmem:[#allocation4 + $0x8] sm:$0xff] %vm1403, %v3127
        %3282 = vst.msk [vmem:[#allocation4 + $0x10] sm:$0xff] %vm1403, %v3132
        %3283 = vst.msk [vmem:[#allocation4 + $0x18] sm:$0xff] %vm1403, %v3137
        %3284 = vst.msk [vmem:[#allocation4 + $0x20] sm:$0xff] %vm1403, %v3142
        %3285 = vst.msk [vmem:[#allocation4 + $0x28] sm:$0xff] %vm1403, %v3147
        %3286 = vst.msk [vmem:[#allocation4 + $0x30] sm:$0xff] %vm1403, %v3152
        %3287 = vst.msk [vmem:[#allocation4 + $0x38] sm:$0xff] %vm1403, %v3157
        %3288 = vst.msk [vmem:[#allocation4 + $0x40] sm:$0xff] %vm1403, %v3162
        %3289 = vst.msk [vmem:[#allocation4 + $0x48] sm:$0xff] %vm1403, %v3167
        %3290 = vst.msk [vmem:[#allocation4 + $0x50] sm:$0xff] %vm1403, %v3172
        %3291 = vst.msk [vmem:[#allocation4 + $0x58] sm:$0xff] %vm1403, %v3177
        %3292 = vst.msk [vmem:[#allocation4 + $0x60] sm:$0xff] %vm1403, %v3182
        %3293 = vst.msk [vmem:[#allocation4 + $0x68] sm:$0xff] %vm1403, %v3187
        %3294 = vst.msk [vmem:[#allocation4 + $0x70] sm:$0xff] %vm1403, %v3192
        %3295 = vst.msk [vmem:[#allocation4 + $0x78] sm:$0xff] %vm1403, %v3197
        %3296 = vst.msk [vmem:[#allocation4 + $0x80] sm:$0xff] %vm1403, %v3202
        %3297 = vst.msk [vmem:[#allocation4 + $0x88] sm:$0xff] %vm1403, %v3207
        %3298 = vst.msk [vmem:[#allocation4 + $0x90] sm:$0xff] %vm1403, %v3212
        %3299 = vst.msk [vmem:[#allocation4 + $0x98] sm:$0xff] %vm1403, %v3217
        %3300 = vst.msk [vmem:[#allocation4 + $0xa0] sm:$0xff] %vm1403, %v3222
        %3301 = vst.msk [vmem:[#allocation4 + $0xa8] sm:$0xff] %vm1403, %v3227
        %3302 = vst.msk [vmem:[#allocation4 + $0xb0] sm:$0xff] %vm1403, %v3232
        %3303 = vst.msk [vmem:[#allocation4 + $0xb8] sm:$0xff] %vm1403, %v3237
        %3304 = vst.msk [vmem:[#allocation4 + $0xc0] sm:$0xff] %vm1403, %v3242
        %3305 = vst.msk [vmem:[#allocation4 + $0xc8] sm:$0xff] %vm1403, %v3247
        %3306 = vst.msk [vmem:[#allocation4 + $0xd0] sm:$0xff] %vm1403, %v3252
        %3307 = vst.msk [vmem:[#allocation4 + $0xd8] sm:$0xff] %vm1403, %v3257
        %3308 = vst.msk [vmem:[#allocation4 + $0xe0] sm:$0xff] %vm1403, %v3262
        %3309 = vst.msk [vmem:[#allocation4 + $0xe8] sm:$0xff] %vm1403, %v3267
        %3310 = vst.msk [vmem:[#allocation4 + $0xf0] sm:$0xff] %vm1403, %v3272
        %3311 = vst.msk [vmem:[#allocation4 + $0xf8] sm:$0xff] %vm1403, %v3277
        %v3312 = vld [vmem:[#allocation13] sm:$0xf]
        %v3314 = vsel %vm1135, %v3312, 0
        %3316 = vmatprep.subr.mxu0 0.0
        %3317 = vmatpush1.msra.mxu0 %v3314
        %3318 = vmatprep.subr.mxu0 0.0
        %3319 = vmatpush1.msra.mxu0 0.0
        %3320 = vmatprep.subr.mxu0 0.0
        %3321 = vmatpush1.msra.mxu0 0.0
        %3322 = vmatprep.subr.mxu0 0.0
        %3323 = vmatpush1.msra.mxu0 0.0
        %3324 = vmatprep.subr.mxu0 0.0
        %3325 = vmatpush1.msra.mxu0 0.0
        %3326 = vmatprep.subr.mxu0 0.0
        %3327 = vmatpush1.msra.mxu0 0.0
        %3328 = vmatprep.subr.mxu0 0.0
        %3329 = vmatpush1.msra.mxu0 0.0
        %3330 = vmatprep.subr.mxu0 0.0
        %3331 = vmatpush1.msra.mxu0 0.0
        %3332 = vmatprep.subr.mxu0 0.0
        %3333 = vmatpush1.msra.mxu0 0.0
        %3334 = vmatprep.subr.mxu0 0.0
        %3335 = vmatpush1.msra.mxu0 0.0
        %3336 = vmatprep.subr.mxu0 0.0
        %3337 = vmatpush1.msra.mxu0 0.0
        %3338 = vmatprep.subr.mxu0 0.0
        %3339 = vmatpush1.msra.mxu0 0.0
        %3340 = vmatprep.subr.mxu0 0.0
        %3341 = vmatpush1.msra.mxu0 0.0
        %3342 = vmatprep.subr.mxu0 0.0
        %3343 = vmatpush1.msra.mxu0 0.0
        %3344 = vmatprep.subr.mxu0 0.0
        %3345 = vmatpush1.msra.mxu0 0.0
        %3346 = vmatprep.subr.mxu0 0.0
        %3347 = vmatpush1.msra.mxu0 0.0
        %3348 = vmatprep.subr.mxu0 0.0
        %3349 = vmatpush1.msra.mxu0 0.0
        %3350 = vmatprep.subr.mxu0 0.0
        %3351 = vmatpush1.msra.mxu0 0.0
        %3352 = vmatprep.subr.mxu0 0.0
        %3353 = vmatpush1.msra.mxu0 0.0
        %3354 = vmatprep.subr.mxu0 0.0
        %3355 = vmatpush1.msra.mxu0 0.0
        %3356 = vmatprep.subr.mxu0 0.0
        %3357 = vmatpush1.msra.mxu0 0.0
        %3358 = vmatprep.subr.mxu0 0.0
        %3359 = vmatpush1.msra.mxu0 0.0
        %3360 = vmatprep.subr.mxu0 0.0
        %3361 = vmatpush1.msra.mxu0 0.0
        %3362 = vmatprep.subr.mxu0 0.0
        %3363 = vmatpush1.msra.mxu0 0.0
        %3364 = vmatprep.subr.mxu0 0.0
        %3365 = vmatpush1.msra.mxu0 0.0
        %3366 = vmatprep.subr.mxu0 0.0
        %3367 = vmatpush1.msra.mxu0 0.0
        %3368 = vmatprep.subr.mxu0 0.0
        %3369 = vmatpush1.msra.mxu0 0.0
        %3370 = vmatprep.subr.mxu0 0.0
        %3371 = vmatpush1.msra.mxu0 0.0
        %3372 = vmatprep.subr.mxu0 0.0
        %3373 = vmatpush1.msra.mxu0 0.0
        %3374 = vmatprep.subr.mxu0 0.0
        %3375 = vmatpush1.msra.mxu0 0.0
        %3376 = vmatprep.subr.mxu0 0.0
        %3377 = vmatpush1.msra.mxu0 0.0
        %3378 = vmatprep.subr.mxu0 0.0
        %3379 = vmatpush1.msra.mxu0 0.0
        %3380 = vmatprep.mubr.f32.mxu0 0.0
        %3381 = vmatmul.mubr.f32.gmra.mrb[0].mxu0 %v2957
        %v3382 = vpop.f32.mrb[0].mxu0
        %v3383 = vadd.f32 0.0, %v3382
        %v3384 = vpop.f32.mrb[0].mxu0
        %3385 = vmatprep.mubr.f32.mxu0 0.0
        %3386 = vmatmul.mubr.f32.gmra.mrb[0].mxu0 %v2960
        %v3387 = vpop.f32.mrb[0].mxu0
        %v3388 = vadd.f32 0.0, %v3387
        %v3389 = vpop.f32.mrb[0].mxu0
        %3390 = vmatprep.mubr.f32.mxu0 0.0
        %3391 = vmatmul.mubr.f32.gmra.mrb[0].mxu0 %v2963
        %v3392 = vpop.f32.mrb[0].mxu0
        %v3393 = vadd.f32 0.0, %v3392
        %v3394 = vpop.f32.mrb[0].mxu0
        %3395 = vmatprep.mubr.f32.mxu0 0.0
        %3396 = vmatmul.mubr.f32.gmra.mrb[0].mxu0 %v2966
        %v3397 = vpop.f32.mrb[0].mxu0
        %v3398 = vadd.f32 0.0, %v3397
        %v3399 = vpop.f32.mrb[0].mxu0
        %3400 = vmatprep.mubr.f32.mxu0 0.0
        %3401 = vmatmul.mubr.f32.gmra.mrb[0].mxu0 %v2969
        %v3402 = vpop.f32.mrb[0].mxu0
        %v3403 = vadd.f32 0.0, %v3402
        %v3404 = vpop.f32.mrb[0].mxu0
        %3405 = vmatprep.mubr.f32.mxu0 0.0
        %3406 = vmatmul.mubr.f32.gmra.mrb[0].mxu0 %v2972
        %v3407 = vpop.f32.mrb[0].mxu0
        %v3408 = vadd.f32 0.0, %v3407
        %v3409 = vpop.f32.mrb[0].mxu0
        %3410 = vmatprep.mubr.f32.mxu0 0.0
        %3411 = vmatmul.mubr.f32.gmra.mrb[0].mxu0 %v2975
        %v3412 = vpop.f32.mrb[0].mxu0
        %v3413 = vadd.f32 0.0, %v3412
        %v3414 = vpop.f32.mrb[0].mxu0
        %3415 = vmatprep.mubr.f32.mxu0 0.0
        %3416 = vmatmul.mubr.f32.gmra.mrb[0].mxu0 %v2978
        %v3417 = vpop.f32.mrb[0].mxu0
        %v3418 = vadd.f32 0.0, %v3417
        %v3419 = vpop.f32.mrb[0].mxu0
        %3420 = vmatprep.mubr.f32.mxu0 0.0
        %3421 = vmatmul.mubr.f32.gmra.mrb[0].mxu0 %v2981
        %v3422 = vpop.f32.mrb[0].mxu0
        %v3423 = vadd.f32 0.0, %v3422
        %v3424 = vpop.f32.mrb[0].mxu0
        %3425 = vmatprep.mubr.f32.mxu0 0.0
        %3426 = vmatmul.mubr.f32.gmra.mrb[0].mxu0 %v2984
        %v3427 = vpop.f32.mrb[0].mxu0
        %v3428 = vadd.f32 0.0, %v3427
        %v3429 = vpop.f32.mrb[0].mxu0
        %3430 = vmatprep.mubr.f32.mxu0 0.0
        %3431 = vmatmul.mubr.f32.gmra.mrb[0].mxu0 %v2987
        %v3432 = vpop.f32.mrb[0].mxu0
        %v3433 = vadd.f32 0.0, %v3432
        %v3434 = vpop.f32.mrb[0].mxu0
        %3435 = vmatprep.mubr.f32.mxu0 0.0
        %3436 = vmatmul.mubr.f32.gmra.mrb[0].mxu0 %v2990
        %v3437 = vpop.f32.mrb[0].mxu0
        %v3438 = vadd.f32 0.0, %v3437
        %v3439 = vpop.f32.mrb[0].mxu0
        %3440 = vmatprep.mubr.f32.mxu0 0.0
        %3441 = vmatmul.mubr.f32.gmra.mrb[0].mxu0 %v2993
        %v3442 = vpop.f32.mrb[0].mxu0
        %v3443 = vadd.f32 0.0, %v3442
        %v3444 = vpop.f32.mrb[0].mxu0
        %3445 = vmatprep.mubr.f32.mxu0 0.0
        %3446 = vmatmul.mubr.f32.gmra.mrb[0].mxu0 %v2996
        %v3447 = vpop.f32.mrb[0].mxu0
        %v3448 = vadd.f32 0.0, %v3447
        %v3449 = vpop.f32.mrb[0].mxu0
        %3450 = vmatprep.mubr.f32.mxu0 0.0
        %3451 = vmatmul.mubr.f32.gmra.mrb[0].mxu0 %v2999
        %v3452 = vpop.f32.mrb[0].mxu0
        %v3453 = vadd.f32 0.0, %v3452
        %v3454 = vpop.f32.mrb[0].mxu0
        %3455 = vmatprep.mubr.f32.mxu0 0.0
        %3456 = vmatmul.mubr.f32.gmra.mrb[0].mxu0 %v3002
        %v3457 = vpop.f32.mrb[0].mxu0
        %v3458 = vadd.f32 0.0, %v3457
        %v3459 = vpop.f32.mrb[0].mxu0
        %3460 = vmatprep.mubr.f32.mxu0 0.0
        %3461 = vmatmul.mubr.f32.gmra.mrb[0].mxu0 %v3005
        %v3462 = vpop.f32.mrb[0].mxu0
        %v3463 = vadd.f32 0.0, %v3462
        %v3464 = vpop.f32.mrb[0].mxu0
        %3465 = vmatprep.mubr.f32.mxu0 0.0
        %3466 = vmatmul.mubr.f32.gmra.mrb[0].mxu0 %v3008
        %v3467 = vpop.f32.mrb[0].mxu0
        %v3468 = vadd.f32 0.0, %v3467
        %v3469 = vpop.f32.mrb[0].mxu0
        %3470 = vmatprep.mubr.f32.mxu0 0.0
        %3471 = vmatmul.mubr.f32.gmra.mrb[0].mxu0 %v3011
        %v3472 = vpop.f32.mrb[0].mxu0
        %v3473 = vadd.f32 0.0, %v3472
        %v3474 = vpop.f32.mrb[0].mxu0
        %3475 = vmatprep.mubr.f32.mxu0 0.0
        %3476 = vmatmul.mubr.f32.gmra.mrb[0].mxu0 %v3014
        %v3477 = vpop.f32.mrb[0].mxu0
        %v3478 = vadd.f32 0.0, %v3477
        %v3479 = vpop.f32.mrb[0].mxu0
        %3480 = vmatprep.mubr.f32.mxu0 0.0
        %3481 = vmatmul.mubr.f32.gmra.mrb[0].mxu0 %v3017
        %v3482 = vpop.f32.mrb[0].mxu0
        %v3483 = vadd.f32 0.0, %v3482
        %v3484 = vpop.f32.mrb[0].mxu0
        %3485 = vmatprep.mubr.f32.mxu0 0.0
        %3486 = vmatmul.mubr.f32.gmra.mrb[0].mxu0 %v3020
        %v3487 = vpop.f32.mrb[0].mxu0
        %v3488 = vadd.f32 0.0, %v3487
        %v3489 = vpop.f32.mrb[0].mxu0
        %3490 = vmatprep.mubr.f32.mxu0 0.0
        %3491 = vmatmul.mubr.f32.gmra.mrb[0].mxu0 %v3023
        %v3492 = vpop.f32.mrb[0].mxu0
        %v3493 = vadd.f32 0.0, %v3492
        %v3494 = vpop.f32.mrb[0].mxu0
        %3495 = vmatprep.mubr.f32.mxu0 0.0
        %3496 = vmatmul.mubr.f32.gmra.mrb[0].mxu0 %v3026
        %v3497 = vpop.f32.mrb[0].mxu0
        %v3498 = vadd.f32 0.0, %v3497
        %v3499 = vpop.f32.mrb[0].mxu0
        %3500 = vmatprep.mubr.f32.mxu0 0.0
        %3501 = vmatmul.mubr.f32.gmra.mrb[0].mxu0 %v3029
        %v3502 = vpop.f32.mrb[0].mxu0
        %v3503 = vadd.f32 0.0, %v3502
        %v3504 = vpop.f32.mrb[0].mxu0
        %3505 = vmatprep.mubr.f32.mxu0 0.0
        %3506 = vmatmul.mubr.f32.gmra.mrb[0].mxu0 %v3032
        %v3507 = vpop.f32.mrb[0].mxu0
        %v3508 = vadd.f32 0.0, %v3507
        %v3509 = vpop.f32.mrb[0].mxu0
        %3510 = vmatprep.mubr.f32.mxu0 0.0
        %3511 = vmatmul.mubr.f32.gmra.mrb[0].mxu0 %v3035
        %v3512 = vpop.f32.mrb[0].mxu0
        %v3513 = vadd.f32 0.0, %v3512
        %v3514 = vpop.f32.mrb[0].mxu0
        %3515 = vmatprep.mubr.f32.mxu0 0.0
        %3516 = vmatmul.mubr.f32.gmra.mrb[0].mxu0 %v3038
        %v3517 = vpop.f32.mrb[0].mxu0
        %v3518 = vadd.f32 0.0, %v3517
        %v3519 = vpop.f32.mrb[0].mxu0
        %3520 = vdwg.mxu0
        %s3521 = scalar_lea.vmem [#allocation13], 8
        %v3522 = vld [vmem:[%s3521] sm:$0xf]
        %v3524 = vsel %vm1135, %v3522, 0
        %3526 = vmatprep.subr.mxu0 0.0
        %3527 = vmatpush1.msra.mxu0 %v3524
        %3528 = vmatprep.subr.mxu0 0.0
        %3529 = vmatpush1.msra.mxu0 0.0
        %3530 = vmatprep.subr.mxu0 0.0
        %3531 = vmatpush1.msra.mxu0 0.0
        %3532 = vmatprep.subr.mxu0 0.0
        %3533 = vmatpush1.msra.mxu0 0.0
        %3534 = vmatprep.subr.mxu0 0.0
        %3535 = vmatpush1.msra.mxu0 0.0
        %3536 = vmatprep.subr.mxu0 0.0
        %3537 = vmatpush1.msra.mxu0 0.0
        %3538 = vmatprep.subr.mxu0 0.0
        %3539 = vmatpush1.msra.mxu0 0.0
        %3540 = vmatprep.subr.mxu0 0.0
        %3541 = vmatpush1.msra.mxu0 0.0
        %3542 = vmatprep.subr.mxu0 0.0
        %3543 = vmatpush1.msra.mxu0 0.0
        %3544 = vmatprep.subr.mxu0 0.0
        %3545 = vmatpush1.msra.mxu0 0.0
        %3546 = vmatprep.subr.mxu0 0.0
        %3547 = vmatpush1.msra.mxu0 0.0
        %3548 = vmatprep.subr.mxu0 0.0
        %3549 = vmatpush1.msra.mxu0 0.0
        %3550 = vmatprep.subr.mxu0 0.0
        %3551 = vmatpush1.msra.mxu0 0.0
        %3552 = vmatprep.subr.mxu0 0.0
        %3553 = vmatpush1.msra.mxu0 0.0
        %3554 = vmatprep.subr.mxu0 0.0
        %3555 = vmatpush1.msra.mxu0 0.0
        %3556 = vmatprep.subr.mxu0 0.0
        %3557 = vmatpush1.msra.mxu0 0.0
        %3558 = vmatprep.subr.mxu0 0.0
        %3559 = vmatpush1.msra.mxu0 0.0
        %3560 = vmatprep.subr.mxu0 0.0
        %3561 = vmatpush1.msra.mxu0 0.0
        %3562 = vmatprep.subr.mxu0 0.0
        %3563 = vmatpush1.msra.mxu0 0.0
        %3564 = vmatprep.subr.mxu0 0.0
        %3565 = vmatpush1.msra.mxu0 0.0
        %3566 = vmatprep.subr.mxu0 0.0
        %3567 = vmatpush1.msra.mxu0 0.0
        %3568 = vmatprep.subr.mxu0 0.0
        %3569 = vmatpush1.msra.mxu0 0.0
        %3570 = vmatprep.subr.mxu0 0.0
        %3571 = vmatpush1.msra.mxu0 0.0
        %3572 = vmatprep.subr.mxu0 0.0
        %3573 = vmatpush1.msra.mxu0 0.0
        %3574 = vmatprep.subr.mxu0 0.0
        %3575 = vmatpush1.msra.mxu0 0.0
        %3576 = vmatprep.subr.mxu0 0.0
        %3577 = vmatpush1.msra.mxu0 0.0
        %3578 = vmatprep.subr.mxu0 0.0
        %3579 = vmatpush1.msra.mxu0 0.0
        %3580 = vmatprep.subr.mxu0 0.0
        %3581 = vmatpush1.msra.mxu0 0.0
        %3582 = vmatprep.subr.mxu0 0.0
        %3583 = vmatpush1.msra.mxu0 0.0
        %3584 = vmatprep.subr.mxu0 0.0
        %3585 = vmatpush1.msra.mxu0 0.0
        %3586 = vmatprep.subr.mxu0 0.0
        %3587 = vmatpush1.msra.mxu0 0.0
        %3588 = vmatprep.subr.mxu0 0.0
        %3589 = vmatpush1.msra.mxu0 0.0
        %3590 = vmatprep.mubr.f32.mxu0 0.0
        %3591 = vmatmul.mubr.f32.gmra.mrb[0].mxu0 %v2969
        %v3592 = vpop.f32.mrb[0].mxu0
        %v3593 = vadd.f32 0.0, %v3592
        %v3594 = vpop.f32.mrb[0].mxu0
        %3595 = vmatprep.mubr.f32.mxu0 0.0
        %3596 = vmatmul.mubr.f32.gmra.mrb[0].mxu0 %v2972
        %v3597 = vpop.f32.mrb[0].mxu0
        %v3598 = vadd.f32 0.0, %v3597
        %v3599 = vpop.f32.mrb[0].mxu0
        %3600 = vmatprep.mubr.f32.mxu0 0.0
        %3601 = vmatmul.mubr.f32.gmra.mrb[0].mxu0 %v2975
        %v3602 = vpop.f32.mrb[0].mxu0
        %v3603 = vadd.f32 0.0, %v3602
        %v3604 = vpop.f32.mrb[0].mxu0
        %3605 = vmatprep.mubr.f32.mxu0 0.0
        %3606 = vmatmul.mubr.f32.gmra.mrb[0].mxu0 %v2978
        %v3607 = vpop.f32.mrb[0].mxu0
        %v3608 = vadd.f32 0.0, %v3607
        %v3609 = vpop.f32.mrb[0].mxu0
        %3610 = vmatprep.mubr.f32.mxu0 0.0
        %3611 = vmatmul.mubr.f32.gmra.mrb[0].mxu0 %v2981
        %v3612 = vpop.f32.mrb[0].mxu0
        %v3613 = vadd.f32 0.0, %v3612
        %v3614 = vpop.f32.mrb[0].mxu0
        %3615 = vmatprep.mubr.f32.mxu0 0.0
        %3616 = vmatmul.mubr.f32.gmra.mrb[0].mxu0 %v2984
        %v3617 = vpop.f32.mrb[0].mxu0
        %v3618 = vadd.f32 0.0, %v3617
        %v3619 = vpop.f32.mrb[0].mxu0
        %3620 = vmatprep.mubr.f32.mxu0 0.0
        %3621 = vmatmul.mubr.f32.gmra.mrb[0].mxu0 %v2987
        %v3622 = vpop.f32.mrb[0].mxu0
        %v3623 = vadd.f32 0.0, %v3622
        %v3624 = vpop.f32.mrb[0].mxu0
        %3625 = vmatprep.mubr.f32.mxu0 0.0
        %3626 = vmatmul.mubr.f32.gmra.mrb[0].mxu0 %v2990
        %v3627 = vpop.f32.mrb[0].mxu0
        %v3628 = vadd.f32 0.0, %v3627
        %v3629 = vpop.f32.mrb[0].mxu0
        %3630 = vmatprep.mubr.f32.mxu0 0.0
        %3631 = vmatmul.mubr.f32.gmra.mrb[0].mxu0 %v2993
        %v3632 = vpop.f32.mrb[0].mxu0
        %v3633 = vadd.f32 0.0, %v3632
        %v3634 = vpop.f32.mrb[0].mxu0
        %3635 = vmatprep.mubr.f32.mxu0 0.0
        %3636 = vmatmul.mubr.f32.gmra.mrb[0].mxu0 %v2996
        %v3637 = vpop.f32.mrb[0].mxu0
        %v3638 = vadd.f32 0.0, %v3637
        %v3639 = vpop.f32.mrb[0].mxu0
        %3640 = vmatprep.mubr.f32.mxu0 0.0
        %3641 = vmatmul.mubr.f32.gmra.mrb[0].mxu0 %v2999
        %v3642 = vpop.f32.mrb[0].mxu0
        %v3643 = vadd.f32 0.0, %v3642
        %v3644 = vpop.f32.mrb[0].mxu0
        %3645 = vmatprep.mubr.f32.mxu0 0.0
        %3646 = vmatmul.mubr.f32.gmra.mrb[0].mxu0 %v3002
        %v3647 = vpop.f32.mrb[0].mxu0
        %v3648 = vadd.f32 0.0, %v3647
        %v3649 = vpop.f32.mrb[0].mxu0
        %3650 = vmatprep.mubr.f32.mxu0 0.0
        %3651 = vmatmul.mubr.f32.gmra.mrb[0].mxu0 %v3005
        %v3652 = vpop.f32.mrb[0].mxu0
        %v3653 = vadd.f32 0.0, %v3652
        %v3654 = vpop.f32.mrb[0].mxu0
        %3655 = vmatprep.mubr.f32.mxu0 0.0
        %3656 = vmatmul.mubr.f32.gmra.mrb[0].mxu0 %v3008
        %v3657 = vpop.f32.mrb[0].mxu0
        %v3658 = vadd.f32 0.0, %v3657
        %v3659 = vpop.f32.mrb[0].mxu0
        %3660 = vmatprep.mubr.f32.mxu0 0.0
        %3661 = vmatmul.mubr.f32.gmra.mrb[0].mxu0 %v3011
        %v3662 = vpop.f32.mrb[0].mxu0
        %v3663 = vadd.f32 0.0, %v3662
        %v3664 = vpop.f32.mrb[0].mxu0
        %3665 = vmatprep.mubr.f32.mxu0 0.0
        %3666 = vmatmul.mubr.f32.gmra.mrb[0].mxu0 %v3014
        %v3667 = vpop.f32.mrb[0].mxu0
        %v3668 = vadd.f32 0.0, %v3667
        %v3669 = vpop.f32.mrb[0].mxu0
        %3670 = vmatprep.mubr.f32.mxu0 0.0
        %3671 = vmatmul.mubr.f32.gmra.mrb[0].mxu0 %v3017
        %v3672 = vpop.f32.mrb[0].mxu0
        %v3673 = vadd.f32 0.0, %v3672
        %v3674 = vpop.f32.mrb[0].mxu0
        %3675 = vmatprep.mubr.f32.mxu0 0.0
        %3676 = vmatmul.mubr.f32.gmra.mrb[0].mxu0 %v3020
        %v3677 = vpop.f32.mrb[0].mxu0
        %v3678 = vadd.f32 0.0, %v3677
        %v3679 = vpop.f32.mrb[0].mxu0
        %3680 = vmatprep.mubr.f32.mxu0 0.0
        %3681 = vmatmul.mubr.f32.gmra.mrb[0].mxu0 %v3023
        %v3682 = vpop.f32.mrb[0].mxu0
        %v3683 = vadd.f32 0.0, %v3682
        %v3684 = vpop.f32.mrb[0].mxu0
        %3685 = vmatprep.mubr.f32.mxu0 0.0
        %3686 = vmatmul.mubr.f32.gmra.mrb[0].mxu0 %v3026
        %v3687 = vpop.f32.mrb[0].mxu0
        %v3688 = vadd.f32 0.0, %v3687
        %v3689 = vpop.f32.mrb[0].mxu0
        %3690 = vmatprep.mubr.f32.mxu0 0.0
        %3691 = vmatmul.mubr.f32.gmra.mrb[0].mxu0 %v3029
        %v3692 = vpop.f32.mrb[0].mxu0
        %v3693 = vadd.f32 0.0, %v3692
        %v3694 = vpop.f32.mrb[0].mxu0
        %3695 = vmatprep.mubr.f32.mxu0 0.0
        %3696 = vmatmul.mubr.f32.gmra.mrb[0].mxu0 %v3032
        %v3697 = vpop.f32.mrb[0].mxu0
        %v3698 = vadd.f32 0.0, %v3697
        %v3699 = vpop.f32.mrb[0].mxu0
        %3700 = vmatprep.mubr.f32.mxu0 0.0
        %3701 = vmatmul.mubr.f32.gmra.mrb[0].mxu0 %v3035
        %v3702 = vpop.f32.mrb[0].mxu0
        %v3703 = vadd.f32 0.0, %v3702
        %v3704 = vpop.f32.mrb[0].mxu0
        %3705 = vmatprep.mubr.f32.mxu0 0.0
        %3706 = vmatmul.mubr.f32.gmra.mrb[0].mxu0 %v3038
        %v3707 = vpop.f32.mrb[0].mxu0
        %v3708 = vadd.f32 0.0, %v3707
        %v3709 = vpop.f32.mrb[0].mxu0
        %3710 = vmatprep.mubr.f32.mxu0 0.0
        %3711 = vmatmul.mubr.f32.gmra.mrb[0].mxu0 %v3041
        %v3712 = vpop.f32.mrb[0].mxu0
        %v3713 = vadd.f32 0.0, %v3712
        %v3714 = vpop.f32.mrb[0].mxu0
        %3715 = vmatprep.mubr.f32.mxu0 0.0
        %3716 = vmatmul.mubr.f32.gmra.mrb[0].mxu0 %v3044
        %v3717 = vpop.f32.mrb[0].mxu0
        %v3718 = vadd.f32 0.0, %v3717
        %v3719 = vpop.f32.mrb[0].mxu0
        %3720 = vmatprep.mubr.f32.mxu0 0.0
        %3721 = vmatmul.mubr.f32.gmra.mrb[0].mxu0 %v3047
        %v3722 = vpop.f32.mrb[0].mxu0
        %v3723 = vadd.f32 0.0, %v3722
        %v3724 = vpop.f32.mrb[0].mxu0
        %3725 = vmatprep.mubr.f32.mxu0 0.0
        %3726 = vmatmul.mubr.f32.gmra.mrb[0].mxu0 %v3050
        %v3727 = vpop.f32.mrb[0].mxu0
        %v3728 = vadd.f32 0.0, %v3727
        %v3729 = vpop.f32.mrb[0].mxu0
        %3730 = vdwg.mxu0
        %s3731 = scalar_lea.vmem [#allocation4], 32
        %v3732 = vld [vmem:[%s3731] sm:$0xff]
        %v3733 = vld [vmem:[%s3731 + $0x8] sm:$0xff]
        %v3734 = vld [vmem:[%s3731 + $0x10] sm:$0xff]
        %v3735 = vld [vmem:[%s3731 + $0x18] sm:$0xff]
        %v3736 = vld [vmem:[%s3731 + $0x20] sm:$0xff]
        %v3737 = vld [vmem:[%s3731 + $0x28] sm:$0xff]
        %v3738 = vld [vmem:[%s3731 + $0x30] sm:$0xff]
        %v3739 = vld [vmem:[%s3731 + $0x38] sm:$0xff]
        %v3740 = vld [vmem:[%s3731 + $0x40] sm:$0xff]
        %v3741 = vld [vmem:[%s3731 + $0x48] sm:$0xff]
        %v3742 = vld [vmem:[%s3731 + $0x50] sm:$0xff]
        %v3743 = vld [vmem:[%s3731 + $0x58] sm:$0xff]
        %v3744 = vld [vmem:[%s3731 + $0x60] sm:$0xff]
        %v3745 = vld [vmem:[%s3731 + $0x68] sm:$0xff]
        %v3746 = vld [vmem:[%s3731 + $0x70] sm:$0xff]
        %v3747 = vld [vmem:[%s3731 + $0x78] sm:$0xff]
        %v3748 = vld [vmem:[%s3731 + $0x80] sm:$0xff]
        %v3749 = vld [vmem:[%s3731 + $0x88] sm:$0xff]
        %v3750 = vld [vmem:[%s3731 + $0x90] sm:$0xff]
        %v3751 = vld [vmem:[%s3731 + $0x98] sm:$0xff]
        %v3752 = vld [vmem:[%s3731 + $0xa0] sm:$0xff]
        %v3753 = vld [vmem:[%s3731 + $0xa8] sm:$0xff]
        %v3754 = vld [vmem:[%s3731 + $0xb0] sm:$0xff]
        %v3755 = vld [vmem:[%s3731 + $0xb8] sm:$0xff]
        %v3756 = vld [vmem:[%s3731 + $0xc0] sm:$0xff]
        %v3757 = vld [vmem:[%s3731 + $0xc8] sm:$0xff]
        %v3758 = vld [vmem:[%s3731 + $0xd0] sm:$0xff]
        %v3759 = vld [vmem:[%s3731 + $0xd8] sm:$0xff]
        %v3760 = vadd.f32 %v3732, %v3383
        %v3761 = vadd.f32 %v3733, %v3388
        %v3762 = vadd.f32 %v3734, %v3393
        %v3763 = vadd.f32 %v3735, %v3398
        %v3764 = vadd.f32 %v3736, %v3403
        %v3765 = vadd.f32 %v3737, %v3408
        %v3766 = vadd.f32 %v3738, %v3413
        %v3767 = vadd.f32 %v3739, %v3418
        %v3768 = vadd.f32 %v3740, %v3423
        %v3769 = vadd.f32 %v3741, %v3428
        %v3770 = vadd.f32 %v3742, %v3433
        %v3771 = vadd.f32 %v3743, %v3438
        %v3772 = vadd.f32 %v3744, %v3443
        %v3773 = vadd.f32 %v3745, %v3448
        %v3774 = vadd.f32 %v3746, %v3453
        %v3775 = vadd.f32 %v3747, %v3458
        %v3776 = vadd.f32 %v3748, %v3463
        %v3777 = vadd.f32 %v3749, %v3468
        %v3778 = vadd.f32 %v3750, %v3473
        %v3779 = vadd.f32 %v3751, %v3478
        %v3780 = vadd.f32 %v3752, %v3483
        %v3781 = vadd.f32 %v3753, %v3488
        %v3782 = vadd.f32 %v3754, %v3493
        %v3783 = vadd.f32 %v3755, %v3498
        %v3784 = vadd.f32 %v3756, %v3503
        %v3785 = vadd.f32 %v3757, %v3508
        %v3786 = vadd.f32 %v3758, %v3513
        %v3787 = vadd.f32 %v3759, %v3518
        %3788 = vst.msk [vmem:[%s3731] sm:$0xff] %vm1403, %v3760
        %3789 = vst.msk [vmem:[%s3731 + $0x8] sm:$0xff] %vm1403, %v3761
        %3790 = vst.msk [vmem:[%s3731 + $0x10] sm:$0xff] %vm1403, %v3762
        %3791 = vst.msk [vmem:[%s3731 + $0x18] sm:$0xff] %vm1403, %v3763
        %3792 = vst.msk [vmem:[%s3731 + $0x20] sm:$0xff] %vm1403, %v3764
        %3793 = vst.msk [vmem:[%s3731 + $0x28] sm:$0xff] %vm1403, %v3765
        %3794 = vst.msk [vmem:[%s3731 + $0x30] sm:$0xff] %vm1403, %v3766
        %3795 = vst.msk [vmem:[%s3731 + $0x38] sm:$0xff] %vm1403, %v3767
        %3796 = vst.msk [vmem:[%s3731 + $0x40] sm:$0xff] %vm1403, %v3768
        %3797 = vst.msk [vmem:[%s3731 + $0x48] sm:$0xff] %vm1403, %v3769
        %3798 = vst.msk [vmem:[%s3731 + $0x50] sm:$0xff] %vm1403, %v3770
        %3799 = vst.msk [vmem:[%s3731 + $0x58] sm:$0xff] %vm1403, %v3771
        %3800 = vst.msk [vmem:[%s3731 + $0x60] sm:$0xff] %vm1403, %v3772
        %3801 = vst.msk [vmem:[%s3731 + $0x68] sm:$0xff] %vm1403, %v3773
        %3802 = vst.msk [vmem:[%s3731 + $0x70] sm:$0xff] %vm1403, %v3774
        %3803 = vst.msk [vmem:[%s3731 + $0x78] sm:$0xff] %vm1403, %v3775
        %3804 = vst.msk [vmem:[%s3731 + $0x80] sm:$0xff] %vm1403, %v3776
        %3805 = vst.msk [vmem:[%s3731 + $0x88] sm:$0xff] %vm1403, %v3777
        %3806 = vst.msk [vmem:[%s3731 + $0x90] sm:$0xff] %vm1403, %v3778
        %3807 = vst.msk [vmem:[%s3731 + $0x98] sm:$0xff] %vm1403, %v3779
        %3808 = vst.msk [vmem:[%s3731 + $0xa0] sm:$0xff] %vm1403, %v3780
        %3809 = vst.msk [vmem:[%s3731 + $0xa8] sm:$0xff] %vm1403, %v3781
        %3810 = vst.msk [vmem:[%s3731 + $0xb0] sm:$0xff] %vm1403, %v3782
        %3811 = vst.msk [vmem:[%s3731 + $0xb8] sm:$0xff] %vm1403, %v3783
        %3812 = vst.msk [vmem:[%s3731 + $0xc0] sm:$0xff] %vm1403, %v3784
        %3813 = vst.msk [vmem:[%s3731 + $0xc8] sm:$0xff] %vm1403, %v3785
        %3814 = vst.msk [vmem:[%s3731 + $0xd0] sm:$0xff] %vm1403, %v3786
        %3815 = vst.msk [vmem:[%s3731 + $0xd8] sm:$0xff] %vm1403, %v3787
        %v3816 = vld [vmem:[#allocation4] sm:$0xff]
        %v3817 = vld [vmem:[#allocation4 + $0x8] sm:$0xff]
        %v3818 = vld [vmem:[#allocation4 + $0x10] sm:$0xff]
        %v3819 = vld [vmem:[#allocation4 + $0x18] sm:$0xff]
        %v3820 = vld [vmem:[#allocation4 + $0x20] sm:$0xff]
        %v3821 = vld [vmem:[#allocation4 + $0x28] sm:$0xff]
        %v3822 = vld [vmem:[#allocation4 + $0x30] sm:$0xff]
        %v3823 = vld [vmem:[#allocation4 + $0x38] sm:$0xff]
        %v3824 = vld [vmem:[#allocation4 + $0x40] sm:$0xff]
        %v3825 = vld [vmem:[#allocation4 + $0x48] sm:$0xff]
        %v3826 = vld [vmem:[#allocation4 + $0x50] sm:$0xff]
        %v3827 = vld [vmem:[#allocation4 + $0x58] sm:$0xff]
        %v3828 = vld [vmem:[#allocation4 + $0x60] sm:$0xff]
        %v3829 = vld [vmem:[#allocation4 + $0x68] sm:$0xff]
        %v3830 = vld [vmem:[#allocation4 + $0x70] sm:$0xff]
        %v3831 = vld [vmem:[#allocation4 + $0x78] sm:$0xff]
        %v3832 = vld [vmem:[#allocation4 + $0x80] sm:$0xff]
        %v3833 = vld [vmem:[#allocation4 + $0x88] sm:$0xff]
        %v3834 = vld [vmem:[#allocation4 + $0x90] sm:$0xff]
        %v3835 = vld [vmem:[#allocation4 + $0x98] sm:$0xff]
        %v3836 = vld [vmem:[#allocation4 + $0xa0] sm:$0xff]
        %v3837 = vld [vmem:[#allocation4 + $0xa8] sm:$0xff]
        %v3838 = vld [vmem:[#allocation4 + $0xb0] sm:$0xff]
        %v3839 = vld [vmem:[#allocation4 + $0xb8] sm:$0xff]
        %v3840 = vld [vmem:[#allocation4 + $0xc0] sm:$0xff]
        %v3841 = vld [vmem:[#allocation4 + $0xc8] sm:$0xff]
        %v3842 = vld [vmem:[#allocation4 + $0xd0] sm:$0xff]
        %v3843 = vld [vmem:[#allocation4 + $0xd8] sm:$0xff]
        %v3844 = vadd.f32 %v3816, %v3593
        %v3845 = vadd.f32 %v3817, %v3598
        %v3846 = vadd.f32 %v3818, %v3603
        %v3847 = vadd.f32 %v3819, %v3608
        %v3848 = vadd.f32 %v3820, %v3613
        %v3849 = vadd.f32 %v3821, %v3618
        %v3850 = vadd.f32 %v3822, %v3623
        %v3851 = vadd.f32 %v3823, %v3628
        %v3852 = vadd.f32 %v3824, %v3633
        %v3853 = vadd.f32 %v3825, %v3638
        %v3854 = vadd.f32 %v3826, %v3643
        %v3855 = vadd.f32 %v3827, %v3648
        %v3856 = vadd.f32 %v3828, %v3653
        %v3857 = vadd.f32 %v3829, %v3658
        %v3858 = vadd.f32 %v3830, %v3663
        %v3859 = vadd.f32 %v3831, %v3668
        %v3860 = vadd.f32 %v3832, %v3673
        %v3861 = vadd.f32 %v3833, %v3678
        %v3862 = vadd.f32 %v3834, %v3683
        %v3863 = vadd.f32 %v3835, %v3688
        %v3864 = vadd.f32 %v3836, %v3693
        %v3865 = vadd.f32 %v3837, %v3698
        %v3866 = vadd.f32 %v3838, %v3703
        %v3867 = vadd.f32 %v3839, %v3708
        %v3868 = vadd.f32 %v3840, %v3713
        %v3869 = vadd.f32 %v3841, %v3718
        %v3870 = vadd.f32 %v3842, %v3723
        %v3871 = vadd.f32 %v3843, %v3728
        %3872 = vst.msk [vmem:[#allocation4] sm:$0xff] %vm1403, %v3844
        %3873 = vst.msk [vmem:[#allocation4 + $0x8] sm:$0xff] %vm1403, %v3845
        %3874 = vst.msk [vmem:[#allocation4 + $0x10] sm:$0xff] %vm1403, %v3846
        %3875 = vst.msk [vmem:[#allocation4 + $0x18] sm:$0xff] %vm1403, %v3847
        %3876 = vst.msk [vmem:[#allocation4 + $0x20] sm:$0xff] %vm1403, %v3848
        %3877 = vst.msk [vmem:[#allocation4 + $0x28] sm:$0xff] %vm1403, %v3849
        %3878 = vst.msk [vmem:[#allocation4 + $0x30] sm:$0xff] %vm1403, %v3850
        %3879 = vst.msk [vmem:[#allocation4 + $0x38] sm:$0xff] %vm1403, %v3851
        %3880 = vst.msk [vmem:[#allocation4 + $0x40] sm:$0xff] %vm1403, %v3852
        %3881 = vst.msk [vmem:[#allocation4 + $0x48] sm:$0xff] %vm1403, %v3853
        %3882 = vst.msk [vmem:[#allocation4 + $0x50] sm:$0xff] %vm1403, %v3854
        %3883 = vst.msk [vmem:[#allocation4 + $0x58] sm:$0xff] %vm1403, %v3855
        %3884 = vst.msk [vmem:[#allocation4 + $0x60] sm:$0xff] %vm1403, %v3856
        %3885 = vst.msk [vmem:[#allocation4 + $0x68] sm:$0xff] %vm1403, %v3857
        %3886 = vst.msk [vmem:[#allocation4 + $0x70] sm:$0xff] %vm1403, %v3858
        %3887 = vst.msk [vmem:[#allocation4 + $0x78] sm:$0xff] %vm1403, %v3859
        %3888 = vst.msk [vmem:[#allocation4 + $0x80] sm:$0xff] %vm1403, %v3860
        %3889 = vst.msk [vmem:[#allocation4 + $0x88] sm:$0xff] %vm1403, %v3861
        %3890 = vst.msk [vmem:[#allocation4 + $0x90] sm:$0xff] %vm1403, %v3862
        %3891 = vst.msk [vmem:[#allocation4 + $0x98] sm:$0xff] %vm1403, %v3863
        %3892 = vst.msk [vmem:[#allocation4 + $0xa0] sm:$0xff] %vm1403, %v3864
        %3893 = vst.msk [vmem:[#allocation4 + $0xa8] sm:$0xff] %vm1403, %v3865
        %3894 = vst.msk [vmem:[#allocation4 + $0xb0] sm:$0xff] %vm1403, %v3866
        %3895 = vst.msk [vmem:[#allocation4 + $0xb8] sm:$0xff] %vm1403, %v3867
        %3896 = vst.msk [vmem:[#allocation4 + $0xc0] sm:$0xff] %vm1403, %v3868
        %3897 = vst.msk [vmem:[#allocation4 + $0xc8] sm:$0xff] %vm1403, %v3869
        %3898 = vst.msk [vmem:[#allocation4 + $0xd0] sm:$0xff] %vm1403, %v3870
        %3899 = vst.msk [vmem:[#allocation4 + $0xd8] sm:$0xff] %vm1403, %v3871
        %v3900 = vld [vmem:[#allocation4] sm:$0xff]
        %v3901 = vld [vmem:[#allocation4 + $0x8] sm:$0xff]
        %v3902 = vld [vmem:[#allocation4 + $0x10] sm:$0xff]
        %v3903 = vld [vmem:[#allocation4 + $0x18] sm:$0xff]
        %v3904 = vld [vmem:[#allocation4 + $0x20] sm:$0xff]
        %v3905 = vld [vmem:[#allocation4 + $0x28] sm:$0xff]
        %v3906 = vld [vmem:[#allocation4 + $0x30] sm:$0xff]
        %v3907 = vld [vmem:[#allocation4 + $0x38] sm:$0xff]
        %v3908 = vld [vmem:[#allocation4 + $0x40] sm:$0xff]
        %v3909 = vld [vmem:[#allocation4 + $0x48] sm:$0xff]
        %v3910 = vld [vmem:[#allocation4 + $0x50] sm:$0xff]
        %v3911 = vld [vmem:[#allocation4 + $0x58] sm:$0xff]
        %v3912 = vld [vmem:[#allocation4 + $0x60] sm:$0xff]
        %v3913 = vld [vmem:[#allocation4 + $0x68] sm:$0xff]
        %v3914 = vld [vmem:[#allocation4 + $0x70] sm:$0xff]
        %v3915 = vld [vmem:[#allocation4 + $0x78] sm:$0xff]
        %v3916 = vld [vmem:[#allocation4 + $0x80] sm:$0xff]
        %v3917 = vld [vmem:[#allocation4 + $0x88] sm:$0xff]
        %v3918 = vld [vmem:[#allocation4 + $0x90] sm:$0xff]
        %v3919 = vld [vmem:[#allocation4 + $0x98] sm:$0xff]
        %v3920 = vld [vmem:[#allocation4 + $0xa0] sm:$0xff]
        %v3921 = vld [vmem:[#allocation4 + $0xa8] sm:$0xff]
        %v3922 = vld [vmem:[#allocation4 + $0xb0] sm:$0xff]
        %v3923 = vld [vmem:[#allocation4 + $0xb8] sm:$0xff]
        %v3924 = vld [vmem:[#allocation4 + $0xc0] sm:$0xff]
        %v3925 = vld [vmem:[#allocation4 + $0xc8] sm:$0xff]
        %v3926 = vld [vmem:[#allocation4 + $0xd0] sm:$0xff]
        %v3927 = vld [vmem:[#allocation4 + $0xd8] sm:$0xff]
        %v3928 = vld [vmem:[#allocation4 + $0xe0] sm:$0xff]
        %v3929 = vld [vmem:[#allocation4 + $0xe8] sm:$0xff]
        %v3930 = vld [vmem:[#allocation4 + $0xf0] sm:$0xff]
        %v3931 = vld [vmem:[#allocation4 + $0xf8] sm:$0xff]
        %v3932 = vld [vmem:[#allocation14] sm:$0x1]
        %v3934 = vlaneseq
        %v3935 = vshrl.u32 %v3934, 7
        %v3936 = vsub.s32 0, %v3935
        %v3937 = vrot.slane %v3932, %v3936
        %v3939 = vadd.f32 %v3900, %v3937
        %v3940 = vadd.f32 %v3901, %v3937
        %v3941 = vadd.f32 %v3902, %v3937
        %v3942 = vadd.f32 %v3903, %v3937
        %v3943 = vadd.f32 %v3904, %v3937
        %v3944 = vadd.f32 %v3905, %v3937
        %v3945 = vadd.f32 %v3906, %v3937
        %v3946 = vadd.f32 %v3907, %v3937
        %v3947 = vadd.f32 %v3908, %v3937
        %v3948 = vadd.f32 %v3909, %v3937
        %v3949 = vadd.f32 %v3910, %v3937
        %v3950 = vadd.f32 %v3911, %v3937
        %v3951 = vadd.f32 %v3912, %v3937
        %v3952 = vadd.f32 %v3913, %v3937
        %v3953 = vadd.f32 %v3914, %v3937
        %v3954 = vadd.f32 %v3915, %v3937
        %v3955 = vadd.f32 %v3916, %v3937
        %v3956 = vadd.f32 %v3917, %v3937
        %v3957 = vadd.f32 %v3918, %v3937
        %v3958 = vadd.f32 %v3919, %v3937
        %v3959 = vadd.f32 %v3920, %v3937
        %v3960 = vadd.f32 %v3921, %v3937
        %v3961 = vadd.f32 %v3922, %v3937
        %v3962 = vadd.f32 %v3923, %v3937
        %v3963 = vadd.f32 %v3924, %v3937
        %v3964 = vadd.f32 %v3925, %v3937
        %v3965 = vadd.f32 %v3926, %v3937
        %v3966 = vadd.f32 %v3927, %v3937
        %v3967 = vadd.f32 %v3928, %v3937
        %v3968 = vadd.f32 %v3929, %v3937
        %v3969 = vadd.f32 %v3930, %v3937
        %v3970 = vadd.f32 %v3931, %v3937
        %3971 = vst.msk [vmem:[%s447] sm:$0xff] %vm1403, %v3939
        %3972 = vst.msk [vmem:[%s447 + $0x8] sm:$0xff] %vm1403, %v3940
        %3973 = vst.msk [vmem:[%s447 + $0x10] sm:$0xff] %vm1403, %v3941
        %3974 = vst.msk [vmem:[%s447 + $0x18] sm:$0xff] %vm1403, %v3942
        %3975 = vst.msk [vmem:[%s447 + $0x20] sm:$0xff] %vm1403, %v3943
        %3976 = vst.msk [vmem:[%s447 + $0x28] sm:$0xff] %vm1403, %v3944
        %3977 = vst.msk [vmem:[%s447 + $0x30] sm:$0xff] %vm1403, %v3945
        %3978 = vst.msk [vmem:[%s447 + $0x38] sm:$0xff] %vm1403, %v3946
        %3979 = vst.msk [vmem:[%s447 + $0x40] sm:$0xff] %vm1403, %v3947
        %3980 = vst.msk [vmem:[%s447 + $0x48] sm:$0xff] %vm1403, %v3948
        %3981 = vst.msk [vmem:[%s447 + $0x50] sm:$0xff] %vm1403, %v3949
        %3982 = vst.msk [vmem:[%s447 + $0x58] sm:$0xff] %vm1403, %v3950
        %3983 = vst.msk [vmem:[%s447 + $0x60] sm:$0xff] %vm1403, %v3951
        %3984 = vst.msk [vmem:[%s447 + $0x68] sm:$0xff] %vm1403, %v3952
        %3985 = vst.msk [vmem:[%s447 + $0x70] sm:$0xff] %vm1403, %v3953
        %3986 = vst.msk [vmem:[%s447 + $0x78] sm:$0xff] %vm1403, %v3954
        %3987 = vst.msk [vmem:[%s447 + $0x80] sm:$0xff] %vm1403, %v3955
        %3988 = vst.msk [vmem:[%s447 + $0x88] sm:$0xff] %vm1403, %v3956
        %3989 = vst.msk [vmem:[%s447 + $0x90] sm:$0xff] %vm1403, %v3957
        %3990 = vst.msk [vmem:[%s447 + $0x98] sm:$0xff] %vm1403, %v3958
        %3991 = vst.msk [vmem:[%s447 + $0xa0] sm:$0xff] %vm1403, %v3959
        %3992 = vst.msk [vmem:[%s447 + $0xa8] sm:$0xff] %vm1403, %v3960
        %3993 = vst.msk [vmem:[%s447 + $0xb0] sm:$0xff] %vm1403, %v3961
        %3994 = vst.msk [vmem:[%s447 + $0xb8] sm:$0xff] %vm1403, %v3962
        %3995 = vst.msk [vmem:[%s447 + $0xc0] sm:$0xff] %vm1403, %v3963
        %3996 = vst.msk [vmem:[%s447 + $0xc8] sm:$0xff] %vm1403, %v3964
        %3997 = vst.msk [vmem:[%s447 + $0xd0] sm:$0xff] %vm1403, %v3965
        %3998 = vst.msk [vmem:[%s447 + $0xd8] sm:$0xff] %vm1403, %v3966
        %3999 = vst.msk [vmem:[%s447 + $0xe0] sm:$0xff] %vm1403, %v3967
        %4000 = vst.msk [vmem:[%s447 + $0xe8] sm:$0xff] %vm1403, %v3968
        %4001 = vst.msk [vmem:[%s447 + $0xf0] sm:$0xff] %vm1403, %v3969
        %4002 = vst.msk [vmem:[%s447 + $0xf8] sm:$0xff] %vm1403, %v3970
        %s4003 = sand.u32 %s198, 1
        %s4004 = scalar_lea.sflag [#allocation7], %s4003
        %s4005 = sand.u32 %s198, 1
        %s4006 = smul.addr %s4005, 256
        %s4007 = scalar_lea.vmem [#allocation16], %s4006
        // Predicated region
        $region73: #{downsample3d.1} parent=43 // pred_check
          %p4008 = pneg %p208
        $region74: #{downsample3d.1} parent=43 // pred_check_branch
          %4010 = sbr.rel (%p4008) target = $region76
        $region75: #{downsample3d.1} parent=43 // pred_region
          #allocation22 [shape = 'u32[6]{0}', space=smem, size = 0x18, scoped, tag = 'DMA stride descriptor']
          %s4011 = smul.u32 4, %s33
          %s4013 = ssub.s32 4096, 4096
          %4014 = vsyncadd %s4004, %s4013
          %s4015 = smul.addr %s32, 64
          %s4016 = sadd.s32 %s4011, %s4015
          %s4017 = smul.addr %s4016, 128
          %s4018 = scalar_lea.hbm %s6, %s4017
          %s4020 = sshll.u32 1, 14
          %s4021 = sxor.u32 4294967295, %s4020
          %s4024 = sshll.u32 7, 18
          %s4025 = sxor.u32 4294967295, %s4024
          %s4026 = sand.u32 0, %s4025
          %s4028 = sor.u32 %s4026, 0
          %s4030 = sshll.u32 3, 24
          %s4031 = sxor.u32 4294967295, %s4030
          %s4032 = sand.u32 %s4028, %s4031
          %s4034 = sor.u32 %s4032, 0
          %s4035 = sshll.u32 %s4007, 4
          %s4036 = int_to_ptr.vmem [resolvable:$true] %s4035
          %4042 = sst [smem:[#allocation22]] 512
          %s4043 = scalar_lea.smem [#allocation22], 1
          %4044 = sst [smem:[%s4043]] 1024
          %s4045 = scalar_lea.smem [#allocation22], 2
          %4046 = sst [smem:[%s4045]] 4
          %s4047 = scalar_lea.smem [#allocation22], 3
          %4048 = sst [smem:[%s4047]] 128
          %s4049 = scalar_lea.smem [#allocation22], 4
          %4050 = sst [smem:[%s4049]] 128
          %s4051 = scalar_lea.smem [#allocation22], 5
          %4052 = sst [smem:[%s4051]] 8
          %4054 = dma.general %s4036, 4096, %s4018, %s4004, [#allocation21], [#allocation22], %s4034, 0
        $region76: #{downsample3d.1} parent=43 // pred_fallthru
          _
      $region44: #{downsample3d.1} parent=5 // pred_fallthru
        _
      %p4055 = scmp.le.s32.totalorder 2, %s23
      // Predicated region
      $region77: #{downsample3d.1} parent=5 // pred_check
        %p4056 = pneg %p4055
      $region78: #{downsample3d.1} parent=5 // pred_check_branch
        %4058 = sbr.rel (%p4056) target = $region80
      $region79: #{downsample3d.1} parent=5 // pred_region
        %s4059 = ssub.s32 %s23, 2
        // Predicated region
        $region81: #{downsample3d.1} parent=79 // pred_check
          %p4060 = pneg %p214
        $region82: #{downsample3d.1} parent=79 // pred_check_branch
          %4062 = sbr.rel (%p4060) target = $region84
        $region83: #{downsample3d.1} parent=79 // pred_region
          %s4063 = sand.u32 %s199, 1
          %s4064 = scalar_lea.sflag [#allocation7], %s4063
          %s4065 = sand.u32 %s199, 1
          %s4066 = smul.addr %s4065, 256
          %s4067 = scalar_lea.vmem [#allocation16], %s4066
          %4068 = dma.done %s4064, 4096
        $region84: #{downsample3d.1} parent=79 // pred_fallthru
          _
      $region80: #{downsample3d.1} parent=5 // pred_fallthru
        _
    $region6: #{downsample3d.1} parent=1 // loop_footer
      %s27 = sadd.s32 1, %s23
    $region7: #{downsample3d.1} parent=1 // loop_footer_branch
      %22 = sbr.rel target = $region3
    $region8: #{downsample3d.1} parent=1 // loop_exit
      _
    %4069 = vsyncpa [#allocation6], 1
    %s4070 = scalar_lea.sflag [#allocation6], 1
    %4071 = vsyncpa %s4070, 1
    %4072 = vsyncpa [#allocation9], 1
    %s4073 = scalar_lea.sflag [#allocation9], 1
    %4074 = vsyncpa %s4073, 1
    %4075 = vsyncpa [#allocation12], 1
    %4076 = vsyncpa [#allocation15], 1
    %4077 = vsyncpa [#allocation7], 1
    %s4078 = scalar_lea.sflag [#allocation7], 1
    %4079 = vsyncpa %s4078, 1

</llo_original>
